<compile_context>
chip_gen: v7x
topology: tpu7x:2x2x1
jax: 0.10.0
libtpu: 0.0.40
codegen_flags: <defaults>
</compile_context>

<pallas_src>
import math

import numpy as np
import jax
import jax.numpy as jnp
from jax.experimental import pallas as pl
from jax.experimental.pallas import tpu as pltpu


# --------------------------------------------------------------------------- #
# Host-side constant matrices (encode PyTorch resize / padding / stride rules)
# --------------------------------------------------------------------------- #
def _select_mat(n_out, n_in):
    """Stride-2 subsample: S[o, 2o] = 1 (stride-2 conv == stride-1 conv + select)."""
    m = np.zeros((n_out, n_in), np.float32)
    m[np.arange(n_out), 2 * np.arange(n_out)] = 1.0
    return m


def _nearest_mat(n_out, n_in):
    """PyTorch default 'nearest' interpolate: src = floor(dst * n_in / n_out)."""
    src = np.minimum(
        np.floor(np.arange(n_out) * (n_in / n_out)).astype(np.int64), n_in - 1)
    m = np.zeros((n_out, n_in), np.float32)
    m[np.arange(n_out), src] = 1.0
    return m


def _bilinear_mat(n_out, n_in):
    """PyTorch 'bilinear', align_corners=False (separable per spatial axis)."""
    src = np.maximum((np.arange(n_out) + 0.5) * (n_in / n_out) - 0.5, 0.0)
    i0 = np.minimum(np.floor(src).astype(np.int64), n_in - 1)
    f = (src - i0).astype(np.float32)
    i1 = np.minimum(i0 + 1, n_in - 1)
    m = np.zeros((n_out, n_in), np.float32)
    np.add.at(m, (np.arange(n_out), i0), 1.0 - f)
    np.add.at(m, (np.arange(n_out), i1), f)
    return m


def _row_shift_mats(h):
    """R_kh (h,h): (R_kh @ X)[i,:] = X[i+kh-1,:], zero outside (conv zero-pad)."""
    mats = []
    for kh in range(3):
        m = np.zeros((h, h), np.float32)
        for i in range(h):
            s = i + kh - 1
            if 0 <= s < h:
                m[i, s] = 1.0
        mats.append(m)
    return mats


def _col_shift_mats(h):
    """C_kw (h,h): (X @ C_kw)[:,j] = X[:, j+kw-1], zero outside (conv zero-pad)."""
    mats = []
    for kw in range(3):
        m = np.zeros((h, h), np.float32)
        for j in range(h):
            s = j + kw - 1
            if 0 <= s < h:
                m[s, j] = 1.0
        mats.append(m)
    return mats


# --------------------------------------------------------------------------- #
# The fused kernel (one grid step == one batch element, channels packed on lanes)
# --------------------------------------------------------------------------- #
def _make_mslt_kernel(h0):
    h1, h2, h3 = h0 // 2, h0 // 4, h0 // 8
    f32 = jnp.float32
    # packed lane widths of each layer's output / bias row
    W_DE1, W_DE2, W_DE3 = 3 * h1, 3 * h2, 3 * h3
    W_RC1, W_RC2, W_RC3 = 3 * h0, 3 * h1, 3 * h2
    W_TH0, W_3H2 = 9 * h2, 3 * h2

    def kernel(x_ref,
               de1_W, de1_L, de2_W, de2_L, de3_W, de3_L,
               rc1_W, rc1_L, rc2_W, rc2_L, rc3_W, rc3_L,
               th0_Wa, th0_Wb, th2_W, t0_W, t2_W,
               nr32, nr1, ncr1, nr2, ncr2, b_all,
               o_ref):

        ball = b_all[...]                                       # (10, 3*h0)

        def bias(idx, width):
            return ball[idx:idx + 1, 0:width]                   # (1, width)

        def leaky(v):                                           # nn.LeakyReLU()
            return jnp.where(v >= 0.0, v, 0.01 * v)

        def conv_resize(X, Wr, Lr, b_idx, w_out):
            """3x3 conv (pad=1) + stride-2 subsample OR bilinear-2x upsample,
            pre-folded into 3 right blocks Wr[kh] and 3 left row maps Lr[kh]."""
            out = None
            for k in range(3):
                t = jnp.dot(X, Wr[k], preferred_element_type=f32)
                t = jnp.dot(Lr[k], t, preferred_element_type=f32)
                out = t if out is None else out + t
            return out + bias(b_idx, w_out)

        x = x_ref[0]                                            # (h0, 3*h0)

        # ---- Lap_Pyramid.de_cov ------------------------------------------- #
        level_1 = conv_resize(x, de1_W, de1_L, 0, W_DE1)        # (h1, 3h1)
        level_2 = conv_resize(level_1, de2_W, de2_L, 1, W_DE2)  # (h2, 3h2)
        level_3 = conv_resize(level_2, de3_W, de3_L, 2, W_DE3)  # (h3, 3h3)

        up1 = conv_resize(level_1, rc1_W, rc1_L, 3, W_RC1)      # (h0, 3h0)
        seq_1 = x - up1
        up2 = conv_resize(level_2, rc2_W, rc2_L, 4, W_RC2)      # (h1, 3h1)
        seq_2 = level_1 - up2
        up3 = conv_resize(level_3, rc3_W, rc3_L, 5, W_RC3)      # (h2, 3h2)
        seq_3 = level_2 - up3

        # TODO(synk): network.B_transformer (trans_low) is undefined in the
        # reference source; the low-frequency branch is treated as identity,
        # i.e. fake_B_low == level_3 (so real_A_up == fake_B_up below and the
        # recons' first upsample equals up3, which is reused).

        # ---- Trans_high ---------------------------------------------------- #
        # mask = Conv(9,3,1)(LeakyReLU(Conv(9,9,1)(cat[seq_3, A_up, B_up])))
        # The concat is never materialized: its contribution is split into the
        # seq_3 part (th0_Wa) and the nearest-upsampled level_3 part (th0_Wb,
        # with the column-upsample pre-folded into the weight block).
        tb = jnp.dot(level_3, th0_Wb[...], preferred_element_type=f32)   # (h3, 9h2)
        tb = jnp.dot(nr32[...], tb, preferred_element_type=f32)          # (h2, 9h2)
        m9 = jnp.dot(seq_3, th0_Wa[...], preferred_element_type=f32) + tb \
            + bias(6, W_TH0)
        m9 = leaky(m9)
        mask = jnp.dot(m9, th2_W[...], preferred_element_type=f32) + bias(7, W_3H2)

        hf1 = seq_3 * mask                                      # (h2, 3h2)

        # trans_mask_block_1 (1x1 convs + LeakyReLU) commutes exactly with the
        # nearest-neighbor upsample -> apply once at h2, then upsample results.
        m2 = leaky(jnp.dot(mask, t0_W[...], preferred_element_type=f32)
                   + bias(8, W_3H2))
        m2 = jnp.dot(m2, t2_W[...], preferred_element_type=f32) + bias(9, W_3H2)

        mk1 = jnp.dot(nr1[...],
                      jnp.dot(m2, ncr1[...], preferred_element_type=f32),
                      preferred_element_type=f32)               # (h1, 3h1)
        hf2 = seq_2 * mk1
        mk2 = jnp.dot(nr2[...],
                      jnp.dot(m2, ncr2[...], preferred_element_type=f32),
                      preferred_element_type=f32)               # (h0, 3h0)
        hf3 = seq_1 * mk2

        # ---- Lap_Pyramid.pyramid_recons ------------------------------------ #
        img = up3 + hf1                     # rec_1 == up3 (fake_B_low == level_3)
        img = conv_resize(img, rc2_W, rc2_L, 4, W_RC2) + hf2
        img = conv_resize(img, rc1_W, rc1_L, 3, W_RC1) + hf3

        o_ref[0] = img                      # single lane-dense (h0, 3*h0) store

    return kernel


# --------------------------------------------------------------------------- #
# Parameters (PyTorch-default Conv2d init, deterministic)
# --------------------------------------------------------------------------- #
def _conv_init(key, c_out, c_in, k):
    kw, kb = jax.random.split(key)
    fan_in = c_in * k * k
    bound = 1.0 / math.sqrt(fan_in)
    w = jax.random.uniform(kw, (c_out, c_in, k, k), jnp.float32, -bound, bound)
    b = jax.random.uniform(kb, (c_out,), jnp.float32, -bound, bound)
    return w, b


# NOTE: the reference also constructs trans_mask_block_2 but never uses it in
# forward(); it is omitted here.
_LAYERS = [
    ("de_conv_1", (3, 3, 3)), ("de_conv_2", (3, 3, 3)), ("de_conv_3", (3, 3, 3)),
    ("re_cov_1", (3, 3, 3)), ("re_cov_2", (3, 3, 3)), ("re_cov_3", (3, 3, 3)),
    ("th_model_0", (9, 9, 1)), ("th_model_2", (3, 9, 1)),
    ("tmb1_0", (3, 3, 1)), ("tmb1_2", (3, 3, 1)),
]


def init_params(key):
    keys = jax.random.split(key, len(_LAYERS))
    return {name: _conv_init(k, *shp) for k, (name, shp) in zip(keys, _LAYERS)}


# --------------------------------------------------------------------------- #
# Forward wrapper: fold weights, then one pallas_call for the whole network
# --------------------------------------------------------------------------- #
def mslt_forward(params, x):
    N, C, H, W = x.shape
    assert C == 3 and H == W and H % 8 == 0, \
        "fused MSLT kernel expects square NCHW input, 3 channels, H=W multiple of 8"
    h0 = H
    h1, h2, h3 = h0 // 2, h0 // 4, h0 // 8
    f32 = jnp.float32

    # ---- fold each 3x3 conv + following resize into per-kh matmul blocks ---- #
    def fold_conv(name, h_in, mode):
        w, _ = params[name]
        w = w.astype(f32)
        h_out = h_in // 2 if mode == "down" else 2 * h_in
        M = _select_mat(h_out, h_in) if mode == "down" else _bilinear_mat(h_out, h_in)
        P = M.T                                                # column resize factor
        Cs = _col_shift_mats(h_in)
        Rs = _row_shift_mats(h_in)
        Ws, Ls = [], []
        for kh in range(3):
            Wk = None
            for kw in range(3):
                A = jnp.transpose(w[:, :, kh, kw])             # (c_in, c_out)
                G = jnp.asarray((Cs[kw] @ P).astype(np.float32))
                term = jnp.kron(A, G)                          # (3*h_in, 3*h_out)
                Wk = term if Wk is None else Wk + term
            Ws.append(Wk)
            Ls.append(jnp.asarray((M @ Rs[kh]).astype(np.float32)))
        return jnp.stack(Ws), jnp.stack(Ls)

    de1_W, de1_L = fold_conv("de_conv_1", h0, "down")
    de2_W, de2_L = fold_conv("de_conv_2", h1, "down")
    de3_W, de3_L = fold_conv("de_conv_3", h2, "down")
    rc1_W, rc1_L = fold_conv("re_cov_1", h1, "up")
    rc2_W, rc2_L = fold_conv("re_cov_2", h2, "up")
    rc3_W, rc3_L = fold_conv("re_cov_3", h3, "up")

    # ---- 1x1 conv blocks (block matmuls on the packed slab) ----------------- #
    eye_h2 = jnp.eye(h2, dtype=f32)
    w9, b9 = params["th_model_0"]                   # Conv2d(9, 9, 1)
    A9 = jnp.transpose(w9[:, :, 0, 0].astype(f32))  # (9 in, 9 out)
    nmat32 = _nearest_mat(h2, h3)                   # nearest h3 -> h2
    th0_Wa = jnp.kron(A9[0:3, :], eye_h2)                              # (3h2, 9h2)
    th0_Wb = jnp.kron(A9[3:6, :] + A9[6:9, :],
                      jnp.asarray(nmat32.T))                           # (3h3, 9h2)
    w93, b93 = params["th_model_2"]                 # Conv2d(9, 3, 1)
    th2_W = jnp.kron(jnp.transpose(w93[:, :, 0, 0].astype(f32)), eye_h2)
    wt0, bt0 = params["tmb1_0"]
    wt2, bt2 = params["tmb1_2"]
    t0_W = jnp.kron(jnp.transpose(wt0[:, :, 0, 0].astype(f32)), eye_h2)
    t2_W = jnp.kron(jnp.transpose(wt2[:, :, 0, 0].astype(f32)), eye_h2)

    # ---- nearest-neighbor resize constants ---------------------------------- #
    nr32 = jnp.asarray(nmat32)                                        # (h2, h3)
    n1 = _nearest_mat(h1, h2)
    n2 = _nearest_mat(h0, h2)
    nr1 = jnp.asarray(n1)                                             # (h1, h2)
    ncr1 = jnp.asarray(np.kron(np.eye(3, dtype=np.float32), n1.T))    # (3h2, 3h1)
    nr2 = jnp.asarray(n2)                                             # (h0, h2)
    ncr2 = jnp.asarray(np.kron(np.eye(3, dtype=np.float32), n2.T))    # (3h2, 3h0)

    # ---- all biases packed into one slab ------------------------------------ #
    total_w = 3 * h0

    def brow(b, hsp):
        r = jnp.repeat(b.astype(f32), hsp)
        pad = total_w - r.shape[0]
        if pad > 0:
            r = jnp.concatenate([r, jnp.zeros((pad,), f32)])
        return r

    b_all = jnp.stack([
        brow(params["de_conv_1"][1], h1),   # 0
        brow(params["de_conv_2"][1], h2),   # 1
        brow(params["de_conv_3"][1], h3),   # 2
        brow(params["re_cov_1"][1], h0),    # 3
        brow(params["re_cov_2"][1], h1),    # 4
        brow(params["re_cov_3"][1], h2),    # 5
        brow(b9, h2),                       # 6
        brow(b93, h2),                      # 7
        brow(bt0, h2),                      # 8
        brow(bt2, h2),                      # 9
    ])                                                             # (10, 3*h0)

    # ---- lane-pack the input: (N,3,H,W) -> (N, H, 3*W) ----------------------- #
    x_packed = jnp.transpose(x.astype(f32), (0, 2, 1, 3)).reshape(N, h0, 3 * h0)

    param_arrays = [de1_W, de1_L, de2_W, de2_L, de3_W, de3_L,
                    rc1_W, rc1_L, rc2_W, rc2_L, rc3_W, rc3_L,
                    th0_Wa, th0_Wb, th2_W, t0_W, t2_W,
                    nr32, nr1, ncr1, nr2, ncr2, b_all]

    in_specs = ([pl.BlockSpec((1, h0, 3 * h0), lambda n: (n, 0, 0))] +
                [pl.BlockSpec(a.shape, (lambda n, nd=a.ndim: (0,) * nd))
                 for a in param_arrays])

    out_packed = pl.pallas_call(
        _make_mslt_kernel(h0),
        out_shape=jax.ShapeDtypeStruct((N, h0, 3 * h0), f32),
        grid=(N,),
        in_specs=in_specs,
        out_specs=pl.BlockSpec((1, h0, 3 * h0), lambda n: (n, 0, 0)),
        compiler_params=pltpu.CompilerParams(
            dimension_semantics=("parallel",)),
    )(x_packed, *param_arrays)

    # unpack (N, H, 3*W) -> (N, 3, H, W)
    return out_packed.reshape(N, h0, 3, h0).transpose(0, 2, 1, 3)


# --------------------------------------------------------------------------- #
# Pure-JAX reference (XLA) for a correctness sanity check
# --------------------------------------------------------------------------- #
def _ref_forward(params, x):
    f32 = jnp.float32
    prec = jax.lax.Precision.HIGHEST
    x = x.astype(f32)
    N, C, H, W = x.shape
    h0, h1, h2, h3 = H, H // 2, H // 4, H // 8

    def conv3(v, name, stride):
        w, b = params[name]
        y = jax.lax.conv_general_dilated(
            v, w.astype(f32), (stride, stride), ((1, 1), (1, 1)),
            dimension_numbers=("NCHW", "OIHW", "NCHW"), precision=prec)
        return y + b.astype(f32)[None, :, None, None]

    def conv1(v, name):
        w, b = params[name]
        return (jnp.einsum("oc,nchw->nohw", w[:, :, 0, 0].astype(f32), v,
                           precision=prec)
                + b.astype(f32)[None, :, None, None])

    def resize(v, m):
        m = jnp.asarray(m, f32)
        return jnp.einsum("oi,ncij,pj->ncop", m, v, m, precision=prec)

    def leaky(v):
        return jnp.where(v >= 0.0, v, 0.01 * v)

    level_1 = conv3(x, "de_conv_1", 2)
    level_2 = conv3(level_1, "de_conv_2", 2)
    level_3 = conv3(level_2, "de_conv_3", 2)
    seq_1 = x - resize(conv3(level_1, "re_cov_1", 1), _bilinear_mat(h0, h1))
    seq_2 = level_1 - resize(conv3(level_2, "re_cov_2", 1), _bilinear_mat(h1, h2))
    seq_3 = level_2 - resize(conv3(level_3, "re_cov_3", 1), _bilinear_mat(h2, h3))

    fake_B_low = level_3                       # same identity trans_low as kernel
    real_A_up = resize(level_3, _nearest_mat(h2, h3))
    fake_B_up = resize(fake_B_low, _nearest_mat(h2, h3))
    x9 = jnp.concatenate([seq_3, real_A_up, fake_B_up], axis=1)

    mask = conv1(leaky(conv1(x9, "th_model_0")), "th_model_2")
    hf1 = seq_3 * mask
    mask_1 = conv1(leaky(conv1(resize(mask, _nearest_mat(h1, h2)), "tmb1_0")),
                   "tmb1_2")
    hf2 = seq_2 * mask_1
    mask_2 = conv1(leaky(conv1(resize(mask, _nearest_mat(h0, h2)), "tmb1_0")),
                   "tmb1_2")
    hf3 = seq_1 * mask_2

    img = resize(conv3(fake_B_low, "re_cov_3", 1), _bilinear_mat(h2, h3)) + hf1
    img = resize(conv3(img, "re_cov_2", 1), _bilinear_mat(h1, h2)) + hf2
    img = resize(conv3(img, "re_cov_1", 1), _bilinear_mat(h0, h1)) + hf3
    return img


# --------------------------------------------------------------------------- #
if __name__ == "__main__":
    key = jax.random.PRNGKey(0)
    pkey, xkey = jax.random.split(key)
    params = init_params(pkey)
    x = jax.random.uniform(xkey, (2, 3, 16, 16), dtype=jnp.float32)

    fwd = jax.jit(mslt_forward)
    out = fwd(params, x)
    jax.block_until_ready(out)
    assert out.shape == (2, 3, 16, 16), out.shape
    assert out.dtype == jnp.float32

    # Sanity check against a pure-JAX/XLA reference (loose tolerance to allow
    # for MXU f32 matmul rounding across the folded layers).
    ref = jax.jit(_ref_forward)(params, x)
    np.testing.assert_allclose(np.asarray(out), np.asarray(ref),
                               rtol=2e-2, atol=1e-2)

    print("KERNEL_OK")
</pallas_src>

<mosaic_0001>
module attributes {stable_mosaic.version = 11 : i64} {
  func.func @kernel(%arg0: i32, %arg1: memref<1x16x48xf32, #tpu.memory_space<vmem>>, %arg2: memref<3x48x24xf32, #tpu.memory_space<vmem>>, %arg3: memref<3x8x16xf32, #tpu.memory_space<vmem>>, %arg4: memref<3x24x12xf32, #tpu.memory_space<vmem>>, %arg5: memref<3x4x8xf32, #tpu.memory_space<vmem>>, %arg6: memref<3x12x6xf32, #tpu.memory_space<vmem>>, %arg7: memref<3x2x4xf32, #tpu.memory_space<vmem>>, %arg8: memref<3x24x48xf32, #tpu.memory_space<vmem>>, %arg9: memref<3x16x8xf32, #tpu.memory_space<vmem>>, %arg10: memref<3x12x24xf32, #tpu.memory_space<vmem>>, %arg11: memref<3x8x4xf32, #tpu.memory_space<vmem>>, %arg12: memref<3x6x12xf32, #tpu.memory_space<vmem>>, %arg13: memref<3x4x2xf32, #tpu.memory_space<vmem>>, %arg14: memref<12x36xf32, #tpu.memory_space<vmem>>, %arg15: memref<6x36xf32, #tpu.memory_space<vmem>>, %arg16: memref<36x12xf32, #tpu.memory_space<vmem>>, %arg17: memref<12x12xf32, #tpu.memory_space<vmem>>, %arg18: memref<12x12xf32, #tpu.memory_space<vmem>>, %arg19: memref<4x2xf32, #tpu.memory_space<vmem>>, %arg20: memref<8x4xf32, #tpu.memory_space<vmem>>, %arg21: memref<12x24xf32, #tpu.memory_space<vmem>>, %arg22: memref<16x4xf32, #tpu.memory_space<vmem>>, %arg23: memref<12x48xf32, #tpu.memory_space<vmem>>, %arg24: memref<10x48xf32, #tpu.memory_space<vmem>>, %arg25: memref<1x16x48xf32, #tpu.memory_space<vmem>>) attributes {dimension_semantics = [#tpu.dimension_semantics<parallel>], iteration_bounds = array<i64: 2>, scalar_prefetch = 0 : i64, scratch_operands = 0 : i64, tpu.core_type = #tpu.core_type<tc>, window_params = [{transform_indices = @transform_0, window_bounds = array<i64: 1, 16, 48>}, {pipeline_mode = #tpu.pipeline_mode<synchronous>, transform_indices = @transform_1, window_bounds = array<i64: 3, 48, 24>}, {pipeline_mode = #tpu.pipeline_mode<synchronous>, transform_indices = @transform_2, window_bounds = array<i64: 3, 8, 16>}, {pipeline_mode = #tpu.pipeline_mode<synchronous>, transform_indices = @transform_3, window_bounds = array<i64: 3, 24, 12>}, {pipeline_mode = #tpu.pipeline_mode<synchronous>, transform_indices = @transform_4, window_bounds = array<i64: 3, 4, 8>}, {pipeline_mode = #tpu.pipeline_mode<synchronous>, transform_indices = @transform_5, window_bounds = array<i64: 3, 12, 6>}, {pipeline_mode = #tpu.pipeline_mode<synchronous>, transform_indices = @transform_6, window_bounds = array<i64: 3, 2, 4>}, {pipeline_mode = #tpu.pipeline_mode<synchronous>, transform_indices = @transform_7, window_bounds = array<i64: 3, 24, 48>}, {pipeline_mode = #tpu.pipeline_mode<synchronous>, transform_indices = @transform_8, window_bounds = array<i64: 3, 16, 8>}, {pipeline_mode = #tpu.pipeline_mode<synchronous>, transform_indices = @transform_9, window_bounds = array<i64: 3, 12, 24>}, {pipeline_mode = #tpu.pipeline_mode<synchronous>, transform_indices = @transform_10, window_bounds = array<i64: 3, 8, 4>}, {pipeline_mode = #tpu.pipeline_mode<synchronous>, transform_indices = @transform_11, window_bounds = array<i64: 3, 6, 12>}, {pipeline_mode = #tpu.pipeline_mode<synchronous>, transform_indices = @transform_12, window_bounds = array<i64: 3, 4, 2>}, {pipeline_mode = #tpu.pipeline_mode<synchronous>, transform_indices = @transform_13, window_bounds = array<i64: 12, 36>}, {pipeline_mode = #tpu.pipeline_mode<synchronous>, transform_indices = @transform_14, window_bounds = array<i64: 6, 36>}, {pipeline_mode = #tpu.pipeline_mode<synchronous>, transform_indices = @transform_15, window_bounds = array<i64: 36, 12>}, {pipeline_mode = #tpu.pipeline_mode<synchronous>, transform_indices = @transform_16, window_bounds = array<i64: 12, 12>}, {pipeline_mode = #tpu.pipeline_mode<synchronous>, transform_indices = @transform_17, window_bounds = array<i64: 12, 12>}, {pipeline_mode = #tpu.pipeline_mode<synchronous>, transform_indices = @transform_18, window_bounds = array<i64: 4, 2>}, {pipeline_mode = #tpu.pipeline_mode<synchronous>, transform_indices = @transform_19, window_bounds = array<i64: 8, 4>}, {pipeline_mode = #tpu.pipeline_mode<synchronous>, transform_indices = @transform_20, window_bounds = array<i64: 12, 24>}, {pipeline_mode = #tpu.pipeline_mode<synchronous>, transform_indices = @transform_21, window_bounds = array<i64: 16, 4>}, {pipeline_mode = #tpu.pipeline_mode<synchronous>, transform_indices = @transform_22, window_bounds = array<i64: 12, 48>}, {pipeline_mode = #tpu.pipeline_mode<synchronous>, transform_indices = @transform_23, window_bounds = array<i64: 10, 48>}, {transform_indices = @transform_24, window_bounds = array<i64: 1, 16, 48>}]} {
    %c0 = arith.constant 0 : index
    %c0_0 = arith.constant 0 : index
    %0 = vector.load %arg24[%c0, %c0_0] : memref<10x48xf32, #tpu.memory_space<vmem>>, vector<10x48xf32>
    %c0_1 = arith.constant 0 : index
    %c0_2 = arith.constant 0 : index
    %c0_3 = arith.constant 0 : index
    %1 = vector.load %arg1[%c0_1, %c0_2, %c0_3] : memref<1x16x48xf32, #tpu.memory_space<vmem>>, vector<1x16x48xf32>
    %2 = vector.shape_cast %1 : vector<1x16x48xf32> to vector<16x48xf32>
    %c0_4 = arith.constant 0 : index
    %c0_5 = arith.constant 0 : index
    %c0_6 = arith.constant 0 : index
    %3 = vector.load %arg2[%c0_4, %c0_5, %c0_6] : memref<3x48x24xf32, #tpu.memory_space<vmem>>, vector<1x48x24xf32>
    %4 = vector.shape_cast %3 : vector<1x48x24xf32> to vector<48x24xf32>
    %cst = arith.constant dense<0.000000e+00> : vector<16x24xf32>
    %5 = tpu.matmul %2, %4, %cst {dimension_numbers = #tpu.dot_dimension_numbers<[1], [0], [0], [1], [0, 0, 1, 1], [], []>} : vector<16x48xf32>, vector<48x24xf32>, vector<16x24xf32> -> vector<16x24xf32>
    %c0_7 = arith.constant 0 : index
    %c0_8 = arith.constant 0 : index
    %c0_9 = arith.constant 0 : index
    %6 = vector.load %arg3[%c0_7, %c0_8, %c0_9] : memref<3x8x16xf32, #tpu.memory_space<vmem>>, vector<1x8x16xf32>
    %7 = vector.shape_cast %6 : vector<1x8x16xf32> to vector<8x16xf32>
    %cst_10 = arith.constant dense<0.000000e+00> : vector<8x24xf32>
    %8 = tpu.matmul %7, %5, %cst_10 {dimension_numbers = #tpu.dot_dimension_numbers<[1], [0], [0], [1], [0, 0, 1, 1], [], []>} : vector<8x16xf32>, vector<16x24xf32>, vector<8x24xf32> -> vector<8x24xf32>
    %c1 = arith.constant 1 : index
    %c0_11 = arith.constant 0 : index
    %c0_12 = arith.constant 0 : index
    %9 = vector.load %arg2[%c1, %c0_11, %c0_12] : memref<3x48x24xf32, #tpu.memory_space<vmem>>, vector<1x48x24xf32>
    %10 = vector.shape_cast %9 : vector<1x48x24xf32> to vector<48x24xf32>
    %cst_13 = arith.constant dense<0.000000e+00> : vector<16x24xf32>
    %11 = tpu.matmul %2, %10, %cst_13 {dimension_numbers = #tpu.dot_dimension_numbers<[1], [0], [0], [1], [0, 0, 1, 1], [], []>} : vector<16x48xf32>, vector<48x24xf32>, vector<16x24xf32> -> vector<16x24xf32>
    %c1_14 = arith.constant 1 : index
    %c0_15 = arith.constant 0 : index
    %c0_16 = arith.constant 0 : index
    %12 = vector.load %arg3[%c1_14, %c0_15, %c0_16] : memref<3x8x16xf32, #tpu.memory_space<vmem>>, vector<1x8x16xf32>
    %13 = vector.shape_cast %12 : vector<1x8x16xf32> to vector<8x16xf32>
    %cst_17 = arith.constant dense<0.000000e+00> : vector<8x24xf32>
    %14 = tpu.matmul %13, %11, %cst_17 {dimension_numbers = #tpu.dot_dimension_numbers<[1], [0], [0], [1], [0, 0, 1, 1], [], []>} : vector<8x16xf32>, vector<16x24xf32>, vector<8x24xf32> -> vector<8x24xf32>
    %15 = arith.addf %8, %14 : vector<8x24xf32>
    %c2 = arith.constant 2 : index
    %c0_18 = arith.constant 0 : index
    %c0_19 = arith.constant 0 : index
    %16 = vector.load %arg2[%c2, %c0_18, %c0_19] : memref<3x48x24xf32, #tpu.memory_space<vmem>>, vector<1x48x24xf32>
    %17 = vector.shape_cast %16 : vector<1x48x24xf32> to vector<48x24xf32>
    %cst_20 = arith.constant dense<0.000000e+00> : vector<16x24xf32>
    %18 = tpu.matmul %2, %17, %cst_20 {dimension_numbers = #tpu.dot_dimension_numbers<[1], [0], [0], [1], [0, 0, 1, 1], [], []>} : vector<16x48xf32>, vector<48x24xf32>, vector<16x24xf32> -> vector<16x24xf32>
    %c2_21 = arith.constant 2 : index
    %c0_22 = arith.constant 0 : index
    %c0_23 = arith.constant 0 : index
    %19 = vector.load %arg3[%c2_21, %c0_22, %c0_23] : memref<3x8x16xf32, #tpu.memory_space<vmem>>, vector<1x8x16xf32>
    %20 = vector.shape_cast %19 : vector<1x8x16xf32> to vector<8x16xf32>
    %cst_24 = arith.constant dense<0.000000e+00> : vector<8x24xf32>
    %21 = tpu.matmul %20, %18, %cst_24 {dimension_numbers = #tpu.dot_dimension_numbers<[1], [0], [0], [1], [0, 0, 1, 1], [], []>} : vector<8x16xf32>, vector<16x24xf32>, vector<8x24xf32> -> vector<8x24xf32>
    %22 = arith.addf %15, %21 : vector<8x24xf32>
    %23 = vector.extract_strided_slice %0 {offsets = [0, 0], sizes = [1, 24], strides = [1, 1]} : vector<10x48xf32> to vector<1x24xf32>
    %24 = vector.broadcast %23 : vector<1x24xf32> to vector<8x24xf32>
    %25 = arith.addf %22, %24 : vector<8x24xf32>
    %c0_25 = arith.constant 0 : index
    %c0_26 = arith.constant 0 : index
    %c0_27 = arith.constant 0 : index
    %26 = vector.load %arg4[%c0_25, %c0_26, %c0_27] : memref<3x24x12xf32, #tpu.memory_space<vmem>>, vector<1x24x12xf32>
    %27 = vector.shape_cast %26 : vector<1x24x12xf32> to vector<24x12xf32>
    %cst_28 = arith.constant dense<0.000000e+00> : vector<8x12xf32>
    %28 = tpu.matmul %25, %27, %cst_28 {dimension_numbers = #tpu.dot_dimension_numbers<[1], [0], [0], [1], [0, 0, 1, 1], [], []>} : vector<8x24xf32>, vector<24x12xf32>, vector<8x12xf32> -> vector<8x12xf32>
    %c0_29 = arith.constant 0 : index
    %c0_30 = arith.constant 0 : index
    %c0_31 = arith.constant 0 : index
    %29 = vector.load %arg5[%c0_29, %c0_30, %c0_31] : memref<3x4x8xf32, #tpu.memory_space<vmem>>, vector<1x4x8xf32>
    %30 = vector.shape_cast %29 : vector<1x4x8xf32> to vector<4x8xf32>
    %cst_32 = arith.constant dense<0.000000e+00> : vector<4x12xf32>
    %31 = tpu.matmul %30, %28, %cst_32 {dimension_numbers = #tpu.dot_dimension_numbers<[1], [0], [0], [1], [0, 0, 1, 1], [], []>} : vector<4x8xf32>, vector<8x12xf32>, vector<4x12xf32> -> vector<4x12xf32>
    %c1_33 = arith.constant 1 : index
    %c0_34 = arith.constant 0 : index
    %c0_35 = arith.constant 0 : index
    %32 = vector.load %arg4[%c1_33, %c0_34, %c0_35] : memref<3x24x12xf32, #tpu.memory_space<vmem>>, vector<1x24x12xf32>
    %33 = vector.shape_cast %32 : vector<1x24x12xf32> to vector<24x12xf32>
    %cst_36 = arith.constant dense<0.000000e+00> : vector<8x12xf32>
    %34 = tpu.matmul %25, %33, %cst_36 {dimension_numbers = #tpu.dot_dimension_numbers<[1], [0], [0], [1], [0, 0, 1, 1], [], []>} : vector<8x24xf32>, vector<24x12xf32>, vector<8x12xf32> -> vector<8x12xf32>
    %c1_37 = arith.constant 1 : index
    %c0_38 = arith.constant 0 : index
    %c0_39 = arith.constant 0 : index
    %35 = vector.load %arg5[%c1_37, %c0_38, %c0_39] : memref<3x4x8xf32, #tpu.memory_space<vmem>>, vector<1x4x8xf32>
    %36 = vector.shape_cast %35 : vector<1x4x8xf32> to vector<4x8xf32>
    %cst_40 = arith.constant dense<0.000000e+00> : vector<4x12xf32>
    %37 = tpu.matmul %36, %34, %cst_40 {dimension_numbers = #tpu.dot_dimension_numbers<[1], [0], [0], [1], [0, 0, 1, 1], [], []>} : vector<4x8xf32>, vector<8x12xf32>, vector<4x12xf32> -> vector<4x12xf32>
    %38 = arith.addf %31, %37 : vector<4x12xf32>
    %c2_41 = arith.constant 2 : index
    %c0_42 = arith.constant 0 : index
    %c0_43 = arith.constant 0 : index
    %39 = vector.load %arg4[%c2_41, %c0_42, %c0_43] : memref<3x24x12xf32, #tpu.memory_space<vmem>>, vector<1x24x12xf32>
    %40 = vector.shape_cast %39 : vector<1x24x12xf32> to vector<24x12xf32>
    %cst_44 = arith.constant dense<0.000000e+00> : vector<8x12xf32>
    %41 = tpu.matmul %25, %40, %cst_44 {dimension_numbers = #tpu.dot_dimension_numbers<[1], [0], [0], [1], [0, 0, 1, 1], [], []>} : vector<8x24xf32>, vector<24x12xf32>, vector<8x12xf32> -> vector<8x12xf32>
    %c2_45 = arith.constant 2 : index
    %c0_46 = arith.constant 0 : index
    %c0_47 = arith.constant 0 : index
    %42 = vector.load %arg5[%c2_45, %c0_46, %c0_47] : memref<3x4x8xf32, #tpu.memory_space<vmem>>, vector<1x4x8xf32>
    %43 = vector.shape_cast %42 : vector<1x4x8xf32> to vector<4x8xf32>
    %cst_48 = arith.constant dense<0.000000e+00> : vector<4x12xf32>
    %44 = tpu.matmul %43, %41, %cst_48 {dimension_numbers = #tpu.dot_dimension_numbers<[1], [0], [0], [1], [0, 0, 1, 1], [], []>} : vector<4x8xf32>, vector<8x12xf32>, vector<4x12xf32> -> vector<4x12xf32>
    %45 = arith.addf %38, %44 : vector<4x12xf32>
    %46 = vector.extract_strided_slice %0 {offsets = [1, 0], sizes = [1, 12], strides = [1, 1]} : vector<10x48xf32> to vector<1x12xf32>
    %47 = vector.broadcast %46 : vector<1x12xf32> to vector<4x12xf32>
    %48 = arith.addf %45, %47 : vector<4x12xf32>
    %c0_49 = arith.constant 0 : index
    %c0_50 = arith.constant 0 : index
    %c0_51 = arith.constant 0 : index
    %49 = vector.load %arg6[%c0_49, %c0_50, %c0_51] : memref<3x12x6xf32, #tpu.memory_space<vmem>>, vector<1x12x6xf32>
    %50 = vector.shape_cast %49 : vector<1x12x6xf32> to vector<12x6xf32>
    %cst_52 = arith.constant dense<0.000000e+00> : vector<4x6xf32>
    %51 = tpu.matmul %48, %50, %cst_52 {dimension_numbers = #tpu.dot_dimension_numbers<[1], [0], [0], [1], [0, 0, 1, 1], [], []>} : vector<4x12xf32>, vector<12x6xf32>, vector<4x6xf32> -> vector<4x6xf32>
    %c0_53 = arith.constant 0 : index
    %c0_54 = arith.constant 0 : index
    %c0_55 = arith.constant 0 : index
    %52 = vector.load %arg7[%c0_53, %c0_54, %c0_55] : memref<3x2x4xf32, #tpu.memory_space<vmem>>, vector<1x2x4xf32>
    %53 = vector.shape_cast %52 : vector<1x2x4xf32> to vector<2x4xf32>
    %cst_56 = arith.constant dense<0.000000e+00> : vector<2x6xf32>
    %54 = tpu.matmul %53, %51, %cst_56 {dimension_numbers = #tpu.dot_dimension_numbers<[1], [0], [0], [1], [0, 0, 1, 1], [], []>} : vector<2x4xf32>, vector<4x6xf32>, vector<2x6xf32> -> vector<2x6xf32>
    %c1_57 = arith.constant 1 : index
    %c0_58 = arith.constant 0 : index
    %c0_59 = arith.constant 0 : index
    %55 = vector.load %arg6[%c1_57, %c0_58, %c0_59] : memref<3x12x6xf32, #tpu.memory_space<vmem>>, vector<1x12x6xf32>
    %56 = vector.shape_cast %55 : vector<1x12x6xf32> to vector<12x6xf32>
    %cst_60 = arith.constant dense<0.000000e+00> : vector<4x6xf32>
    %57 = tpu.matmul %48, %56, %cst_60 {dimension_numbers = #tpu.dot_dimension_numbers<[1], [0], [0], [1], [0, 0, 1, 1], [], []>} : vector<4x12xf32>, vector<12x6xf32>, vector<4x6xf32> -> vector<4x6xf32>
    %c1_61 = arith.constant 1 : index
    %c0_62 = arith.constant 0 : index
    %c0_63 = arith.constant 0 : index
    %58 = vector.load %arg7[%c1_61, %c0_62, %c0_63] : memref<3x2x4xf32, #tpu.memory_space<vmem>>, vector<1x2x4xf32>
    %59 = vector.shape_cast %58 : vector<1x2x4xf32> to vector<2x4xf32>
    %cst_64 = arith.constant dense<0.000000e+00> : vector<2x6xf32>
    %60 = tpu.matmul %59, %57, %cst_64 {dimension_numbers = #tpu.dot_dimension_numbers<[1], [0], [0], [1], [0, 0, 1, 1], [], []>} : vector<2x4xf32>, vector<4x6xf32>, vector<2x6xf32> -> vector<2x6xf32>
    %61 = arith.addf %54, %60 : vector<2x6xf32>
    %c2_65 = arith.constant 2 : index
    %c0_66 = arith.constant 0 : index
    %c0_67 = arith.constant 0 : index
    %62 = vector.load %arg6[%c2_65, %c0_66, %c0_67] : memref<3x12x6xf32, #tpu.memory_space<vmem>>, vector<1x12x6xf32>
    %63 = vector.shape_cast %62 : vector<1x12x6xf32> to vector<12x6xf32>
    %cst_68 = arith.constant dense<0.000000e+00> : vector<4x6xf32>
    %64 = tpu.matmul %48, %63, %cst_68 {dimension_numbers = #tpu.dot_dimension_numbers<[1], [0], [0], [1], [0, 0, 1, 1], [], []>} : vector<4x12xf32>, vector<12x6xf32>, vector<4x6xf32> -> vector<4x6xf32>
    %c2_69 = arith.constant 2 : index
    %c0_70 = arith.constant 0 : index
    %c0_71 = arith.constant 0 : index
    %65 = vector.load %arg7[%c2_69, %c0_70, %c0_71] : memref<3x2x4xf32, #tpu.memory_space<vmem>>, vector<1x2x4xf32>
    %66 = vector.shape_cast %65 : vector<1x2x4xf32> to vector<2x4xf32>
    %cst_72 = arith.constant dense<0.000000e+00> : vector<2x6xf32>
    %67 = tpu.matmul %66, %64, %cst_72 {dimension_numbers = #tpu.dot_dimension_numbers<[1], [0], [0], [1], [0, 0, 1, 1], [], []>} : vector<2x4xf32>, vector<4x6xf32>, vector<2x6xf32> -> vector<2x6xf32>
    %68 = arith.addf %61, %67 : vector<2x6xf32>
    %69 = vector.extract_strided_slice %0 {offsets = [2, 0], sizes = [1, 6], strides = [1, 1]} : vector<10x48xf32> to vector<1x6xf32>
    %70 = vector.broadcast %69 : vector<1x6xf32> to vector<2x6xf32>
    %71 = arith.addf %68, %70 : vector<2x6xf32>
    %c0_73 = arith.constant 0 : index
    %c0_74 = arith.constant 0 : index
    %c0_75 = arith.constant 0 : index
    %72 = vector.load %arg8[%c0_73, %c0_74, %c0_75] : memref<3x24x48xf32, #tpu.memory_space<vmem>>, vector<1x24x48xf32>
    %73 = vector.shape_cast %72 : vector<1x24x48xf32> to vector<24x48xf32>
    %cst_76 = arith.constant dense<0.000000e+00> : vector<8x48xf32>
    %74 = tpu.matmul %25, %73, %cst_76 {dimension_numbers = #tpu.dot_dimension_numbers<[1], [0], [0], [1], [0, 0, 1, 1], [], []>} : vector<8x24xf32>, vector<24x48xf32>, vector<8x48xf32> -> vector<8x48xf32>
    %c0_77 = arith.constant 0 : index
    %c0_78 = arith.constant 0 : index
    %c0_79 = arith.constant 0 : index
    %75 = vector.load %arg9[%c0_77, %c0_78, %c0_79] : memref<3x16x8xf32, #tpu.memory_space<vmem>>, vector<1x16x8xf32>
    %76 = vector.shape_cast %75 : vector<1x16x8xf32> to vector<16x8xf32>
    %cst_80 = arith.constant dense<0.000000e+00> : vector<16x48xf32>
    %77 = tpu.matmul %76, %74, %cst_80 {dimension_numbers = #tpu.dot_dimension_numbers<[1], [0], [0], [1], [0, 0, 1, 1], [], []>} : vector<16x8xf32>, vector<8x48xf32>, vector<16x48xf32> -> vector<16x48xf32>
    %c1_81 = arith.constant 1 : index
    %c0_82 = arith.constant 0 : index
    %c0_83 = arith.constant 0 : index
    %78 = vector.load %arg8[%c1_81, %c0_82, %c0_83] : memref<3x24x48xf32, #tpu.memory_space<vmem>>, vector<1x24x48xf32>
    %79 = vector.shape_cast %78 : vector<1x24x48xf32> to vector<24x48xf32>
    %cst_84 = arith.constant dense<0.000000e+00> : vector<8x48xf32>
    %80 = tpu.matmul %25, %79, %cst_84 {dimension_numbers = #tpu.dot_dimension_numbers<[1], [0], [0], [1], [0, 0, 1, 1], [], []>} : vector<8x24xf32>, vector<24x48xf32>, vector<8x48xf32> -> vector<8x48xf32>
    %c1_85 = arith.constant 1 : index
    %c0_86 = arith.constant 0 : index
    %c0_87 = arith.constant 0 : index
    %81 = vector.load %arg9[%c1_85, %c0_86, %c0_87] : memref<3x16x8xf32, #tpu.memory_space<vmem>>, vector<1x16x8xf32>
    %82 = vector.shape_cast %81 : vector<1x16x8xf32> to vector<16x8xf32>
    %cst_88 = arith.constant dense<0.000000e+00> : vector<16x48xf32>
    %83 = tpu.matmul %82, %80, %cst_88 {dimension_numbers = #tpu.dot_dimension_numbers<[1], [0], [0], [1], [0, 0, 1, 1], [], []>} : vector<16x8xf32>, vector<8x48xf32>, vector<16x48xf32> -> vector<16x48xf32>
    %84 = arith.addf %77, %83 : vector<16x48xf32>
    %c2_89 = arith.constant 2 : index
    %c0_90 = arith.constant 0 : index
    %c0_91 = arith.constant 0 : index
    %85 = vector.load %arg8[%c2_89, %c0_90, %c0_91] : memref<3x24x48xf32, #tpu.memory_space<vmem>>, vector<1x24x48xf32>
    %86 = vector.shape_cast %85 : vector<1x24x48xf32> to vector<24x48xf32>
    %cst_92 = arith.constant dense<0.000000e+00> : vector<8x48xf32>
    %87 = tpu.matmul %25, %86, %cst_92 {dimension_numbers = #tpu.dot_dimension_numbers<[1], [0], [0], [1], [0, 0, 1, 1], [], []>} : vector<8x24xf32>, vector<24x48xf32>, vector<8x48xf32> -> vector<8x48xf32>
    %c2_93 = arith.constant 2 : index
    %c0_94 = arith.constant 0 : index
    %c0_95 = arith.constant 0 : index
    %88 = vector.load %arg9[%c2_93, %c0_94, %c0_95] : memref<3x16x8xf32, #tpu.memory_space<vmem>>, vector<1x16x8xf32>
    %89 = vector.shape_cast %88 : vector<1x16x8xf32> to vector<16x8xf32>
    %cst_96 = arith.constant dense<0.000000e+00> : vector<16x48xf32>
    %90 = tpu.matmul %89, %87, %cst_96 {dimension_numbers = #tpu.dot_dimension_numbers<[1], [0], [0], [1], [0, 0, 1, 1], [], []>} : vector<16x8xf32>, vector<8x48xf32>, vector<16x48xf32> -> vector<16x48xf32>
    %91 = arith.addf %84, %90 : vector<16x48xf32>
    %92 = vector.extract_strided_slice %0 {offsets = [3, 0], sizes = [1, 48], strides = [1, 1]} : vector<10x48xf32> to vector<1x48xf32>
    %93 = vector.broadcast %92 : vector<1x48xf32> to vector<16x48xf32>
    %94 = arith.addf %91, %93 : vector<16x48xf32>
    %95 = arith.subf %2, %94 : vector<16x48xf32>
    %c0_97 = arith.constant 0 : index
    %c0_98 = arith.constant 0 : index
    %c0_99 = arith.constant 0 : index
    %96 = vector.load %arg10[%c0_97, %c0_98, %c0_99] : memref<3x12x24xf32, #tpu.memory_space<vmem>>, vector<1x12x24xf32>
    %97 = vector.shape_cast %96 : vector<1x12x24xf32> to vector<12x24xf32>
    %cst_100 = arith.constant dense<0.000000e+00> : vector<4x24xf32>
    %98 = tpu.matmul %48, %97, %cst_100 {dimension_numbers = #tpu.dot_dimension_numbers<[1], [0], [0], [1], [0, 0, 1, 1], [], []>} : vector<4x12xf32>, vector<12x24xf32>, vector<4x24xf32> -> vector<4x24xf32>
    %c0_101 = arith.constant 0 : index
    %c0_102 = arith.constant 0 : index
    %c0_103 = arith.constant 0 : index
    %99 = vector.load %arg11[%c0_101, %c0_102, %c0_103] : memref<3x8x4xf32, #tpu.memory_space<vmem>>, vector<1x8x4xf32>
    %100 = vector.shape_cast %99 : vector<1x8x4xf32> to vector<8x4xf32>
    %cst_104 = arith.constant dense<0.000000e+00> : vector<8x24xf32>
    %101 = tpu.matmul %100, %98, %cst_104 {dimension_numbers = #tpu.dot_dimension_numbers<[1], [0], [0], [1], [0, 0, 1, 1], [], []>} : vector<8x4xf32>, vector<4x24xf32>, vector<8x24xf32> -> vector<8x24xf32>
    %c1_105 = arith.constant 1 : index
    %c0_106 = arith.constant 0 : index
    %c0_107 = arith.constant 0 : index
    %102 = vector.load %arg10[%c1_105, %c0_106, %c0_107] : memref<3x12x24xf32, #tpu.memory_space<vmem>>, vector<1x12x24xf32>
    %103 = vector.shape_cast %102 : vector<1x12x24xf32> to vector<12x24xf32>
    %cst_108 = arith.constant dense<0.000000e+00> : vector<4x24xf32>
    %104 = tpu.matmul %48, %103, %cst_108 {dimension_numbers = #tpu.dot_dimension_numbers<[1], [0], [0], [1], [0, 0, 1, 1], [], []>} : vector<4x12xf32>, vector<12x24xf32>, vector<4x24xf32> -> vector<4x24xf32>
    %c1_109 = arith.constant 1 : index
    %c0_110 = arith.constant 0 : index
    %c0_111 = arith.constant 0 : index
    %105 = vector.load %arg11[%c1_109, %c0_110, %c0_111] : memref<3x8x4xf32, #tpu.memory_space<vmem>>, vector<1x8x4xf32>
    %106 = vector.shape_cast %105 : vector<1x8x4xf32> to vector<8x4xf32>
    %cst_112 = arith.constant dense<0.000000e+00> : vector<8x24xf32>
    %107 = tpu.matmul %106, %104, %cst_112 {dimension_numbers = #tpu.dot_dimension_numbers<[1], [0], [0], [1], [0, 0, 1, 1], [], []>} : vector<8x4xf32>, vector<4x24xf32>, vector<8x24xf32> -> vector<8x24xf32>
    %108 = arith.addf %101, %107 : vector<8x24xf32>
    %c2_113 = arith.constant 2 : index
    %c0_114 = arith.constant 0 : index
    %c0_115 = arith.constant 0 : index
    %109 = vector.load %arg10[%c2_113, %c0_114, %c0_115] : memref<3x12x24xf32, #tpu.memory_space<vmem>>, vector<1x12x24xf32>
    %110 = vector.shape_cast %109 : vector<1x12x24xf32> to vector<12x24xf32>
    %cst_116 = arith.constant dense<0.000000e+00> : vector<4x24xf32>
    %111 = tpu.matmul %48, %110, %cst_116 {dimension_numbers = #tpu.dot_dimension_numbers<[1], [0], [0], [1], [0, 0, 1, 1], [], []>} : vector<4x12xf32>, vector<12x24xf32>, vector<4x24xf32> -> vector<4x24xf32>
    %c2_117 = arith.constant 2 : index
    %c0_118 = arith.constant 0 : index
    %c0_119 = arith.constant 0 : index
    %112 = vector.load %arg11[%c2_117, %c0_118, %c0_119] : memref<3x8x4xf32, #tpu.memory_space<vmem>>, vector<1x8x4xf32>
    %113 = vector.shape_cast %112 : vector<1x8x4xf32> to vector<8x4xf32>
    %cst_120 = arith.constant dense<0.000000e+00> : vector<8x24xf32>
    %114 = tpu.matmul %113, %111, %cst_120 {dimension_numbers = #tpu.dot_dimension_numbers<[1], [0], [0], [1], [0, 0, 1, 1], [], []>} : vector<8x4xf32>, vector<4x24xf32>, vector<8x24xf32> -> vector<8x24xf32>
    %115 = arith.addf %108, %114 : vector<8x24xf32>
    %116 = vector.extract_strided_slice %0 {offsets = [4, 0], sizes = [1, 24], strides = [1, 1]} : vector<10x48xf32> to vector<1x24xf32>
    %117 = vector.broadcast %116 : vector<1x24xf32> to vector<8x24xf32>
    %118 = arith.addf %115, %117 : vector<8x24xf32>
    %119 = arith.subf %25, %118 : vector<8x24xf32>
    %c0_121 = arith.constant 0 : index
    %c0_122 = arith.constant 0 : index
    %c0_123 = arith.constant 0 : index
    %120 = vector.load %arg12[%c0_121, %c0_122, %c0_123] : memref<3x6x12xf32, #tpu.memory_space<vmem>>, vector<1x6x12xf32>
    %121 = vector.shape_cast %120 : vector<1x6x12xf32> to vector<6x12xf32>
    %cst_124 = arith.constant dense<0.000000e+00> : vector<2x12xf32>
    %122 = tpu.matmul %71, %121, %cst_124 {dimension_numbers = #tpu.dot_dimension_numbers<[1], [0], [0], [1], [0, 0, 1, 1], [], []>} : vector<2x6xf32>, vector<6x12xf32>, vector<2x12xf32> -> vector<2x12xf32>
    %c0_125 = arith.constant 0 : index
    %c0_126 = arith.constant 0 : index
    %c0_127 = arith.constant 0 : index
    %123 = vector.load %arg13[%c0_125, %c0_126, %c0_127] : memref<3x4x2xf32, #tpu.memory_space<vmem>>, vector<1x4x2xf32>
    %124 = vector.shape_cast %123 : vector<1x4x2xf32> to vector<4x2xf32>
    %cst_128 = arith.constant dense<0.000000e+00> : vector<4x12xf32>
    %125 = tpu.matmul %124, %122, %cst_128 {dimension_numbers = #tpu.dot_dimension_numbers<[1], [0], [0], [1], [0, 0, 1, 1], [], []>} : vector<4x2xf32>, vector<2x12xf32>, vector<4x12xf32> -> vector<4x12xf32>
    %c1_129 = arith.constant 1 : index
    %c0_130 = arith.constant 0 : index
    %c0_131 = arith.constant 0 : index
    %126 = vector.load %arg12[%c1_129, %c0_130, %c0_131] : memref<3x6x12xf32, #tpu.memory_space<vmem>>, vector<1x6x12xf32>
    %127 = vector.shape_cast %126 : vector<1x6x12xf32> to vector<6x12xf32>
    %cst_132 = arith.constant dense<0.000000e+00> : vector<2x12xf32>
    %128 = tpu.matmul %71, %127, %cst_132 {dimension_numbers = #tpu.dot_dimension_numbers<[1], [0], [0], [1], [0, 0, 1, 1], [], []>} : vector<2x6xf32>, vector<6x12xf32>, vector<2x12xf32> -> vector<2x12xf32>
    %c1_133 = arith.constant 1 : index
    %c0_134 = arith.constant 0 : index
    %c0_135 = arith.constant 0 : index
    %129 = vector.load %arg13[%c1_133, %c0_134, %c0_135] : memref<3x4x2xf32, #tpu.memory_space<vmem>>, vector<1x4x2xf32>
    %130 = vector.shape_cast %129 : vector<1x4x2xf32> to vector<4x2xf32>
    %cst_136 = arith.constant dense<0.000000e+00> : vector<4x12xf32>
    %131 = tpu.matmul %130, %128, %cst_136 {dimension_numbers = #tpu.dot_dimension_numbers<[1], [0], [0], [1], [0, 0, 1, 1], [], []>} : vector<4x2xf32>, vector<2x12xf32>, vector<4x12xf32> -> vector<4x12xf32>
    %132 = arith.addf %125, %131 : vector<4x12xf32>
    %c2_137 = arith.constant 2 : index
    %c0_138 = arith.constant 0 : index
    %c0_139 = arith.constant 0 : index
    %133 = vector.load %arg12[%c2_137, %c0_138, %c0_139] : memref<3x6x12xf32, #tpu.memory_space<vmem>>, vector<1x6x12xf32>
    %134 = vector.shape_cast %133 : vector<1x6x12xf32> to vector<6x12xf32>
    %cst_140 = arith.constant dense<0.000000e+00> : vector<2x12xf32>
    %135 = tpu.matmul %71, %134, %cst_140 {dimension_numbers = #tpu.dot_dimension_numbers<[1], [0], [0], [1], [0, 0, 1, 1], [], []>} : vector<2x6xf32>, vector<6x12xf32>, vector<2x12xf32> -> vector<2x12xf32>
    %c2_141 = arith.constant 2 : index
    %c0_142 = arith.constant 0 : index
    %c0_143 = arith.constant 0 : index
    %136 = vector.load %arg13[%c2_141, %c0_142, %c0_143] : memref<3x4x2xf32, #tpu.memory_space<vmem>>, vector<1x4x2xf32>
    %137 = vector.shape_cast %136 : vector<1x4x2xf32> to vector<4x2xf32>
    %cst_144 = arith.constant dense<0.000000e+00> : vector<4x12xf32>
    %138 = tpu.matmul %137, %135, %cst_144 {dimension_numbers = #tpu.dot_dimension_numbers<[1], [0], [0], [1], [0, 0, 1, 1], [], []>} : vector<4x2xf32>, vector<2x12xf32>, vector<4x12xf32> -> vector<4x12xf32>
    %139 = arith.addf %132, %138 : vector<4x12xf32>
    %140 = vector.extract_strided_slice %0 {offsets = [5, 0], sizes = [1, 12], strides = [1, 1]} : vector<10x48xf32> to vector<1x12xf32>
    %141 = vector.broadcast %140 : vector<1x12xf32> to vector<4x12xf32>
    %142 = arith.addf %139, %141 : vector<4x12xf32>
    %143 = arith.subf %48, %142 : vector<4x12xf32>
    %c0_145 = arith.constant 0 : index
    %c0_146 = arith.constant 0 : index
    %144 = vector.load %arg15[%c0_145, %c0_146] : memref<6x36xf32, #tpu.memory_space<vmem>>, vector<6x36xf32>
    %cst_147 = arith.constant dense<0.000000e+00> : vector<2x36xf32>
    %145 = tpu.matmul %71, %144, %cst_147 {dimension_numbers = #tpu.dot_dimension_numbers<[1], [0], [0], [1], [0, 0, 1, 1], [], []>} : vector<2x6xf32>, vector<6x36xf32>, vector<2x36xf32> -> vector<2x36xf32>
    %c0_148 = arith.constant 0 : index
    %c0_149 = arith.constant 0 : index
    %146 = vector.load %arg19[%c0_148, %c0_149] : memref<4x2xf32, #tpu.memory_space<vmem>>, vector<4x2xf32>
    %cst_150 = arith.constant dense<0.000000e+00> : vector<4x36xf32>
    %147 = tpu.matmul %146, %145, %cst_150 {dimension_numbers = #tpu.dot_dimension_numbers<[1], [0], [0], [1], [0, 0, 1, 1], [], []>} : vector<4x2xf32>, vector<2x36xf32>, vector<4x36xf32> -> vector<4x36xf32>
    %c0_151 = arith.constant 0 : index
    %c0_152 = arith.constant 0 : index
    %148 = vector.load %arg14[%c0_151, %c0_152] : memref<12x36xf32, #tpu.memory_space<vmem>>, vector<12x36xf32>
    %cst_153 = arith.constant dense<0.000000e+00> : vector<4x36xf32>
    %149 = tpu.matmul %143, %148, %cst_153 {dimension_numbers = #tpu.dot_dimension_numbers<[1], [0], [0], [1], [0, 0, 1, 1], [], []>} : vector<4x12xf32>, vector<12x36xf32>, vector<4x36xf32> -> vector<4x36xf32>
    %150 = arith.addf %149, %147 : vector<4x36xf32>
    %151 = vector.extract_strided_slice %0 {offsets = [6, 0], sizes = [1, 36], strides = [1, 1]} : vector<10x48xf32> to vector<1x36xf32>
    %152 = vector.broadcast %151 : vector<1x36xf32> to vector<4x36xf32>
    %153 = arith.addf %150, %152 : vector<4x36xf32>
    %cst_154 = arith.constant 0.000000e+00 : f32
    %154 = vector.broadcast %cst_154 : f32 to vector<4x36xf32>
    %155 = arith.cmpf oge, %153, %154 : vector<4x36xf32>
    %cst_155 = arith.constant 0.00999999977 : f32
    %156 = vector.broadcast %cst_155 : f32 to vector<4x36xf32>
    %157 = arith.mulf %156, %153 : vector<4x36xf32>
    %158 = arith.select %155, %153, %157 : vector<4x36xi1>, vector<4x36xf32>
    %c0_156 = arith.constant 0 : index
    %c0_157 = arith.constant 0 : index
    %159 = vector.load %arg16[%c0_156, %c0_157] : memref<36x12xf32, #tpu.memory_space<vmem>>, vector<36x12xf32>
    %cst_158 = arith.constant dense<0.000000e+00> : vector<4x12xf32>
    %160 = tpu.matmul %158, %159, %cst_158 {dimension_numbers = #tpu.dot_dimension_numbers<[1], [0], [0], [1], [0, 0, 1, 1], [], []>} : vector<4x36xf32>, vector<36x12xf32>, vector<4x12xf32> -> vector<4x12xf32>
    %161 = vector.extract_strided_slice %0 {offsets = [7, 0], sizes = [1, 12], strides = [1, 1]} : vector<10x48xf32> to vector<1x12xf32>
    %162 = vector.broadcast %161 : vector<1x12xf32> to vector<4x12xf32>
    %163 = arith.addf %160, %162 : vector<4x12xf32>
    %164 = arith.mulf %143, %163 : vector<4x12xf32>
    %c0_159 = arith.constant 0 : index
    %c0_160 = arith.constant 0 : index
    %165 = vector.load %arg17[%c0_159, %c0_160] : memref<12x12xf32, #tpu.memory_space<vmem>>, vector<12x12xf32>
    %cst_161 = arith.constant dense<0.000000e+00> : vector<4x12xf32>
    %166 = tpu.matmul %163, %165, %cst_161 {dimension_numbers = #tpu.dot_dimension_numbers<[1], [0], [0], [1], [0, 0, 1, 1], [], []>} : vector<4x12xf32>, vector<12x12xf32>, vector<4x12xf32> -> vector<4x12xf32>
    %167 = vector.extract_strided_slice %0 {offsets = [8, 0], sizes = [1, 12], strides = [1, 1]} : vector<10x48xf32> to vector<1x12xf32>
    %168 = vector.broadcast %167 : vector<1x12xf32> to vector<4x12xf32>
    %169 = arith.addf %166, %168 : vector<4x12xf32>
    %cst_162 = arith.constant 0.000000e+00 : f32
    %170 = vector.broadcast %cst_162 : f32 to vector<4x12xf32>
    %171 = arith.cmpf oge, %169, %170 : vector<4x12xf32>
    %cst_163 = arith.constant 0.00999999977 : f32
    %172 = vector.broadcast %cst_163 : f32 to vector<4x12xf32>
    %173 = arith.mulf %172, %169 : vector<4x12xf32>
    %174 = arith.select %171, %169, %173 : vector<4x12xi1>, vector<4x12xf32>
    %c0_164 = arith.constant 0 : index
    %c0_165 = arith.constant 0 : index
    %175 = vector.load %arg18[%c0_164, %c0_165] : memref<12x12xf32, #tpu.memory_space<vmem>>, vector<12x12xf32>
    %cst_166 = arith.constant dense<0.000000e+00> : vector<4x12xf32>
    %176 = tpu.matmul %174, %175, %cst_166 {dimension_numbers = #tpu.dot_dimension_numbers<[1], [0], [0], [1], [0, 0, 1, 1], [], []>} : vector<4x12xf32>, vector<12x12xf32>, vector<4x12xf32> -> vector<4x12xf32>
    %177 = vector.extract_strided_slice %0 {offsets = [9, 0], sizes = [1, 12], strides = [1, 1]} : vector<10x48xf32> to vector<1x12xf32>
    %178 = vector.broadcast %177 : vector<1x12xf32> to vector<4x12xf32>
    %179 = arith.addf %176, %178 : vector<4x12xf32>
    %c0_167 = arith.constant 0 : index
    %c0_168 = arith.constant 0 : index
    %180 = vector.load %arg20[%c0_167, %c0_168] : memref<8x4xf32, #tpu.memory_space<vmem>>, vector<8x4xf32>
    %c0_169 = arith.constant 0 : index
    %c0_170 = arith.constant 0 : index
    %181 = vector.load %arg21[%c0_169, %c0_170] : memref<12x24xf32, #tpu.memory_space<vmem>>, vector<12x24xf32>
    %cst_171 = arith.constant dense<0.000000e+00> : vector<4x24xf32>
    %182 = tpu.matmul %179, %181, %cst_171 {dimension_numbers = #tpu.dot_dimension_numbers<[1], [0], [0], [1], [0, 0, 1, 1], [], []>} : vector<4x12xf32>, vector<12x24xf32>, vector<4x24xf32> -> vector<4x24xf32>
    %cst_172 = arith.constant dense<0.000000e+00> : vector<8x24xf32>
    %183 = tpu.matmul %180, %182, %cst_172 {dimension_numbers = #tpu.dot_dimension_numbers<[1], [0], [0], [1], [0, 0, 1, 1], [], []>} : vector<8x4xf32>, vector<4x24xf32>, vector<8x24xf32> -> vector<8x24xf32>
    %184 = arith.mulf %119, %183 : vector<8x24xf32>
    %c0_173 = arith.constant 0 : index
    %c0_174 = arith.constant 0 : index
    %185 = vector.load %arg22[%c0_173, %c0_174] : memref<16x4xf32, #tpu.memory_space<vmem>>, vector<16x4xf32>
    %c0_175 = arith.constant 0 : index
    %c0_176 = arith.constant 0 : index
    %186 = vector.load %arg23[%c0_175, %c0_176] : memref<12x48xf32, #tpu.memory_space<vmem>>, vector<12x48xf32>
    %cst_177 = arith.constant dense<0.000000e+00> : vector<4x48xf32>
    %187 = tpu.matmul %179, %186, %cst_177 {dimension_numbers = #tpu.dot_dimension_numbers<[1], [0], [0], [1], [0, 0, 1, 1], [], []>} : vector<4x12xf32>, vector<12x48xf32>, vector<4x48xf32> -> vector<4x48xf32>
    %cst_178 = arith.constant dense<0.000000e+00> : vector<16x48xf32>
    %188 = tpu.matmul %185, %187, %cst_178 {dimension_numbers = #tpu.dot_dimension_numbers<[1], [0], [0], [1], [0, 0, 1, 1], [], []>} : vector<16x4xf32>, vector<4x48xf32>, vector<16x48xf32> -> vector<16x48xf32>
    %189 = arith.mulf %95, %188 : vector<16x48xf32>
    %190 = arith.addf %142, %164 : vector<4x12xf32>
    %c0_179 = arith.constant 0 : index
    %c0_180 = arith.constant 0 : index
    %c0_181 = arith.constant 0 : index
    %191 = vector.load %arg10[%c0_179, %c0_180, %c0_181] : memref<3x12x24xf32, #tpu.memory_space<vmem>>, vector<1x12x24xf32>
    %192 = vector.shape_cast %191 : vector<1x12x24xf32> to vector<12x24xf32>
    %cst_182 = arith.constant dense<0.000000e+00> : vector<4x24xf32>
    %193 = tpu.matmul %190, %192, %cst_182 {dimension_numbers = #tpu.dot_dimension_numbers<[1], [0], [0], [1], [0, 0, 1, 1], [], []>} : vector<4x12xf32>, vector<12x24xf32>, vector<4x24xf32> -> vector<4x24xf32>
    %c0_183 = arith.constant 0 : index
    %c0_184 = arith.constant 0 : index
    %c0_185 = arith.constant 0 : index
    %194 = vector.load %arg11[%c0_183, %c0_184, %c0_185] : memref<3x8x4xf32, #tpu.memory_space<vmem>>, vector<1x8x4xf32>
    %195 = vector.shape_cast %194 : vector<1x8x4xf32> to vector<8x4xf32>
    %cst_186 = arith.constant dense<0.000000e+00> : vector<8x24xf32>
    %196 = tpu.matmul %195, %193, %cst_186 {dimension_numbers = #tpu.dot_dimension_numbers<[1], [0], [0], [1], [0, 0, 1, 1], [], []>} : vector<8x4xf32>, vector<4x24xf32>, vector<8x24xf32> -> vector<8x24xf32>
    %c1_187 = arith.constant 1 : index
    %c0_188 = arith.constant 0 : index
    %c0_189 = arith.constant 0 : index
    %197 = vector.load %arg10[%c1_187, %c0_188, %c0_189] : memref<3x12x24xf32, #tpu.memory_space<vmem>>, vector<1x12x24xf32>
    %198 = vector.shape_cast %197 : vector<1x12x24xf32> to vector<12x24xf32>
    %cst_190 = arith.constant dense<0.000000e+00> : vector<4x24xf32>
    %199 = tpu.matmul %190, %198, %cst_190 {dimension_numbers = #tpu.dot_dimension_numbers<[1], [0], [0], [1], [0, 0, 1, 1], [], []>} : vector<4x12xf32>, vector<12x24xf32>, vector<4x24xf32> -> vector<4x24xf32>
    %c1_191 = arith.constant 1 : index
    %c0_192 = arith.constant 0 : index
    %c0_193 = arith.constant 0 : index
    %200 = vector.load %arg11[%c1_191, %c0_192, %c0_193] : memref<3x8x4xf32, #tpu.memory_space<vmem>>, vector<1x8x4xf32>
    %201 = vector.shape_cast %200 : vector<1x8x4xf32> to vector<8x4xf32>
    %cst_194 = arith.constant dense<0.000000e+00> : vector<8x24xf32>
    %202 = tpu.matmul %201, %199, %cst_194 {dimension_numbers = #tpu.dot_dimension_numbers<[1], [0], [0], [1], [0, 0, 1, 1], [], []>} : vector<8x4xf32>, vector<4x24xf32>, vector<8x24xf32> -> vector<8x24xf32>
    %203 = arith.addf %196, %202 : vector<8x24xf32>
    %c2_195 = arith.constant 2 : index
    %c0_196 = arith.constant 0 : index
    %c0_197 = arith.constant 0 : index
    %204 = vector.load %arg10[%c2_195, %c0_196, %c0_197] : memref<3x12x24xf32, #tpu.memory_space<vmem>>, vector<1x12x24xf32>
    %205 = vector.shape_cast %204 : vector<1x12x24xf32> to vector<12x24xf32>
    %cst_198 = arith.constant dense<0.000000e+00> : vector<4x24xf32>
    %206 = tpu.matmul %190, %205, %cst_198 {dimension_numbers = #tpu.dot_dimension_numbers<[1], [0], [0], [1], [0, 0, 1, 1], [], []>} : vector<4x12xf32>, vector<12x24xf32>, vector<4x24xf32> -> vector<4x24xf32>
    %c2_199 = arith.constant 2 : index
    %c0_200 = arith.constant 0 : index
    %c0_201 = arith.constant 0 : index
    %207 = vector.load %arg11[%c2_199, %c0_200, %c0_201] : memref<3x8x4xf32, #tpu.memory_space<vmem>>, vector<1x8x4xf32>
    %208 = vector.shape_cast %207 : vector<1x8x4xf32> to vector<8x4xf32>
    %cst_202 = arith.constant dense<0.000000e+00> : vector<8x24xf32>
    %209 = tpu.matmul %208, %206, %cst_202 {dimension_numbers = #tpu.dot_dimension_numbers<[1], [0], [0], [1], [0, 0, 1, 1], [], []>} : vector<8x4xf32>, vector<4x24xf32>, vector<8x24xf32> -> vector<8x24xf32>
    %210 = arith.addf %203, %209 : vector<8x24xf32>
    %211 = vector.extract_strided_slice %0 {offsets = [4, 0], sizes = [1, 24], strides = [1, 1]} : vector<10x48xf32> to vector<1x24xf32>
    %212 = vector.broadcast %211 : vector<1x24xf32> to vector<8x24xf32>
    %213 = arith.addf %210, %212 : vector<8x24xf32>
    %214 = arith.addf %213, %184 : vector<8x24xf32>
    %c0_203 = arith.constant 0 : index
    %c0_204 = arith.constant 0 : index
    %c0_205 = arith.constant 0 : index
    %215 = vector.load %arg8[%c0_203, %c0_204, %c0_205] : memref<3x24x48xf32, #tpu.memory_space<vmem>>, vector<1x24x48xf32>
    %216 = vector.shape_cast %215 : vector<1x24x48xf32> to vector<24x48xf32>
    %cst_206 = arith.constant dense<0.000000e+00> : vector<8x48xf32>
    %217 = tpu.matmul %214, %216, %cst_206 {dimension_numbers = #tpu.dot_dimension_numbers<[1], [0], [0], [1], [0, 0, 1, 1], [], []>} : vector<8x24xf32>, vector<24x48xf32>, vector<8x48xf32> -> vector<8x48xf32>
    %c0_207 = arith.constant 0 : index
    %c0_208 = arith.constant 0 : index
    %c0_209 = arith.constant 0 : index
    %218 = vector.load %arg9[%c0_207, %c0_208, %c0_209] : memref<3x16x8xf32, #tpu.memory_space<vmem>>, vector<1x16x8xf32>
    %219 = vector.shape_cast %218 : vector<1x16x8xf32> to vector<16x8xf32>
    %cst_210 = arith.constant dense<0.000000e+00> : vector<16x48xf32>
    %220 = tpu.matmul %219, %217, %cst_210 {dimension_numbers = #tpu.dot_dimension_numbers<[1], [0], [0], [1], [0, 0, 1, 1], [], []>} : vector<16x8xf32>, vector<8x48xf32>, vector<16x48xf32> -> vector<16x48xf32>
    %c1_211 = arith.constant 1 : index
    %c0_212 = arith.constant 0 : index
    %c0_213 = arith.constant 0 : index
    %221 = vector.load %arg8[%c1_211, %c0_212, %c0_213] : memref<3x24x48xf32, #tpu.memory_space<vmem>>, vector<1x24x48xf32>
    %222 = vector.shape_cast %221 : vector<1x24x48xf32> to vector<24x48xf32>
    %cst_214 = arith.constant dense<0.000000e+00> : vector<8x48xf32>
    %223 = tpu.matmul %214, %222, %cst_214 {dimension_numbers = #tpu.dot_dimension_numbers<[1], [0], [0], [1], [0, 0, 1, 1], [], []>} : vector<8x24xf32>, vector<24x48xf32>, vector<8x48xf32> -> vector<8x48xf32>
    %c1_215 = arith.constant 1 : index
    %c0_216 = arith.constant 0 : index
    %c0_217 = arith.constant 0 : index
    %224 = vector.load %arg9[%c1_215, %c0_216, %c0_217] : memref<3x16x8xf32, #tpu.memory_space<vmem>>, vector<1x16x8xf32>
    %225 = vector.shape_cast %224 : vector<1x16x8xf32> to vector<16x8xf32>
    %cst_218 = arith.constant dense<0.000000e+00> : vector<16x48xf32>
    %226 = tpu.matmul %225, %223, %cst_218 {dimension_numbers = #tpu.dot_dimension_numbers<[1], [0], [0], [1], [0, 0, 1, 1], [], []>} : vector<16x8xf32>, vector<8x48xf32>, vector<16x48xf32> -> vector<16x48xf32>
    %227 = arith.addf %220, %226 : vector<16x48xf32>
    %c2_219 = arith.constant 2 : index
    %c0_220 = arith.constant 0 : index
    %c0_221 = arith.constant 0 : index
    %228 = vector.load %arg8[%c2_219, %c0_220, %c0_221] : memref<3x24x48xf32, #tpu.memory_space<vmem>>, vector<1x24x48xf32>
    %229 = vector.shape_cast %228 : vector<1x24x48xf32> to vector<24x48xf32>
    %cst_222 = arith.constant dense<0.000000e+00> : vector<8x48xf32>
    %230 = tpu.matmul %214, %229, %cst_222 {dimension_numbers = #tpu.dot_dimension_numbers<[1], [0], [0], [1], [0, 0, 1, 1], [], []>} : vector<8x24xf32>, vector<24x48xf32>, vector<8x48xf32> -> vector<8x48xf32>
    %c2_223 = arith.constant 2 : index
    %c0_224 = arith.constant 0 : index
    %c0_225 = arith.constant 0 : index
    %231 = vector.load %arg9[%c2_223, %c0_224, %c0_225] : memref<3x16x8xf32, #tpu.memory_space<vmem>>, vector<1x16x8xf32>
    %232 = vector.shape_cast %231 : vector<1x16x8xf32> to vector<16x8xf32>
    %cst_226 = arith.constant dense<0.000000e+00> : vector<16x48xf32>
    %233 = tpu.matmul %232, %230, %cst_226 {dimension_numbers = #tpu.dot_dimension_numbers<[1], [0], [0], [1], [0, 0, 1, 1], [], []>} : vector<16x8xf32>, vector<8x48xf32>, vector<16x48xf32> -> vector<16x48xf32>
    %234 = arith.addf %227, %233 : vector<16x48xf32>
    %235 = vector.extract_strided_slice %0 {offsets = [3, 0], sizes = [1, 48], strides = [1, 1]} : vector<10x48xf32> to vector<1x48xf32>
    %236 = vector.broadcast %235 : vector<1x48xf32> to vector<16x48xf32>
    %237 = arith.addf %234, %236 : vector<16x48xf32>
    %238 = arith.addf %237, %189 : vector<16x48xf32>
    %c0_227 = arith.constant 0 : index
    %c0_228 = arith.constant 0 : index
    %c0_229 = arith.constant 0 : index
    %239 = vector.load %arg25[%c0_227, %c0_228, %c0_229] : memref<1x16x48xf32, #tpu.memory_space<vmem>>, vector<1x16x48xf32>
    %240 = vector.shape_cast %239 : vector<1x16x48xf32> to vector<16x48xf32>
    %241 = vector.shape_cast %238 : vector<16x48xf32> to vector<1x16x48xf32>
    tpu.vector_store %arg25[%c0_227, %c0_228, %c0_229], %241 {strides = array<i32>} : memref<1x16x48xf32, #tpu.memory_space<vmem>>, vector<1x16x48xf32>,
    return
  }
  func.func @transform_0(%arg0: i32) -> (i32, i32, i32) {
    %c0_i32 = arith.constant 0 : i32
    %c0_i32_0 = arith.constant 0 : i32
    %c0_i32_1 = arith.constant 0 : i32
    return %arg0, %c0_i32, %c0_i32_0 : i32, i32, i32
  }
  func.func @transform_1(%arg0: i32) -> (i32, i32, i32) {
    %c0_i32 = arith.constant 0 : i32
    %c0_i32_0 = arith.constant 0 : i32
    %c0_i32_1 = arith.constant 0 : i32
    %c0_i32_2 = arith.constant 0 : i32
    return %c0_i32, %c0_i32_0, %c0_i32_1 : i32, i32, i32
  }
  func.func @transform_2(%arg0: i32) -> (i32, i32, i32) {
    %c0_i32 = arith.constant 0 : i32
    %c0_i32_0 = arith.constant 0 : i32
    %c0_i32_1 = arith.constant 0 : i32
    %c0_i32_2 = arith.constant 0 : i32
    return %c0_i32, %c0_i32_0, %c0_i32_1 : i32, i32, i32
  }
  func.func @transform_3(%arg0: i32) -> (i32, i32, i32) {
    %c0_i32 = arith.constant 0 : i32
    %c0_i32_0 = arith.constant 0 : i32
    %c0_i32_1 = arith.constant 0 : i32
    %c0_i32_2 = arith.constant 0 : i32
    return %c0_i32, %c0_i32_0, %c0_i32_1 : i32, i32, i32
  }
  func.func @transform_4(%arg0: i32) -> (i32, i32, i32) {
    %c0_i32 = arith.constant 0 : i32
    %c0_i32_0 = arith.constant 0 : i32
    %c0_i32_1 = arith.constant 0 : i32
    %c0_i32_2 = arith.constant 0 : i32
    return %c0_i32, %c0_i32_0, %c0_i32_1 : i32, i32, i32
  }
  func.func @transform_5(%arg0: i32) -> (i32, i32, i32) {
    %c0_i32 = arith.constant 0 : i32
    %c0_i32_0 = arith.constant 0 : i32
    %c0_i32_1 = arith.constant 0 : i32
    %c0_i32_2 = arith.constant 0 : i32
    return %c0_i32, %c0_i32_0, %c0_i32_1 : i32, i32, i32
  }
  func.func @transform_6(%arg0: i32) -> (i32, i32, i32) {
    %c0_i32 = arith.constant 0 : i32
    %c0_i32_0 = arith.constant 0 : i32
    %c0_i32_1 = arith.constant 0 : i32
    %c0_i32_2 = arith.constant 0 : i32
    return %c0_i32, %c0_i32_0, %c0_i32_1 : i32, i32, i32
  }
  func.func @transform_7(%arg0: i32) -> (i32, i32, i32) {
    %c0_i32 = arith.constant 0 : i32
    %c0_i32_0 = arith.constant 0 : i32
    %c0_i32_1 = arith.constant 0 : i32
    %c0_i32_2 = arith.constant 0 : i32
    return %c0_i32, %c0_i32_0, %c0_i32_1 : i32, i32, i32
  }
  func.func @transform_8(%arg0: i32) -> (i32, i32, i32) {
    %c0_i32 = arith.constant 0 : i32
    %c0_i32_0 = arith.constant 0 : i32
    %c0_i32_1 = arith.constant 0 : i32
    %c0_i32_2 = arith.constant 0 : i32
    return %c0_i32, %c0_i32_0, %c0_i32_1 : i32, i32, i32
  }
  func.func @transform_9(%arg0: i32) -> (i32, i32, i32) {
    %c0_i32 = arith.constant 0 : i32
    %c0_i32_0 = arith.constant 0 : i32
    %c0_i32_1 = arith.constant 0 : i32
    %c0_i32_2 = arith.constant 0 : i32
    return %c0_i32, %c0_i32_0, %c0_i32_1 : i32, i32, i32
  }
  func.func @transform_10(%arg0: i32) -> (i32, i32, i32) {
    %c0_i32 = arith.constant 0 : i32
    %c0_i32_0 = arith.constant 0 : i32
    %c0_i32_1 = arith.constant 0 : i32
    %c0_i32_2 = arith.constant 0 : i32
    return %c0_i32, %c0_i32_0, %c0_i32_1 : i32, i32, i32
  }
  func.func @transform_11(%arg0: i32) -> (i32, i32, i32) {
    %c0_i32 = arith.constant 0 : i32
    %c0_i32_0 = arith.constant 0 : i32
    %c0_i32_1 = arith.constant 0 : i32
    %c0_i32_2 = arith.constant 0 : i32
    return %c0_i32, %c0_i32_0, %c0_i32_1 : i32, i32, i32
  }
  func.func @transform_12(%arg0: i32) -> (i32, i32, i32) {
    %c0_i32 = arith.constant 0 : i32
    %c0_i32_0 = arith.constant 0 : i32
    %c0_i32_1 = arith.constant 0 : i32
    %c0_i32_2 = arith.constant 0 : i32
    return %c0_i32, %c0_i32_0, %c0_i32_1 : i32, i32, i32
  }
  func.func @transform_13(%arg0: i32) -> (i32, i32) {
    %c0_i32 = arith.constant 0 : i32
    %c0_i32_0 = arith.constant 0 : i32
    %c0_i32_1 = arith.constant 0 : i32
    return %c0_i32, %c0_i32_0 : i32, i32
  }
  func.func @transform_14(%arg0: i32) -> (i32, i32) {
    %c0_i32 = arith.constant 0 : i32
    %c0_i32_0 = arith.constant 0 : i32
    %c0_i32_1 = arith.constant 0 : i32
    return %c0_i32, %c0_i32_0 : i32, i32
  }
  func.func @transform_15(%arg0: i32) -> (i32, i32) {
    %c0_i32 = arith.constant 0 : i32
    %c0_i32_0 = arith.constant 0 : i32
    %c0_i32_1 = arith.constant 0 : i32
    return %c0_i32, %c0_i32_0 : i32, i32
  }
  func.func @transform_16(%arg0: i32) -> (i32, i32) {
    %c0_i32 = arith.constant 0 : i32
    %c0_i32_0 = arith.constant 0 : i32
    %c0_i32_1 = arith.constant 0 : i32
    return %c0_i32, %c0_i32_0 : i32, i32
  }
  func.func @transform_17(%arg0: i32) -> (i32, i32) {
    %c0_i32 = arith.constant 0 : i32
    %c0_i32_0 = arith.constant 0 : i32
    %c0_i32_1 = arith.constant 0 : i32
    return %c0_i32, %c0_i32_0 : i32, i32
  }
  func.func @transform_18(%arg0: i32) -> (i32, i32) {
    %c0_i32 = arith.constant 0 : i32
    %c0_i32_0 = arith.constant 0 : i32
    %c0_i32_1 = arith.constant 0 : i32
    return %c0_i32, %c0_i32_0 : i32, i32
  }
  func.func @transform_19(%arg0: i32) -> (i32, i32) {
    %c0_i32 = arith.constant 0 : i32
    %c0_i32_0 = arith.constant 0 : i32
    %c0_i32_1 = arith.constant 0 : i32
    return %c0_i32, %c0_i32_0 : i32, i32
  }
  func.func @transform_20(%arg0: i32) -> (i32, i32) {
    %c0_i32 = arith.constant 0 : i32
    %c0_i32_0 = arith.constant 0 : i32
    %c0_i32_1 = arith.constant 0 : i32
    return %c0_i32, %c0_i32_0 : i32, i32
  }
  func.func @transform_21(%arg0: i32) -> (i32, i32) {
    %c0_i32 = arith.constant 0 : i32
    %c0_i32_0 = arith.constant 0 : i32
    %c0_i32_1 = arith.constant 0 : i32
    return %c0_i32, %c0_i32_0 : i32, i32
  }
  func.func @transform_22(%arg0: i32) -> (i32, i32) {
    %c0_i32 = arith.constant 0 : i32
    %c0_i32_0 = arith.constant 0 : i32
    %c0_i32_1 = arith.constant 0 : i32
    return %c0_i32, %c0_i32_0 : i32, i32
  }
  func.func @transform_23(%arg0: i32) -> (i32, i32) {
    %c0_i32 = arith.constant 0 : i32
    %c0_i32_0 = arith.constant 0 : i32
    %c0_i32_1 = arith.constant 0 : i32
    return %c0_i32, %c0_i32_0 : i32, i32
  }
  func.func @transform_24(%arg0: i32) -> (i32, i32, i32) {
    %c0_i32 = arith.constant 0 : i32
    %c0_i32_0 = arith.constant 0 : i32
    %c0_i32_1 = arith.constant 0 : i32
    return %arg0, %c0_i32, %c0_i32_0 : i32, i32, i32
  }
}

</mosaic_0001>

<llo_original>
// kernel: mslt_forward.1
$region0: #{mslt_forward.1}
  #allocation0 [shape = 'u32[]', space=smem, size = 0x4, offset = 0x4, fixed_abs, tag = 'smem constant byte address 0x4 - core index']
  #allocation1 [shape = 'u32[144,128]{1,0:T(1,128)}', space=vmem, size = 0x12000, scoped, tag = 'internal scratch']
  %s0 = inlined_call_operand.vmem [shape: f32[2,16,48], index: 0, kind: input, shape index: {}]
  %s1 = inlined_call_operand.vmem [shape: f32[3,48,24], index: 1, kind: input, shape index: {}]
  %s2 = inlined_call_operand.vmem [shape: f32[3,8,16], index: 2, kind: input, shape index: {}]
  %s3 = inlined_call_operand.vmem [shape: f32[3,24,12], index: 3, kind: input, shape index: {}]
  %s4 = inlined_call_operand.vmem [shape: f32[3,4,8], index: 4, kind: input, shape index: {}]
  %s5 = inlined_call_operand.vmem [shape: f32[3,12,6], index: 5, kind: input, shape index: {}]
  %s6 = inlined_call_operand.vmem [shape: f32[3,2,4], index: 6, kind: input, shape index: {}]
  %s7 = inlined_call_operand.vmem [shape: f32[3,24,48], index: 7, kind: input, shape index: {}]
  %s8 = inlined_call_operand.vmem [shape: f32[3,16,8], index: 8, kind: input, shape index: {}]
  %s9 = inlined_call_operand.vmem [shape: f32[3,12,24], index: 9, kind: input, shape index: {}]
  %s10 = inlined_call_operand.vmem [shape: f32[3,8,4], index: 10, kind: input, shape index: {}]
  %s11 = inlined_call_operand.vmem [shape: f32[3,6,12], index: 11, kind: input, shape index: {}]
  %s12 = inlined_call_operand.vmem [shape: f32[3,4,2], index: 12, kind: input, shape index: {}]
  %s13 = inlined_call_operand.vmem [shape: f32[12,36], index: 13, kind: input, shape index: {}]
  %s14 = inlined_call_operand.vmem [shape: f32[6,36], index: 14, kind: input, shape index: {}]
  %s15 = inlined_call_operand.vmem [shape: f32[36,12], index: 15, kind: input, shape index: {}]
  %s16 = inlined_call_operand.vmem [shape: f32[12,12], index: 16, kind: input, shape index: {}]
  %s17 = inlined_call_operand.vmem [shape: f32[12,12], index: 17, kind: input, shape index: {}]
  %s18 = inlined_call_operand.vmem [shape: f32[4,2], index: 18, kind: input, shape index: {}]
  %s19 = inlined_call_operand.vmem [shape: f32[8,4], index: 19, kind: input, shape index: {}]
  %s20 = inlined_call_operand.vmem [shape: f32[12,24], index: 20, kind: input, shape index: {}]
  %s21 = inlined_call_operand.vmem [shape: f32[16,4], index: 21, kind: input, shape index: {}]
  %s22 = inlined_call_operand.vmem [shape: f32[12,48], index: 22, kind: input, shape index: {}]
  %s23 = inlined_call_operand.vmem [shape: f32[10,48], index: 23, kind: input, shape index: {}]
  %s24 = inlined_call_operand.vmem [shape: f32[2,16,48], index: 24, kind: output, shape index: {}]
  %s25 = sld [smem:[#allocation0]]
  $region129: #{mslt_forward.1} parent=0
    _
  %s27 = ssub.s32 1, %s25
  %s28 = scalar_select 0, %s27, %s25
  loop: start=0, step=1, limit=4
  $region2: #{mslt_forward.1} parent=0 // loop_pre_header
    _
  $region3: #{mslt_forward.1} parent=0 // loop_header
    %s30 = sphi 0, %s34
    %p31 = scmp.ge.s32.totalorder %s30, 4
    %s40 = sphi 0, %s42
    %s43 = sphi 0, %s40
    %s44 = sphi 0, %s43
    %s60 = sphi 0, %s44
    %s64 = sphi 0, %s64
    %s66 = sphi 0, %s64
    %s67 = sphi 0, %s66
    %s81 = sphi 0, %s67
    %s85 = sphi 0, %s85
    %s87 = sphi 0, %s85
    %s88 = sphi 0, %s87
    %s102 = sphi 0, %s88
    %s106 = sphi 0, %s106
    %s108 = sphi 0, %s106
    %s109 = sphi 0, %s108
    %s123 = sphi 0, %s109
    %s127 = sphi 0, %s127
    %s129 = sphi 0, %s127
    %s130 = sphi 0, %s129
    %s144 = sphi 0, %s130
    %s148 = sphi 0, %s148
    %s150 = sphi 0, %s148
    %s151 = sphi 0, %s150
    %s165 = sphi 0, %s151
    %s169 = sphi 0, %s169
    %s171 = sphi 0, %s169
    %s172 = sphi 0, %s171
    %s186 = sphi 0, %s172
    %s190 = sphi 0, %s190
    %s192 = sphi 0, %s190
    %s193 = sphi 0, %s192
    %s207 = sphi 0, %s193
    %s211 = sphi 0, %s211
    %s213 = sphi 0, %s211
    %s214 = sphi 0, %s213
    %s228 = sphi 0, %s214
    %s232 = sphi 0, %s232
    %s234 = sphi 0, %s232
    %s235 = sphi 0, %s234
    %s249 = sphi 0, %s235
    %s253 = sphi 0, %s253
    %s255 = sphi 0, %s253
    %s256 = sphi 0, %s255
    %s270 = sphi 0, %s256
    %s274 = sphi 0, %s274
    %s276 = sphi 0, %s274
    %s277 = sphi 0, %s276
    %s291 = sphi 0, %s277
    %s295 = sphi 0, %s295
    %s297 = sphi 0, %s295
    %s298 = sphi 0, %s297
    %s312 = sphi 0, %s298
    %s316 = sphi 0, %s316
    %s318 = sphi 0, %s316
    %s319 = sphi 0, %s318
    %s333 = sphi 0, %s319
    %s337 = sphi 0, %s337
    %s339 = sphi 0, %s337
    %s340 = sphi 0, %s339
    %s354 = sphi 0, %s340
    %s358 = sphi 0, %s358
    %s360 = sphi 0, %s358
    %s361 = sphi 0, %s360
    %s375 = sphi 0, %s361
    %s379 = sphi 0, %s379
    %s381 = sphi 0, %s379
    %s382 = sphi 0, %s381
    %s396 = sphi 0, %s382
    %s400 = sphi 0, %s400
    %s402 = sphi 0, %s400
    %s403 = sphi 0, %s402
    %s417 = sphi 0, %s403
    %s421 = sphi 0, %s421
    %s423 = sphi 0, %s421
    %s424 = sphi 0, %s423
    %s438 = sphi 0, %s424
    %s442 = sphi 0, %s442
    %s444 = sphi 0, %s442
    %s445 = sphi 0, %s444
    %s459 = sphi 0, %s445
    %s463 = sphi 0, %s463
    %s465 = sphi 0, %s463
    %s466 = sphi 0, %s465
    %s480 = sphi 0, %s466
    %s484 = sphi 0, %s484
    %s486 = sphi 0, %s484
    %s487 = sphi 0, %s486
    %s501 = sphi 0, %s487
    %s505 = sphi 0, %s505
    %s507 = sphi 0, %s505
    %s508 = sphi 0, %s507
    %s522 = sphi 0, %s508
    %s526 = sphi 0, %s526
    %s528 = sphi 0, %s526
    %s529 = sphi 0, %s528
    %s543 = sphi 0, %s529
    %s549 = sphi 0, %s551
    %s552 = sphi 0, %s549
    %s553 = sphi 0, %s552
    %s569 = sphi 0, %s553
  $region4: #{mslt_forward.1} parent=0 // loop_header_branch
    %33 = sbr.rel (%p31) target = $region8
  $region5: #{mslt_forward.1} parent=0 // loop_body
    %s35 = ssub.s32 %s30, 1
    %s36 = ssub.s32 %s30, 2
    %s37 = sadd.s32 %s30, 1
    %s38 = ssub.s32 %s30, %s37
    %p39 = scmp.eq.s32.totalorder %s38, 0
    %s41 = sadd.s32 %s40, 1
    %s42 = scalar_select %p39, %s40, %s41
    %p45 = pneg %p39
    %p46 = scmp.eq.s32.totalorder %s30, 1
    %p47 = por %p45, %p46
    %p48 = scmp.ne.s32.totalorder %s40, %s43
    %p49 = scmp.eq.s32.totalorder %s30, 0
    %p50 = por %p48, %p49
    %p51 = scmp.ne.s32.totalorder %s40, %s43
    %p52 = scmp.eq.s32.totalorder %s35, 1
    %p53 = por %p51, %p52
    %p54 = scmp.ne.s32.totalorder %s43, %s44
    %p55 = scmp.eq.s32.totalorder %s35, 0
    %p56 = por %p54, %p55
    %p57 = scmp.ne.s32.totalorder %s43, %s44
    %p58 = scmp.eq.s32.totalorder %s36, 1
    %p59 = por %p57, %p58
    %p61 = scmp.ne.s32.totalorder %s44, %s60
    %p62 = scmp.eq.s32.totalorder %s36, 0
    %p63 = por %p61, %p62
    %s65 = sadd.s32 %s64, 1
    %p68 = scmp.eq.s32.totalorder %s30, 1
    %p69 = scmp.ne.s32.totalorder %s64, %s66
    %p70 = scmp.eq.s32.totalorder %s30, 0
    %p71 = por %p69, %p70
    %p72 = scmp.ne.s32.totalorder %s64, %s66
    %p73 = scmp.eq.s32.totalorder %s35, 1
    %p74 = por %p72, %p73
    %p75 = scmp.ne.s32.totalorder %s66, %s67
    %p76 = scmp.eq.s32.totalorder %s35, 0
    %p77 = por %p75, %p76
    %p78 = scmp.ne.s32.totalorder %s66, %s67
    %p79 = scmp.eq.s32.totalorder %s36, 1
    %p80 = por %p78, %p79
    %p82 = scmp.ne.s32.totalorder %s67, %s81
    %p83 = scmp.eq.s32.totalorder %s36, 0
    %p84 = por %p82, %p83
    %s86 = sadd.s32 %s85, 1
    %p89 = scmp.eq.s32.totalorder %s30, 1
    %p90 = scmp.ne.s32.totalorder %s85, %s87
    %p91 = scmp.eq.s32.totalorder %s30, 0
    %p92 = por %p90, %p91
    %p93 = scmp.ne.s32.totalorder %s85, %s87
    %p94 = scmp.eq.s32.totalorder %s35, 1
    %p95 = por %p93, %p94
    %p96 = scmp.ne.s32.totalorder %s87, %s88
    %p97 = scmp.eq.s32.totalorder %s35, 0
    %p98 = por %p96, %p97
    %p99 = scmp.ne.s32.totalorder %s87, %s88
    %p100 = scmp.eq.s32.totalorder %s36, 1
    %p101 = por %p99, %p100
    %p103 = scmp.ne.s32.totalorder %s88, %s102
    %p104 = scmp.eq.s32.totalorder %s36, 0
    %p105 = por %p103, %p104
    %s107 = sadd.s32 %s106, 1
    %p110 = scmp.eq.s32.totalorder %s30, 1
    %p111 = scmp.ne.s32.totalorder %s106, %s108
    %p112 = scmp.eq.s32.totalorder %s30, 0
    %p113 = por %p111, %p112
    %p114 = scmp.ne.s32.totalorder %s106, %s108
    %p115 = scmp.eq.s32.totalorder %s35, 1
    %p116 = por %p114, %p115
    %p117 = scmp.ne.s32.totalorder %s108, %s109
    %p118 = scmp.eq.s32.totalorder %s35, 0
    %p119 = por %p117, %p118
    %p120 = scmp.ne.s32.totalorder %s108, %s109
    %p121 = scmp.eq.s32.totalorder %s36, 1
    %p122 = por %p120, %p121
    %p124 = scmp.ne.s32.totalorder %s109, %s123
    %p125 = scmp.eq.s32.totalorder %s36, 0
    %p126 = por %p124, %p125
    %s128 = sadd.s32 %s127, 1
    %p131 = scmp.eq.s32.totalorder %s30, 1
    %p132 = scmp.ne.s32.totalorder %s127, %s129
    %p133 = scmp.eq.s32.totalorder %s30, 0
    %p134 = por %p132, %p133
    %p135 = scmp.ne.s32.totalorder %s127, %s129
    %p136 = scmp.eq.s32.totalorder %s35, 1
    %p137 = por %p135, %p136
    %p138 = scmp.ne.s32.totalorder %s129, %s130
    %p139 = scmp.eq.s32.totalorder %s35, 0
    %p140 = por %p138, %p139
    %p141 = scmp.ne.s32.totalorder %s129, %s130
    %p142 = scmp.eq.s32.totalorder %s36, 1
    %p143 = por %p141, %p142
    %p145 = scmp.ne.s32.totalorder %s130, %s144
    %p146 = scmp.eq.s32.totalorder %s36, 0
    %p147 = por %p145, %p146
    %s149 = sadd.s32 %s148, 1
    %p152 = scmp.eq.s32.totalorder %s30, 1
    %p153 = scmp.ne.s32.totalorder %s148, %s150
    %p154 = scmp.eq.s32.totalorder %s30, 0
    %p155 = por %p153, %p154
    %p156 = scmp.ne.s32.totalorder %s148, %s150
    %p157 = scmp.eq.s32.totalorder %s35, 1
    %p158 = por %p156, %p157
    %p159 = scmp.ne.s32.totalorder %s150, %s151
    %p160 = scmp.eq.s32.totalorder %s35, 0
    %p161 = por %p159, %p160
    %p162 = scmp.ne.s32.totalorder %s150, %s151
    %p163 = scmp.eq.s32.totalorder %s36, 1
    %p164 = por %p162, %p163
    %p166 = scmp.ne.s32.totalorder %s151, %s165
    %p167 = scmp.eq.s32.totalorder %s36, 0
    %p168 = por %p166, %p167
    %s170 = sadd.s32 %s169, 1
    %p173 = scmp.eq.s32.totalorder %s30, 1
    %p174 = scmp.ne.s32.totalorder %s169, %s171
    %p175 = scmp.eq.s32.totalorder %s30, 0
    %p176 = por %p174, %p175
    %p177 = scmp.ne.s32.totalorder %s169, %s171
    %p178 = scmp.eq.s32.totalorder %s35, 1
    %p179 = por %p177, %p178
    %p180 = scmp.ne.s32.totalorder %s171, %s172
    %p181 = scmp.eq.s32.totalorder %s35, 0
    %p182 = por %p180, %p181
    %p183 = scmp.ne.s32.totalorder %s171, %s172
    %p184 = scmp.eq.s32.totalorder %s36, 1
    %p185 = por %p183, %p184
    %p187 = scmp.ne.s32.totalorder %s172, %s186
    %p188 = scmp.eq.s32.totalorder %s36, 0
    %p189 = por %p187, %p188
    %s191 = sadd.s32 %s190, 1
    %p194 = scmp.eq.s32.totalorder %s30, 1
    %p195 = scmp.ne.s32.totalorder %s190, %s192
    %p196 = scmp.eq.s32.totalorder %s30, 0
    %p197 = por %p195, %p196
    %p198 = scmp.ne.s32.totalorder %s190, %s192
    %p199 = scmp.eq.s32.totalorder %s35, 1
    %p200 = por %p198, %p199
    %p201 = scmp.ne.s32.totalorder %s192, %s193
    %p202 = scmp.eq.s32.totalorder %s35, 0
    %p203 = por %p201, %p202
    %p204 = scmp.ne.s32.totalorder %s192, %s193
    %p205 = scmp.eq.s32.totalorder %s36, 1
    %p206 = por %p204, %p205
    %p208 = scmp.ne.s32.totalorder %s193, %s207
    %p209 = scmp.eq.s32.totalorder %s36, 0
    %p210 = por %p208, %p209
    %s212 = sadd.s32 %s211, 1
    %p215 = scmp.eq.s32.totalorder %s30, 1
    %p216 = scmp.ne.s32.totalorder %s211, %s213
    %p217 = scmp.eq.s32.totalorder %s30, 0
    %p218 = por %p216, %p217
    %p219 = scmp.ne.s32.totalorder %s211, %s213
    %p220 = scmp.eq.s32.totalorder %s35, 1
    %p221 = por %p219, %p220
    %p222 = scmp.ne.s32.totalorder %s213, %s214
    %p223 = scmp.eq.s32.totalorder %s35, 0
    %p224 = por %p222, %p223
    %p225 = scmp.ne.s32.totalorder %s213, %s214
    %p226 = scmp.eq.s32.totalorder %s36, 1
    %p227 = por %p225, %p226
    %p229 = scmp.ne.s32.totalorder %s214, %s228
    %p230 = scmp.eq.s32.totalorder %s36, 0
    %p231 = por %p229, %p230
    %s233 = sadd.s32 %s232, 1
    %p236 = scmp.eq.s32.totalorder %s30, 1
    %p237 = scmp.ne.s32.totalorder %s232, %s234
    %p238 = scmp.eq.s32.totalorder %s30, 0
    %p239 = por %p237, %p238
    %p240 = scmp.ne.s32.totalorder %s232, %s234
    %p241 = scmp.eq.s32.totalorder %s35, 1
    %p242 = por %p240, %p241
    %p243 = scmp.ne.s32.totalorder %s234, %s235
    %p244 = scmp.eq.s32.totalorder %s35, 0
    %p245 = por %p243, %p244
    %p246 = scmp.ne.s32.totalorder %s234, %s235
    %p247 = scmp.eq.s32.totalorder %s36, 1
    %p248 = por %p246, %p247
    %p250 = scmp.ne.s32.totalorder %s235, %s249
    %p251 = scmp.eq.s32.totalorder %s36, 0
    %p252 = por %p250, %p251
    %s254 = sadd.s32 %s253, 1
    %p257 = scmp.eq.s32.totalorder %s30, 1
    %p258 = scmp.ne.s32.totalorder %s253, %s255
    %p259 = scmp.eq.s32.totalorder %s30, 0
    %p260 = por %p258, %p259
    %p261 = scmp.ne.s32.totalorder %s253, %s255
    %p262 = scmp.eq.s32.totalorder %s35, 1
    %p263 = por %p261, %p262
    %p264 = scmp.ne.s32.totalorder %s255, %s256
    %p265 = scmp.eq.s32.totalorder %s35, 0
    %p266 = por %p264, %p265
    %p267 = scmp.ne.s32.totalorder %s255, %s256
    %p268 = scmp.eq.s32.totalorder %s36, 1
    %p269 = por %p267, %p268
    %p271 = scmp.ne.s32.totalorder %s256, %s270
    %p272 = scmp.eq.s32.totalorder %s36, 0
    %p273 = por %p271, %p272
    %s275 = sadd.s32 %s274, 1
    %p278 = scmp.eq.s32.totalorder %s30, 1
    %p279 = scmp.ne.s32.totalorder %s274, %s276
    %p280 = scmp.eq.s32.totalorder %s30, 0
    %p281 = por %p279, %p280
    %p282 = scmp.ne.s32.totalorder %s274, %s276
    %p283 = scmp.eq.s32.totalorder %s35, 1
    %p284 = por %p282, %p283
    %p285 = scmp.ne.s32.totalorder %s276, %s277
    %p286 = scmp.eq.s32.totalorder %s35, 0
    %p287 = por %p285, %p286
    %p288 = scmp.ne.s32.totalorder %s276, %s277
    %p289 = scmp.eq.s32.totalorder %s36, 1
    %p290 = por %p288, %p289
    %p292 = scmp.ne.s32.totalorder %s277, %s291
    %p293 = scmp.eq.s32.totalorder %s36, 0
    %p294 = por %p292, %p293
    %s296 = sadd.s32 %s295, 1
    %p299 = scmp.eq.s32.totalorder %s30, 1
    %p300 = scmp.ne.s32.totalorder %s295, %s297
    %p301 = scmp.eq.s32.totalorder %s30, 0
    %p302 = por %p300, %p301
    %p303 = scmp.ne.s32.totalorder %s295, %s297
    %p304 = scmp.eq.s32.totalorder %s35, 1
    %p305 = por %p303, %p304
    %p306 = scmp.ne.s32.totalorder %s297, %s298
    %p307 = scmp.eq.s32.totalorder %s35, 0
    %p308 = por %p306, %p307
    %p309 = scmp.ne.s32.totalorder %s297, %s298
    %p310 = scmp.eq.s32.totalorder %s36, 1
    %p311 = por %p309, %p310
    %p313 = scmp.ne.s32.totalorder %s298, %s312
    %p314 = scmp.eq.s32.totalorder %s36, 0
    %p315 = por %p313, %p314
    %s317 = sadd.s32 %s316, 1
    %p320 = scmp.eq.s32.totalorder %s30, 1
    %p321 = scmp.ne.s32.totalorder %s316, %s318
    %p322 = scmp.eq.s32.totalorder %s30, 0
    %p323 = por %p321, %p322
    %p324 = scmp.ne.s32.totalorder %s316, %s318
    %p325 = scmp.eq.s32.totalorder %s35, 1
    %p326 = por %p324, %p325
    %p327 = scmp.ne.s32.totalorder %s318, %s319
    %p328 = scmp.eq.s32.totalorder %s35, 0
    %p329 = por %p327, %p328
    %p330 = scmp.ne.s32.totalorder %s318, %s319
    %p331 = scmp.eq.s32.totalorder %s36, 1
    %p332 = por %p330, %p331
    %p334 = scmp.ne.s32.totalorder %s319, %s333
    %p335 = scmp.eq.s32.totalorder %s36, 0
    %p336 = por %p334, %p335
    %s338 = sadd.s32 %s337, 1
    %p341 = scmp.eq.s32.totalorder %s30, 1
    %p342 = scmp.ne.s32.totalorder %s337, %s339
    %p343 = scmp.eq.s32.totalorder %s30, 0
    %p344 = por %p342, %p343
    %p345 = scmp.ne.s32.totalorder %s337, %s339
    %p346 = scmp.eq.s32.totalorder %s35, 1
    %p347 = por %p345, %p346
    %p348 = scmp.ne.s32.totalorder %s339, %s340
    %p349 = scmp.eq.s32.totalorder %s35, 0
    %p350 = por %p348, %p349
    %p351 = scmp.ne.s32.totalorder %s339, %s340
    %p352 = scmp.eq.s32.totalorder %s36, 1
    %p353 = por %p351, %p352
    %p355 = scmp.ne.s32.totalorder %s340, %s354
    %p356 = scmp.eq.s32.totalorder %s36, 0
    %p357 = por %p355, %p356
    %s359 = sadd.s32 %s358, 1
    %p362 = scmp.eq.s32.totalorder %s30, 1
    %p363 = scmp.ne.s32.totalorder %s358, %s360
    %p364 = scmp.eq.s32.totalorder %s30, 0
    %p365 = por %p363, %p364
    %p366 = scmp.ne.s32.totalorder %s358, %s360
    %p367 = scmp.eq.s32.totalorder %s35, 1
    %p368 = por %p366, %p367
    %p369 = scmp.ne.s32.totalorder %s360, %s361
    %p370 = scmp.eq.s32.totalorder %s35, 0
    %p371 = por %p369, %p370
    %p372 = scmp.ne.s32.totalorder %s360, %s361
    %p373 = scmp.eq.s32.totalorder %s36, 1
    %p374 = por %p372, %p373
    %p376 = scmp.ne.s32.totalorder %s361, %s375
    %p377 = scmp.eq.s32.totalorder %s36, 0
    %p378 = por %p376, %p377
    %s380 = sadd.s32 %s379, 1
    %p383 = scmp.eq.s32.totalorder %s30, 1
    %p384 = scmp.ne.s32.totalorder %s379, %s381
    %p385 = scmp.eq.s32.totalorder %s30, 0
    %p386 = por %p384, %p385
    %p387 = scmp.ne.s32.totalorder %s379, %s381
    %p388 = scmp.eq.s32.totalorder %s35, 1
    %p389 = por %p387, %p388
    %p390 = scmp.ne.s32.totalorder %s381, %s382
    %p391 = scmp.eq.s32.totalorder %s35, 0
    %p392 = por %p390, %p391
    %p393 = scmp.ne.s32.totalorder %s381, %s382
    %p394 = scmp.eq.s32.totalorder %s36, 1
    %p395 = por %p393, %p394
    %p397 = scmp.ne.s32.totalorder %s382, %s396
    %p398 = scmp.eq.s32.totalorder %s36, 0
    %p399 = por %p397, %p398
    %s401 = sadd.s32 %s400, 1
    %p404 = scmp.eq.s32.totalorder %s30, 1
    %p405 = scmp.ne.s32.totalorder %s400, %s402
    %p406 = scmp.eq.s32.totalorder %s30, 0
    %p407 = por %p405, %p406
    %p408 = scmp.ne.s32.totalorder %s400, %s402
    %p409 = scmp.eq.s32.totalorder %s35, 1
    %p410 = por %p408, %p409
    %p411 = scmp.ne.s32.totalorder %s402, %s403
    %p412 = scmp.eq.s32.totalorder %s35, 0
    %p413 = por %p411, %p412
    %p414 = scmp.ne.s32.totalorder %s402, %s403
    %p415 = scmp.eq.s32.totalorder %s36, 1
    %p416 = por %p414, %p415
    %p418 = scmp.ne.s32.totalorder %s403, %s417
    %p419 = scmp.eq.s32.totalorder %s36, 0
    %p420 = por %p418, %p419
    %s422 = sadd.s32 %s421, 1
    %p425 = scmp.eq.s32.totalorder %s30, 1
    %p426 = scmp.ne.s32.totalorder %s421, %s423
    %p427 = scmp.eq.s32.totalorder %s30, 0
    %p428 = por %p426, %p427
    %p429 = scmp.ne.s32.totalorder %s421, %s423
    %p430 = scmp.eq.s32.totalorder %s35, 1
    %p431 = por %p429, %p430
    %p432 = scmp.ne.s32.totalorder %s423, %s424
    %p433 = scmp.eq.s32.totalorder %s35, 0
    %p434 = por %p432, %p433
    %p435 = scmp.ne.s32.totalorder %s423, %s424
    %p436 = scmp.eq.s32.totalorder %s36, 1
    %p437 = por %p435, %p436
    %p439 = scmp.ne.s32.totalorder %s424, %s438
    %p440 = scmp.eq.s32.totalorder %s36, 0
    %p441 = por %p439, %p440
    %s443 = sadd.s32 %s442, 1
    %p446 = scmp.eq.s32.totalorder %s30, 1
    %p447 = scmp.ne.s32.totalorder %s442, %s444
    %p448 = scmp.eq.s32.totalorder %s30, 0
    %p449 = por %p447, %p448
    %p450 = scmp.ne.s32.totalorder %s442, %s444
    %p451 = scmp.eq.s32.totalorder %s35, 1
    %p452 = por %p450, %p451
    %p453 = scmp.ne.s32.totalorder %s444, %s445
    %p454 = scmp.eq.s32.totalorder %s35, 0
    %p455 = por %p453, %p454
    %p456 = scmp.ne.s32.totalorder %s444, %s445
    %p457 = scmp.eq.s32.totalorder %s36, 1
    %p458 = por %p456, %p457
    %p460 = scmp.ne.s32.totalorder %s445, %s459
    %p461 = scmp.eq.s32.totalorder %s36, 0
    %p462 = por %p460, %p461
    %s464 = sadd.s32 %s463, 1
    %p467 = scmp.eq.s32.totalorder %s30, 1
    %p468 = scmp.ne.s32.totalorder %s463, %s465
    %p469 = scmp.eq.s32.totalorder %s30, 0
    %p470 = por %p468, %p469
    %p471 = scmp.ne.s32.totalorder %s463, %s465
    %p472 = scmp.eq.s32.totalorder %s35, 1
    %p473 = por %p471, %p472
    %p474 = scmp.ne.s32.totalorder %s465, %s466
    %p475 = scmp.eq.s32.totalorder %s35, 0
    %p476 = por %p474, %p475
    %p477 = scmp.ne.s32.totalorder %s465, %s466
    %p478 = scmp.eq.s32.totalorder %s36, 1
    %p479 = por %p477, %p478
    %p481 = scmp.ne.s32.totalorder %s466, %s480
    %p482 = scmp.eq.s32.totalorder %s36, 0
    %p483 = por %p481, %p482
    %s485 = sadd.s32 %s484, 1
    %p488 = scmp.eq.s32.totalorder %s30, 1
    %p489 = scmp.ne.s32.totalorder %s484, %s486
    %p490 = scmp.eq.s32.totalorder %s30, 0
    %p491 = por %p489, %p490
    %p492 = scmp.ne.s32.totalorder %s484, %s486
    %p493 = scmp.eq.s32.totalorder %s35, 1
    %p494 = por %p492, %p493
    %p495 = scmp.ne.s32.totalorder %s486, %s487
    %p496 = scmp.eq.s32.totalorder %s35, 0
    %p497 = por %p495, %p496
    %p498 = scmp.ne.s32.totalorder %s486, %s487
    %p499 = scmp.eq.s32.totalorder %s36, 1
    %p500 = por %p498, %p499
    %p502 = scmp.ne.s32.totalorder %s487, %s501
    %p503 = scmp.eq.s32.totalorder %s36, 0
    %p504 = por %p502, %p503
    %s506 = sadd.s32 %s505, 1
    %p509 = scmp.eq.s32.totalorder %s30, 1
    %p510 = scmp.ne.s32.totalorder %s505, %s507
    %p511 = scmp.eq.s32.totalorder %s30, 0
    %p512 = por %p510, %p511
    %p513 = scmp.ne.s32.totalorder %s505, %s507
    %p514 = scmp.eq.s32.totalorder %s35, 1
    %p515 = por %p513, %p514
    %p516 = scmp.ne.s32.totalorder %s507, %s508
    %p517 = scmp.eq.s32.totalorder %s35, 0
    %p518 = por %p516, %p517
    %p519 = scmp.ne.s32.totalorder %s507, %s508
    %p520 = scmp.eq.s32.totalorder %s36, 1
    %p521 = por %p519, %p520
    %p523 = scmp.ne.s32.totalorder %s508, %s522
    %p524 = scmp.eq.s32.totalorder %s36, 0
    %p525 = por %p523, %p524
    %s527 = sadd.s32 %s526, 1
    %p530 = scmp.eq.s32.totalorder %s30, 1
    %p531 = scmp.ne.s32.totalorder %s526, %s528
    %p532 = scmp.eq.s32.totalorder %s30, 0
    %p533 = por %p531, %p532
    %p534 = scmp.ne.s32.totalorder %s526, %s528
    %p535 = scmp.eq.s32.totalorder %s35, 1
    %p536 = por %p534, %p535
    %p537 = scmp.ne.s32.totalorder %s528, %s529
    %p538 = scmp.eq.s32.totalorder %s35, 0
    %p539 = por %p537, %p538
    %p540 = scmp.ne.s32.totalorder %s528, %s529
    %p541 = scmp.eq.s32.totalorder %s36, 1
    %p542 = por %p540, %p541
    %p544 = scmp.ne.s32.totalorder %s529, %s543
    %p545 = scmp.eq.s32.totalorder %s36, 0
    %p546 = por %p544, %p545
    %s547 = ssub.s32 %s30, %s37
    %p548 = scmp.eq.s32.totalorder %s547, 0
    %s550 = sadd.s32 %s549, 1
    %s551 = scalar_select %p548, %s549, %s550
    %p554 = pneg %p548
    %p555 = scmp.eq.s32.totalorder %s30, 1
    %p556 = por %p554, %p555
    %p557 = scmp.ne.s32.totalorder %s549, %s552
    %p558 = scmp.eq.s32.totalorder %s30, 0
    %p559 = por %p557, %p558
    %p560 = scmp.ne.s32.totalorder %s549, %s552
    %p561 = scmp.eq.s32.totalorder %s35, 1
    %p562 = por %p560, %p561
    %p563 = scmp.ne.s32.totalorder %s552, %s553
    %p564 = scmp.eq.s32.totalorder %s35, 0
    %p565 = por %p563, %p564
    %p566 = scmp.ne.s32.totalorder %s552, %s553
    %p567 = scmp.eq.s32.totalorder %s36, 1
    %p568 = por %p566, %p567
    %p570 = scmp.ne.s32.totalorder %s553, %s569
    %p571 = scmp.eq.s32.totalorder %s36, 0
    %p572 = por %p570, %p571
    %p573 = scmp.le.s32.totalorder 1, %s30
    %p574 = scmp.lt.s32.totalorder %s30, 3
    %p575 = pnand %p573, %p574
    %p576 = pneg %p575
    // Predicated region
    $region9: #{mslt_forward.1} parent=5 // pred_check
      _
    $region10: #{mslt_forward.1} parent=5 // pred_check_branch
      %578 = sbr.rel (%p575) target = $region12
    $region11: #{mslt_forward.1} parent=5 // pred_region
      %s579 = ssub.s32 %s30, 1
      // Predicated region
      $region13: #{mslt_forward.1} parent=11 // pred_check
        %p580 = pneg %p77
      $region14: #{mslt_forward.1} parent=11 // pred_check_branch
        %582 = sbr.rel (%p580) target = $region16
      $region15: #{mslt_forward.1} parent=11 // pred_region
        _
      $region16: #{mslt_forward.1} parent=11 // pred_fallthru
        _
      // Predicated region
      $region17: #{mslt_forward.1} parent=11 // pred_check
        %p583 = pneg %p98
      $region18: #{mslt_forward.1} parent=11 // pred_check_branch
        %585 = sbr.rel (%p583) target = $region20
      $region19: #{mslt_forward.1} parent=11 // pred_region
        _
      $region20: #{mslt_forward.1} parent=11 // pred_fallthru
        _
      // Predicated region
      $region21: #{mslt_forward.1} parent=11 // pred_check
        %p586 = pneg %p119
      $region22: #{mslt_forward.1} parent=11 // pred_check_branch
        %588 = sbr.rel (%p586) target = $region24
      $region23: #{mslt_forward.1} parent=11 // pred_region
        _
      $region24: #{mslt_forward.1} parent=11 // pred_fallthru
        _
      // Predicated region
      $region25: #{mslt_forward.1} parent=11 // pred_check
        %p589 = pneg %p140
      $region26: #{mslt_forward.1} parent=11 // pred_check_branch
        %591 = sbr.rel (%p589) target = $region28
      $region27: #{mslt_forward.1} parent=11 // pred_region
        _
      $region28: #{mslt_forward.1} parent=11 // pred_fallthru
        _
      // Predicated region
      $region29: #{mslt_forward.1} parent=11 // pred_check
        %p592 = pneg %p161
      $region30: #{mslt_forward.1} parent=11 // pred_check_branch
        %594 = sbr.rel (%p592) target = $region32
      $region31: #{mslt_forward.1} parent=11 // pred_region
        _
      $region32: #{mslt_forward.1} parent=11 // pred_fallthru
        _
      // Predicated region
      $region33: #{mslt_forward.1} parent=11 // pred_check
        %p595 = pneg %p182
      $region34: #{mslt_forward.1} parent=11 // pred_check_branch
        %597 = sbr.rel (%p595) target = $region36
      $region35: #{mslt_forward.1} parent=11 // pred_region
        _
      $region36: #{mslt_forward.1} parent=11 // pred_fallthru
        _
      // Predicated region
      $region37: #{mslt_forward.1} parent=11 // pred_check
        %p598 = pneg %p203
      $region38: #{mslt_forward.1} parent=11 // pred_check_branch
        %600 = sbr.rel (%p598) target = $region40
      $region39: #{mslt_forward.1} parent=11 // pred_region
        _
      $region40: #{mslt_forward.1} parent=11 // pred_fallthru
        _
      // Predicated region
      $region41: #{mslt_forward.1} parent=11 // pred_check
        %p601 = pneg %p224
      $region42: #{mslt_forward.1} parent=11 // pred_check_branch
        %603 = sbr.rel (%p601) target = $region44
      $region43: #{mslt_forward.1} parent=11 // pred_region
        _
      $region44: #{mslt_forward.1} parent=11 // pred_fallthru
        _
      // Predicated region
      $region45: #{mslt_forward.1} parent=11 // pred_check
        %p604 = pneg %p245
      $region46: #{mslt_forward.1} parent=11 // pred_check_branch
        %606 = sbr.rel (%p604) target = $region48
      $region47: #{mslt_forward.1} parent=11 // pred_region
        _
      $region48: #{mslt_forward.1} parent=11 // pred_fallthru
        _
      // Predicated region
      $region49: #{mslt_forward.1} parent=11 // pred_check
        %p607 = pneg %p266
      $region50: #{mslt_forward.1} parent=11 // pred_check_branch
        %609 = sbr.rel (%p607) target = $region52
      $region51: #{mslt_forward.1} parent=11 // pred_region
        _
      $region52: #{mslt_forward.1} parent=11 // pred_fallthru
        _
      // Predicated region
      $region53: #{mslt_forward.1} parent=11 // pred_check
        %p610 = pneg %p287
      $region54: #{mslt_forward.1} parent=11 // pred_check_branch
        %612 = sbr.rel (%p610) target = $region56
      $region55: #{mslt_forward.1} parent=11 // pred_region
        _
      $region56: #{mslt_forward.1} parent=11 // pred_fallthru
        _
      // Predicated region
      $region57: #{mslt_forward.1} parent=11 // pred_check
        %p613 = pneg %p308
      $region58: #{mslt_forward.1} parent=11 // pred_check_branch
        %615 = sbr.rel (%p613) target = $region60
      $region59: #{mslt_forward.1} parent=11 // pred_region
        _
      $region60: #{mslt_forward.1} parent=11 // pred_fallthru
        _
      // Predicated region
      $region61: #{mslt_forward.1} parent=11 // pred_check
        %p616 = pneg %p329
      $region62: #{mslt_forward.1} parent=11 // pred_check_branch
        %618 = sbr.rel (%p616) target = $region64
      $region63: #{mslt_forward.1} parent=11 // pred_region
        _
      $region64: #{mslt_forward.1} parent=11 // pred_fallthru
        _
      // Predicated region
      $region65: #{mslt_forward.1} parent=11 // pred_check
        %p619 = pneg %p350
      $region66: #{mslt_forward.1} parent=11 // pred_check_branch
        %621 = sbr.rel (%p619) target = $region68
      $region67: #{mslt_forward.1} parent=11 // pred_region
        _
      $region68: #{mslt_forward.1} parent=11 // pred_fallthru
        _
      // Predicated region
      $region69: #{mslt_forward.1} parent=11 // pred_check
        %p622 = pneg %p371
      $region70: #{mslt_forward.1} parent=11 // pred_check_branch
        %624 = sbr.rel (%p622) target = $region72
      $region71: #{mslt_forward.1} parent=11 // pred_region
        _
      $region72: #{mslt_forward.1} parent=11 // pred_fallthru
        _
      // Predicated region
      $region73: #{mslt_forward.1} parent=11 // pred_check
        %p625 = pneg %p392
      $region74: #{mslt_forward.1} parent=11 // pred_check_branch
        %627 = sbr.rel (%p625) target = $region76
      $region75: #{mslt_forward.1} parent=11 // pred_region
        _
      $region76: #{mslt_forward.1} parent=11 // pred_fallthru
        _
      // Predicated region
      $region77: #{mslt_forward.1} parent=11 // pred_check
        %p628 = pneg %p413
      $region78: #{mslt_forward.1} parent=11 // pred_check_branch
        %630 = sbr.rel (%p628) target = $region80
      $region79: #{mslt_forward.1} parent=11 // pred_region
        _
      $region80: #{mslt_forward.1} parent=11 // pred_fallthru
        _
      // Predicated region
      $region81: #{mslt_forward.1} parent=11 // pred_check
        %p631 = pneg %p434
      $region82: #{mslt_forward.1} parent=11 // pred_check_branch
        %633 = sbr.rel (%p631) target = $region84
      $region83: #{mslt_forward.1} parent=11 // pred_region
        _
      $region84: #{mslt_forward.1} parent=11 // pred_fallthru
        _
      // Predicated region
      $region85: #{mslt_forward.1} parent=11 // pred_check
        %p634 = pneg %p455
      $region86: #{mslt_forward.1} parent=11 // pred_check_branch
        %636 = sbr.rel (%p634) target = $region88
      $region87: #{mslt_forward.1} parent=11 // pred_region
        _
      $region88: #{mslt_forward.1} parent=11 // pred_fallthru
        _
      // Predicated region
      $region89: #{mslt_forward.1} parent=11 // pred_check
        %p637 = pneg %p476
      $region90: #{mslt_forward.1} parent=11 // pred_check_branch
        %639 = sbr.rel (%p637) target = $region92
      $region91: #{mslt_forward.1} parent=11 // pred_region
        _
      $region92: #{mslt_forward.1} parent=11 // pred_fallthru
        _
      // Predicated region
      $region93: #{mslt_forward.1} parent=11 // pred_check
        %p640 = pneg %p497
      $region94: #{mslt_forward.1} parent=11 // pred_check_branch
        %642 = sbr.rel (%p640) target = $region96
      $region95: #{mslt_forward.1} parent=11 // pred_region
        _
      $region96: #{mslt_forward.1} parent=11 // pred_fallthru
        _
      // Predicated region
      $region97: #{mslt_forward.1} parent=11 // pred_check
        %p643 = pneg %p518
      $region98: #{mslt_forward.1} parent=11 // pred_check_branch
        %645 = sbr.rel (%p643) target = $region100
      $region99: #{mslt_forward.1} parent=11 // pred_region
        _
      $region100: #{mslt_forward.1} parent=11 // pred_fallthru
        _
      // Predicated region
      $region101: #{mslt_forward.1} parent=11 // pred_check
        %p646 = pneg %p539
      $region102: #{mslt_forward.1} parent=11 // pred_check_branch
        %648 = sbr.rel (%p646) target = $region104
      $region103: #{mslt_forward.1} parent=11 // pred_region
        _
      $region104: #{mslt_forward.1} parent=11 // pred_fallthru
        _
    $region12: #{mslt_forward.1} parent=5 // pred_fallthru
      _
    %p649 = scmp.lt.s32.totalorder %s30, 2
    // Predicated region
    $region105: #{mslt_forward.1} parent=5 // pred_check
      %p650 = pneg %p649
    $region106: #{mslt_forward.1} parent=5 // pred_check_branch
      %652 = sbr.rel (%p650) target = $region108
    $region107: #{mslt_forward.1} parent=5 // pred_region
      // Predicated region
      $region109: #{mslt_forward.1} parent=107 // pred_check
        %p653 = pneg %p50
      $region110: #{mslt_forward.1} parent=107 // pred_check_branch
        %655 = sbr.rel (%p653) target = $region112
      $region111: #{mslt_forward.1} parent=107 // pred_region
        %p656 = scmp.lt.s32.totalorder %s30, 1
        %s657 = scalar_select %p656, %s30, 1
        %s658 = smul.addr %s657, 2
        %s659 = smul.addr %s658, 8
        %s660 = scalar_lea.vmem %s0, %s659
      $region112: #{mslt_forward.1} parent=107 // pred_fallthru
        _
    $region108: #{mslt_forward.1} parent=5 // pred_fallthru
      _
    %p661 = scmp.le.s32.totalorder 1, %s30
    %p662 = scmp.lt.s32.totalorder %s30, 3
    %p663 = pnand %p661, %p662
    %p664 = pneg %p663
    // Predicated region
    $region113: #{mslt_forward.1} parent=5 // pred_check
      _
    $region114: #{mslt_forward.1} parent=5 // pred_check_branch
      %666 = sbr.rel (%p663) target = $region116
    $region115: #{mslt_forward.1} parent=5 // pred_region
      %s667 = ssub.s32 %s30, 1
      %p668 = scmp.lt.s32.totalorder %s35, 1
      %s669 = scalar_select %p668, %s35, 1
      %s670 = smul.addr %s669, 2
      %s671 = smul.addr %s670, 8
      %s672 = scalar_lea.vmem %s0, %s671
      %p673 = pneg %p56
      %p674 = pneg %p53
      %p675 = pneg %p77
      %p676 = pneg %p74
      %p677 = pneg %p98
      %p678 = pneg %p95
      %p679 = pneg %p119
      %p680 = pneg %p116
      %p681 = pneg %p140
      %p682 = pneg %p137
      %p683 = pneg %p161
      %p684 = pneg %p158
      %p685 = pneg %p182
      %p686 = pneg %p179
      %p687 = pneg %p203
      %p688 = pneg %p200
      %p689 = pneg %p224
      %p690 = pneg %p221
      %p691 = pneg %p245
      %p692 = pneg %p242
      %p693 = pneg %p266
      %p694 = pneg %p263
      %p695 = pneg %p287
      %p696 = pneg %p284
      %p697 = pneg %p308
      %p698 = pneg %p305
      %p699 = pneg %p329
      %p700 = pneg %p326
      %p701 = pneg %p350
      %p702 = pneg %p347
      %p703 = pneg %p371
      %p704 = pneg %p368
      %p705 = pneg %p392
      %p706 = pneg %p389
      %p707 = pneg %p413
      %p708 = pneg %p410
      %p709 = pneg %p434
      %p710 = pneg %p431
      %p711 = pneg %p455
      %p712 = pneg %p452
      %p713 = pneg %p476
      %p714 = pneg %p473
      %p715 = pneg %p497
      %p716 = pneg %p494
      %p717 = pneg %p518
      %p718 = pneg %p515
      %p719 = pneg %p539
      %p720 = pneg %p536
      %p721 = pneg %p565
      %p722 = pneg %p562
      %p723 = scmp.lt.s32.totalorder %s35, 1
      %s724 = scalar_select %p723, %s35, 1
      %s725 = smul.addr %s724, 2
      %s726 = smul.addr %s725, 8
      %s727 = scalar_lea.vmem %s24, %s726
      %p728 = scmp.lt.s32.totalorder %s35, 1
      %s729 = scalar_select %p728, %s35, 1
      %s730 = smul.addr %s729, 2
      %s731 = smul.addr %s730, 8
      %s732 = scalar_lea.vmem %s0, %s731
      %p733 = scmp.lt.s32.totalorder %s35, 1
      %s734 = scalar_select %p733, %s35, 1
      %s735 = smul.addr %s734, 2
      %s736 = smul.addr %s735, 8
      %s737 = scalar_lea.vmem %s24, %s736
      %v738 = vld [vmem:[%s23] sm:$0xff]
      %v739 = vld [vmem:[%s23 + $0x8] sm:$0x3]
      %v740 = vld [vmem:[%s732] sm:$0xff]
      %v741 = vld [vmem:[%s732 + $0x8] sm:$0xff]
      %v742 = vld [vmem:[%s1] sm:$0xff]
      %v743 = vld [vmem:[%s1 + $0x8] sm:$0xff]
      %v744 = vld [vmem:[%s1 + $0x10] sm:$0xff]
      %v745 = vld [vmem:[%s1 + $0x18] sm:$0xff]
      %v746 = vld [vmem:[%s1 + $0x20] sm:$0xff]
      %v747 = vld [vmem:[%s1 + $0x28] sm:$0xff]
      %vm748 = vcmask 392192
      %v750 = vsel %vm748, %v740, 0
      %v753 = vsel %vm748, %v741, 0
      %755 = vmatprep.subr.mxu0 0.0
      %756 = vmatpush1.msra.mxu0 %v742
      %757 = vmatprep.subr.mxu0 0.0
      %758 = vmatpush1.msra.mxu0 %v743
      %759 = vmatprep.subr.mxu0 0.0
      %760 = vmatpush1.msra.mxu0 %v744
      %761 = vmatprep.subr.mxu0 0.0
      %762 = vmatpush1.msra.mxu0 %v745
      %763 = vmatprep.subr.mxu0 0.0
      %764 = vmatpush1.msra.mxu0 %v746
      %765 = vmatprep.subr.mxu0 0.0
      %766 = vmatpush1.msra.mxu0 %v747
      %767 = vmatprep.subr.mxu0 0.0
      %768 = vmatpush1.msra.mxu0 0.0
      %769 = vmatprep.subr.mxu0 0.0
      %770 = vmatpush1.msra.mxu0 0.0
      %771 = vmatprep.subr.mxu0 0.0
      %772 = vmatpush1.msra.mxu0 0.0
      %773 = vmatprep.subr.mxu0 0.0
      %774 = vmatpush1.msra.mxu0 0.0
      %775 = vmatprep.subr.mxu0 0.0
      %776 = vmatpush1.msra.mxu0 0.0
      %777 = vmatprep.subr.mxu0 0.0
      %778 = vmatpush1.msra.mxu0 0.0
      %779 = vmatprep.subr.mxu0 0.0
      %780 = vmatpush1.msra.mxu0 0.0
      %781 = vmatprep.subr.mxu0 0.0
      %782 = vmatpush1.msra.mxu0 0.0
      %783 = vmatprep.subr.mxu0 0.0
      %784 = vmatpush1.msra.mxu0 0.0
      %785 = vmatprep.subr.mxu0 0.0
      %786 = vmatpush1.msra.mxu0 0.0
      %787 = vmatprep.subr.mxu0 0.0
      %788 = vmatpush1.msra.mxu0 0.0
      %789 = vmatprep.subr.mxu0 0.0
      %790 = vmatpush1.msra.mxu0 0.0
      %791 = vmatprep.subr.mxu0 0.0
      %792 = vmatpush1.msra.mxu0 0.0
      %793 = vmatprep.subr.mxu0 0.0
      %794 = vmatpush1.msra.mxu0 0.0
      %795 = vmatprep.subr.mxu0 0.0
      %796 = vmatpush1.msra.mxu0 0.0
      %797 = vmatprep.subr.mxu0 0.0
      %798 = vmatpush1.msra.mxu0 0.0
      %799 = vmatprep.subr.mxu0 0.0
      %800 = vmatpush1.msra.mxu0 0.0
      %801 = vmatprep.subr.mxu0 0.0
      %802 = vmatpush1.msra.mxu0 0.0
      %803 = vmatprep.subr.mxu0 0.0
      %804 = vmatpush1.msra.mxu0 0.0
      %805 = vmatprep.subr.mxu0 0.0
      %806 = vmatpush1.msra.mxu0 0.0
      %807 = vmatprep.subr.mxu0 0.0
      %808 = vmatpush1.msra.mxu0 0.0
      %809 = vmatprep.subr.mxu0 0.0
      %810 = vmatpush1.msra.mxu0 0.0
      %811 = vmatprep.subr.mxu0 0.0
      %812 = vmatpush1.msra.mxu0 0.0
      %813 = vmatprep.subr.mxu0 0.0
      %814 = vmatpush1.msra.mxu0 0.0
      %815 = vmatprep.subr.mxu0 0.0
      %816 = vmatpush1.msra.mxu0 0.0
      %817 = vmatprep.subr.mxu0 0.0
      %818 = vmatpush1.msra.mxu0 0.0
      %819 = vmatprep.mubr.f32.mxu0 0.0
      %820 = vmatmul.mubr.f32.gmra.mrb[0].mxu0 %v750
      %v821 = vpop.f32.mrb[0].mxu0
      %v822 = vadd.f32 0.0, %v821
      %v823 = vpop.f32.mrb[0].mxu0
      %824 = vmatprep.mubr.f32.mxu0 0.0
      %825 = vmatmul.mubr.f32.gmra.mrb[0].mxu0 %v753
      %v826 = vpop.f32.mrb[0].mxu0
      %v827 = vadd.f32 0.0, %v826
      %v828 = vpop.f32.mrb[0].mxu0
      %829 = vdwg.mxu0
      %v830 = vld [vmem:[%s2] sm:$0xff]
      %s831 = scalar_lea.vmem %s1, 48
      %v832 = vld [vmem:[%s831] sm:$0xff]
      %v833 = vld [vmem:[%s831 + $0x8] sm:$0xff]
      %v834 = vld [vmem:[%s831 + $0x10] sm:$0xff]
      %v835 = vld [vmem:[%s831 + $0x18] sm:$0xff]
      %v836 = vld [vmem:[%s831 + $0x20] sm:$0xff]
      %v837 = vld [vmem:[%s831 + $0x28] sm:$0xff]
      %838 = vmatprep.subr.mxu0 0.0
      %839 = vmatpush1.msra.mxu0 %v832
      %840 = vmatprep.subr.mxu0 0.0
      %841 = vmatpush1.msra.mxu0 %v833
      %842 = vmatprep.subr.mxu0 0.0
      %843 = vmatpush1.msra.mxu0 %v834
      %844 = vmatprep.subr.mxu0 0.0
      %845 = vmatpush1.msra.mxu0 %v835
      %846 = vmatprep.subr.mxu0 0.0
      %847 = vmatpush1.msra.mxu0 %v836
      %848 = vmatprep.subr.mxu0 0.0
      %849 = vmatpush1.msra.mxu0 %v837
      %850 = vmatprep.subr.mxu0 0.0
      %851 = vmatpush1.msra.mxu0 0.0
      %852 = vmatprep.subr.mxu0 0.0
      %853 = vmatpush1.msra.mxu0 0.0
      %854 = vmatprep.subr.mxu0 0.0
      %855 = vmatpush1.msra.mxu0 0.0
      %856 = vmatprep.subr.mxu0 0.0
      %857 = vmatpush1.msra.mxu0 0.0
      %858 = vmatprep.subr.mxu0 0.0
      %859 = vmatpush1.msra.mxu0 0.0
      %860 = vmatprep.subr.mxu0 0.0
      %861 = vmatpush1.msra.mxu0 0.0
      %862 = vmatprep.subr.mxu0 0.0
      %863 = vmatpush1.msra.mxu0 0.0
      %864 = vmatprep.subr.mxu0 0.0
      %865 = vmatpush1.msra.mxu0 0.0
      %866 = vmatprep.subr.mxu0 0.0
      %867 = vmatpush1.msra.mxu0 0.0
      %868 = vmatprep.subr.mxu0 0.0
      %869 = vmatpush1.msra.mxu0 0.0
      %870 = vmatprep.subr.mxu0 0.0
      %871 = vmatpush1.msra.mxu0 0.0
      %872 = vmatprep.subr.mxu0 0.0
      %873 = vmatpush1.msra.mxu0 0.0
      %874 = vmatprep.subr.mxu0 0.0
      %875 = vmatpush1.msra.mxu0 0.0
      %876 = vmatprep.subr.mxu0 0.0
      %877 = vmatpush1.msra.mxu0 0.0
      %878 = vmatprep.subr.mxu0 0.0
      %879 = vmatpush1.msra.mxu0 0.0
      %880 = vmatprep.subr.mxu0 0.0
      %881 = vmatpush1.msra.mxu0 0.0
      %882 = vmatprep.subr.mxu0 0.0
      %883 = vmatpush1.msra.mxu0 0.0
      %884 = vmatprep.subr.mxu0 0.0
      %885 = vmatpush1.msra.mxu0 0.0
      %886 = vmatprep.subr.mxu0 0.0
      %887 = vmatpush1.msra.mxu0 0.0
      %888 = vmatprep.subr.mxu0 0.0
      %889 = vmatpush1.msra.mxu0 0.0
      %890 = vmatprep.subr.mxu0 0.0
      %891 = vmatpush1.msra.mxu0 0.0
      %892 = vmatprep.subr.mxu0 0.0
      %893 = vmatpush1.msra.mxu0 0.0
      %894 = vmatprep.subr.mxu0 0.0
      %895 = vmatpush1.msra.mxu0 0.0
      %896 = vmatprep.subr.mxu0 0.0
      %897 = vmatpush1.msra.mxu0 0.0
      %898 = vmatprep.subr.mxu0 0.0
      %899 = vmatpush1.msra.mxu0 0.0
      %900 = vmatprep.subr.mxu0 0.0
      %901 = vmatpush1.msra.mxu0 0.0
      %902 = vmatprep.mubr.f32.mxu0 0.0
      %903 = vmatmul.mubr.f32.gmra.mrb[0].mxu0 %v750
      %v904 = vpop.f32.mrb[0].mxu0
      %v905 = vadd.f32 0.0, %v904
      %v906 = vpop.f32.mrb[0].mxu0
      %907 = vmatprep.mubr.f32.mxu0 0.0
      %908 = vmatmul.mubr.f32.gmra.mrb[0].mxu0 %v753
      %v909 = vpop.f32.mrb[0].mxu0
      %v910 = vadd.f32 0.0, %v909
      %v911 = vpop.f32.mrb[0].mxu0
      %912 = vdwg.mxu0
      %s913 = scalar_lea.vmem %s2, 8
      %v914 = vld [vmem:[%s913] sm:$0xff]
      %vm915 = vcmask 130048
      %v917 = vsel %vm915, %v914, 0
      %919 = vmatprep.subr.mxu0 0.0
      %920 = vmatpush1.msra.mxu0 %v905
      %921 = vmatprep.subr.mxu0 0.0
      %922 = vmatpush1.msra.mxu0 %v910
      %923 = vmatprep.subr.mxu0 0.0
      %924 = vmatpush1.msra.mxu0 0.0
      %925 = vmatprep.subr.mxu0 0.0
      %926 = vmatpush1.msra.mxu0 0.0
      %927 = vmatprep.subr.mxu0 0.0
      %928 = vmatpush1.msra.mxu0 0.0
      %929 = vmatprep.subr.mxu0 0.0
      %930 = vmatpush1.msra.mxu0 0.0
      %931 = vmatprep.subr.mxu0 0.0
      %932 = vmatpush1.msra.mxu0 0.0
      %933 = vmatprep.subr.mxu0 0.0
      %934 = vmatpush1.msra.mxu0 0.0
      %935 = vmatprep.subr.mxu0 0.0
      %936 = vmatpush1.msra.mxu0 0.0
      %937 = vmatprep.subr.mxu0 0.0
      %938 = vmatpush1.msra.mxu0 0.0
      %939 = vmatprep.subr.mxu0 0.0
      %940 = vmatpush1.msra.mxu0 0.0
      %941 = vmatprep.subr.mxu0 0.0
      %942 = vmatpush1.msra.mxu0 0.0
      %943 = vmatprep.subr.mxu0 0.0
      %944 = vmatpush1.msra.mxu0 0.0
      %945 = vmatprep.subr.mxu0 0.0
      %946 = vmatpush1.msra.mxu0 0.0
      %947 = vmatprep.subr.mxu0 0.0
      %948 = vmatpush1.msra.mxu0 0.0
      %949 = vmatprep.subr.mxu0 0.0
      %950 = vmatpush1.msra.mxu0 0.0
      %951 = vmatprep.subr.mxu0 0.0
      %952 = vmatpush1.msra.mxu0 0.0
      %953 = vmatprep.subr.mxu0 0.0
      %954 = vmatpush1.msra.mxu0 0.0
      %955 = vmatprep.subr.mxu0 0.0
      %956 = vmatpush1.msra.mxu0 0.0
      %957 = vmatprep.subr.mxu0 0.0
      %958 = vmatpush1.msra.mxu0 0.0
      %959 = vmatprep.subr.mxu0 0.0
      %960 = vmatpush1.msra.mxu0 0.0
      %961 = vmatprep.subr.mxu0 0.0
      %962 = vmatpush1.msra.mxu0 0.0
      %963 = vmatprep.subr.mxu0 0.0
      %964 = vmatpush1.msra.mxu0 0.0
      %965 = vmatprep.subr.mxu0 0.0
      %966 = vmatpush1.msra.mxu0 0.0
      %967 = vmatprep.subr.mxu0 0.0
      %968 = vmatpush1.msra.mxu0 0.0
      %969 = vmatprep.subr.mxu0 0.0
      %970 = vmatpush1.msra.mxu0 0.0
      %971 = vmatprep.subr.mxu0 0.0
      %972 = vmatpush1.msra.mxu0 0.0
      %973 = vmatprep.subr.mxu0 0.0
      %974 = vmatpush1.msra.mxu0 0.0
      %975 = vmatprep.subr.mxu0 0.0
      %976 = vmatpush1.msra.mxu0 0.0
      %977 = vmatprep.subr.mxu0 0.0
      %978 = vmatpush1.msra.mxu0 0.0
      %979 = vmatprep.subr.mxu0 0.0
      %980 = vmatpush1.msra.mxu0 0.0
      %981 = vmatprep.subr.mxu0 0.0
      %982 = vmatpush1.msra.mxu0 0.0
      %983 = vmatprep.mubr.f32.mxu0 0.0
      %984 = vmatmul.mubr.f32.gmra.mrb[0].mxu0 %v917
      %v985 = vpop.f32.mrb[0].mxu0
      %v986 = vadd.f32 0.0, %v985
      %v987 = vpop.f32.mrb[0].mxu0
      %988 = vdwg.mxu0
      %v990 = vsel %vm915, %v830, 0
      %992 = vmatprep.subr.mxu0 0.0
      %993 = vmatpush1.msra.mxu0 %v822
      %994 = vmatprep.subr.mxu0 0.0
      %995 = vmatpush1.msra.mxu0 %v827
      %996 = vmatprep.subr.mxu0 0.0
      %997 = vmatpush1.msra.mxu0 0.0
      %998 = vmatprep.subr.mxu0 0.0
      %999 = vmatpush1.msra.mxu0 0.0
      %1000 = vmatprep.subr.mxu0 0.0
      %1001 = vmatpush1.msra.mxu0 0.0
      %1002 = vmatprep.subr.mxu0 0.0
      %1003 = vmatpush1.msra.mxu0 0.0
      %1004 = vmatprep.subr.mxu0 0.0
      %1005 = vmatpush1.msra.mxu0 0.0
      %1006 = vmatprep.subr.mxu0 0.0
      %1007 = vmatpush1.msra.mxu0 0.0
      %1008 = vmatprep.subr.mxu0 0.0
      %1009 = vmatpush1.msra.mxu0 0.0
      %1010 = vmatprep.subr.mxu0 0.0
      %1011 = vmatpush1.msra.mxu0 0.0
      %1012 = vmatprep.subr.mxu0 0.0
      %1013 = vmatpush1.msra.mxu0 0.0
      %1014 = vmatprep.subr.mxu0 0.0
      %1015 = vmatpush1.msra.mxu0 0.0
      %1016 = vmatprep.subr.mxu0 0.0
      %1017 = vmatpush1.msra.mxu0 0.0
      %1018 = vmatprep.subr.mxu0 0.0
      %1019 = vmatpush1.msra.mxu0 0.0
      %1020 = vmatprep.subr.mxu0 0.0
      %1021 = vmatpush1.msra.mxu0 0.0
      %1022 = vmatprep.subr.mxu0 0.0
      %1023 = vmatpush1.msra.mxu0 0.0
      %1024 = vmatprep.subr.mxu0 0.0
      %1025 = vmatpush1.msra.mxu0 0.0
      %1026 = vmatprep.subr.mxu0 0.0
      %1027 = vmatpush1.msra.mxu0 0.0
      %1028 = vmatprep.subr.mxu0 0.0
      %1029 = vmatpush1.msra.mxu0 0.0
      %1030 = vmatprep.subr.mxu0 0.0
      %1031 = vmatpush1.msra.mxu0 0.0
      %1032 = vmatprep.subr.mxu0 0.0
      %1033 = vmatpush1.msra.mxu0 0.0
      %1034 = vmatprep.subr.mxu0 0.0
      %1035 = vmatpush1.msra.mxu0 0.0
      %1036 = vmatprep.subr.mxu0 0.0
      %1037 = vmatpush1.msra.mxu0 0.0
      %1038 = vmatprep.subr.mxu0 0.0
      %1039 = vmatpush1.msra.mxu0 0.0
      %1040 = vmatprep.subr.mxu0 0.0
      %1041 = vmatpush1.msra.mxu0 0.0
      %1042 = vmatprep.subr.mxu0 0.0
      %1043 = vmatpush1.msra.mxu0 0.0
      %1044 = vmatprep.subr.mxu0 0.0
      %1045 = vmatpush1.msra.mxu0 0.0
      %1046 = vmatprep.subr.mxu0 0.0
      %1047 = vmatpush1.msra.mxu0 0.0
      %1048 = vmatprep.subr.mxu0 0.0
      %1049 = vmatpush1.msra.mxu0 0.0
      %1050 = vmatprep.subr.mxu0 0.0
      %1051 = vmatpush1.msra.mxu0 0.0
      %1052 = vmatprep.subr.mxu0 0.0
      %1053 = vmatpush1.msra.mxu0 0.0
      %1054 = vmatprep.subr.mxu0 0.0
      %1055 = vmatpush1.msra.mxu0 0.0
      %1056 = vmatprep.mubr.f32.mxu0 0.0
      %1057 = vmatmul.mubr.f32.gmra.mrb[0].mxu0 %v990
      %v1058 = vpop.f32.mrb[0].mxu0
      %v1059 = vadd.f32 %v986, %v1058
      %v1060 = vpop.f32.mrb[0].mxu0
      %1061 = vdwg.mxu0
      %s1062 = scalar_lea.vmem %s1, 96
      %v1063 = vld [vmem:[%s1062] sm:$0xff]
      %v1064 = vld [vmem:[%s1062 + $0x8] sm:$0xff]
      %v1065 = vld [vmem:[%s1062 + $0x10] sm:$0xff]
      %v1066 = vld [vmem:[%s1062 + $0x18] sm:$0xff]
      %v1067 = vld [vmem:[%s1062 + $0x20] sm:$0xff]
      %v1068 = vld [vmem:[%s1062 + $0x28] sm:$0xff]
      %1069 = vmatprep.subr.mxu0 0.0
      %1070 = vmatpush1.msra.mxu0 %v1063
      %1071 = vmatprep.subr.mxu0 0.0
      %1072 = vmatpush1.msra.mxu0 %v1064
      %1073 = vmatprep.subr.mxu0 0.0
      %1074 = vmatpush1.msra.mxu0 %v1065
      %1075 = vmatprep.subr.mxu0 0.0
      %1076 = vmatpush1.msra.mxu0 %v1066
      %1077 = vmatprep.subr.mxu0 0.0
      %1078 = vmatpush1.msra.mxu0 %v1067
      %1079 = vmatprep.subr.mxu0 0.0
      %1080 = vmatpush1.msra.mxu0 %v1068
      %1081 = vmatprep.subr.mxu0 0.0
      %1082 = vmatpush1.msra.mxu0 0.0
      %1083 = vmatprep.subr.mxu0 0.0
      %1084 = vmatpush1.msra.mxu0 0.0
      %1085 = vmatprep.subr.mxu0 0.0
      %1086 = vmatpush1.msra.mxu0 0.0
      %1087 = vmatprep.subr.mxu0 0.0
      %1088 = vmatpush1.msra.mxu0 0.0
      %1089 = vmatprep.subr.mxu0 0.0
      %1090 = vmatpush1.msra.mxu0 0.0
      %1091 = vmatprep.subr.mxu0 0.0
      %1092 = vmatpush1.msra.mxu0 0.0
      %1093 = vmatprep.subr.mxu0 0.0
      %1094 = vmatpush1.msra.mxu0 0.0
      %1095 = vmatprep.subr.mxu0 0.0
      %1096 = vmatpush1.msra.mxu0 0.0
      %1097 = vmatprep.subr.mxu0 0.0
      %1098 = vmatpush1.msra.mxu0 0.0
      %1099 = vmatprep.subr.mxu0 0.0
      %1100 = vmatpush1.msra.mxu0 0.0
      %1101 = vmatprep.subr.mxu0 0.0
      %1102 = vmatpush1.msra.mxu0 0.0
      %1103 = vmatprep.subr.mxu0 0.0
      %1104 = vmatpush1.msra.mxu0 0.0
      %1105 = vmatprep.subr.mxu0 0.0
      %1106 = vmatpush1.msra.mxu0 0.0
      %1107 = vmatprep.subr.mxu0 0.0
      %1108 = vmatpush1.msra.mxu0 0.0
      %1109 = vmatprep.subr.mxu0 0.0
      %1110 = vmatpush1.msra.mxu0 0.0
      %1111 = vmatprep.subr.mxu0 0.0
      %1112 = vmatpush1.msra.mxu0 0.0
      %1113 = vmatprep.subr.mxu0 0.0
      %1114 = vmatpush1.msra.mxu0 0.0
      %1115 = vmatprep.subr.mxu0 0.0
      %1116 = vmatpush1.msra.mxu0 0.0
      %1117 = vmatprep.subr.mxu0 0.0
      %1118 = vmatpush1.msra.mxu0 0.0
      %1119 = vmatprep.subr.mxu0 0.0
      %1120 = vmatpush1.msra.mxu0 0.0
      %1121 = vmatprep.subr.mxu0 0.0
      %1122 = vmatpush1.msra.mxu0 0.0
      %1123 = vmatprep.subr.mxu0 0.0
      %1124 = vmatpush1.msra.mxu0 0.0
      %1125 = vmatprep.subr.mxu0 0.0
      %1126 = vmatpush1.msra.mxu0 0.0
      %1127 = vmatprep.subr.mxu0 0.0
      %1128 = vmatpush1.msra.mxu0 0.0
      %1129 = vmatprep.subr.mxu0 0.0
      %1130 = vmatpush1.msra.mxu0 0.0
      %1131 = vmatprep.subr.mxu0 0.0
      %1132 = vmatpush1.msra.mxu0 0.0
      %1133 = vmatprep.mubr.f32.mxu0 0.0
      %1134 = vmatmul.mubr.f32.gmra.mrb[0].mxu0 %v750
      %v1135 = vpop.f32.mrb[0].mxu0
      %v1136 = vadd.f32 0.0, %v1135
      %v1137 = vpop.f32.mrb[0].mxu0
      %1138 = vmatprep.mubr.f32.mxu0 0.0
      %1139 = vmatmul.mubr.f32.gmra.mrb[0].mxu0 %v753
      %v1140 = vpop.f32.mrb[0].mxu0
      %v1141 = vadd.f32 0.0, %v1140
      %v1142 = vpop.f32.mrb[0].mxu0
      %1143 = vdwg.mxu0
      %s1144 = scalar_lea.vmem %s2, 16
      %v1145 = vld [vmem:[%s1144] sm:$0xff]
      %v1147 = vsel %vm915, %v1145, 0
      %1149 = vmatprep.subr.mxu0 0.0
      %1150 = vmatpush1.msra.mxu0 %v1136
      %1151 = vmatprep.subr.mxu0 0.0
      %1152 = vmatpush1.msra.mxu0 %v1141
      %1153 = vmatprep.subr.mxu0 0.0
      %1154 = vmatpush1.msra.mxu0 0.0
      %1155 = vmatprep.subr.mxu0 0.0
      %1156 = vmatpush1.msra.mxu0 0.0
      %1157 = vmatprep.subr.mxu0 0.0
      %1158 = vmatpush1.msra.mxu0 0.0
      %1159 = vmatprep.subr.mxu0 0.0
      %1160 = vmatpush1.msra.mxu0 0.0
      %1161 = vmatprep.subr.mxu0 0.0
      %1162 = vmatpush1.msra.mxu0 0.0
      %1163 = vmatprep.subr.mxu0 0.0
      %1164 = vmatpush1.msra.mxu0 0.0
      %1165 = vmatprep.subr.mxu0 0.0
      %1166 = vmatpush1.msra.mxu0 0.0
      %1167 = vmatprep.subr.mxu0 0.0
      %1168 = vmatpush1.msra.mxu0 0.0
      %1169 = vmatprep.subr.mxu0 0.0
      %1170 = vmatpush1.msra.mxu0 0.0
      %1171 = vmatprep.subr.mxu0 0.0
      %1172 = vmatpush1.msra.mxu0 0.0
      %1173 = vmatprep.subr.mxu0 0.0
      %1174 = vmatpush1.msra.mxu0 0.0
      %1175 = vmatprep.subr.mxu0 0.0
      %1176 = vmatpush1.msra.mxu0 0.0
      %1177 = vmatprep.subr.mxu0 0.0
      %1178 = vmatpush1.msra.mxu0 0.0
      %1179 = vmatprep.subr.mxu0 0.0
      %1180 = vmatpush1.msra.mxu0 0.0
      %1181 = vmatprep.subr.mxu0 0.0
      %1182 = vmatpush1.msra.mxu0 0.0
      %1183 = vmatprep.subr.mxu0 0.0
      %1184 = vmatpush1.msra.mxu0 0.0
      %1185 = vmatprep.subr.mxu0 0.0
      %1186 = vmatpush1.msra.mxu0 0.0
      %1187 = vmatprep.subr.mxu0 0.0
      %1188 = vmatpush1.msra.mxu0 0.0
      %1189 = vmatprep.subr.mxu0 0.0
      %1190 = vmatpush1.msra.mxu0 0.0
      %1191 = vmatprep.subr.mxu0 0.0
      %1192 = vmatpush1.msra.mxu0 0.0
      %1193 = vmatprep.subr.mxu0 0.0
      %1194 = vmatpush1.msra.mxu0 0.0
      %1195 = vmatprep.subr.mxu0 0.0
      %1196 = vmatpush1.msra.mxu0 0.0
      %1197 = vmatprep.subr.mxu0 0.0
      %1198 = vmatpush1.msra.mxu0 0.0
      %1199 = vmatprep.subr.mxu0 0.0
      %1200 = vmatpush1.msra.mxu0 0.0
      %1201 = vmatprep.subr.mxu0 0.0
      %1202 = vmatpush1.msra.mxu0 0.0
      %1203 = vmatprep.subr.mxu0 0.0
      %1204 = vmatpush1.msra.mxu0 0.0
      %1205 = vmatprep.subr.mxu0 0.0
      %1206 = vmatpush1.msra.mxu0 0.0
      %1207 = vmatprep.subr.mxu0 0.0
      %1208 = vmatpush1.msra.mxu0 0.0
      %1209 = vmatprep.subr.mxu0 0.0
      %1210 = vmatpush1.msra.mxu0 0.0
      %1211 = vmatprep.subr.mxu0 0.0
      %1212 = vmatpush1.msra.mxu0 0.0
      %1213 = vmatprep.mubr.f32.mxu0 0.0
      %1214 = vmatmul.mubr.f32.gmra.mrb[0].mxu0 %v1147
      %v1215 = vpop.f32.mrb[0].mxu0
      %v1216 = vadd.f32 0.0, %v1215
      %v1217 = vpop.f32.mrb[0].mxu0
      %1218 = vdwg.mxu0
      %v1219 = vadd.f32 %v1059, %v1216
      %v1220 = vlaneseq
      %v1221 = vshrl.u32 %v1220, 7
      %v1222 = vsub.s32 0, %v1221
      %v1223 = vrot.slane %v738, %v1222
      %v1224 = vadd.f32 %v1219, %v1223
      %v1225 = vld [vmem:[%s3] sm:$0xff]
      %v1226 = vld [vmem:[%s3 + $0x8] sm:$0xff]
      %v1227 = vld [vmem:[%s3 + $0x10] sm:$0xff]
      %vm1228 = vcmask 195584
      %v1230 = vsel %vm1228, %v1224, 0
      %1232 = vmatprep.subr.mxu0 0.0
      %1233 = vmatpush1.msra.mxu0 %v1225
      %1234 = vmatprep.subr.mxu0 0.0
      %1235 = vmatpush1.msra.mxu0 %v1226
      %1236 = vmatprep.subr.mxu0 0.0
      %1237 = vmatpush1.msra.mxu0 %v1227
      %1238 = vmatprep.subr.mxu0 0.0
      %1239 = vmatpush1.msra.mxu0 0.0
      %1240 = vmatprep.subr.mxu0 0.0
      %1241 = vmatpush1.msra.mxu0 0.0
      %1242 = vmatprep.subr.mxu0 0.0
      %1243 = vmatpush1.msra.mxu0 0.0
      %1244 = vmatprep.subr.mxu0 0.0
      %1245 = vmatpush1.msra.mxu0 0.0
      %1246 = vmatprep.subr.mxu0 0.0
      %1247 = vmatpush1.msra.mxu0 0.0
      %1248 = vmatprep.subr.mxu0 0.0
      %1249 = vmatpush1.msra.mxu0 0.0
      %1250 = vmatprep.subr.mxu0 0.0
      %1251 = vmatpush1.msra.mxu0 0.0
      %1252 = vmatprep.subr.mxu0 0.0
      %1253 = vmatpush1.msra.mxu0 0.0
      %1254 = vmatprep.subr.mxu0 0.0
      %1255 = vmatpush1.msra.mxu0 0.0
      %1256 = vmatprep.subr.mxu0 0.0
      %1257 = vmatpush1.msra.mxu0 0.0
      %1258 = vmatprep.subr.mxu0 0.0
      %1259 = vmatpush1.msra.mxu0 0.0
      %1260 = vmatprep.subr.mxu0 0.0
      %1261 = vmatpush1.msra.mxu0 0.0
      %1262 = vmatprep.subr.mxu0 0.0
      %1263 = vmatpush1.msra.mxu0 0.0
      %1264 = vmatprep.subr.mxu0 0.0
      %1265 = vmatpush1.msra.mxu0 0.0
      %1266 = vmatprep.subr.mxu0 0.0
      %1267 = vmatpush1.msra.mxu0 0.0
      %1268 = vmatprep.subr.mxu0 0.0
      %1269 = vmatpush1.msra.mxu0 0.0
      %1270 = vmatprep.subr.mxu0 0.0
      %1271 = vmatpush1.msra.mxu0 0.0
      %1272 = vmatprep.subr.mxu0 0.0
      %1273 = vmatpush1.msra.mxu0 0.0
      %1274 = vmatprep.subr.mxu0 0.0
      %1275 = vmatpush1.msra.mxu0 0.0
      %1276 = vmatprep.subr.mxu0 0.0
      %1277 = vmatpush1.msra.mxu0 0.0
      %1278 = vmatprep.subr.mxu0 0.0
      %1279 = vmatpush1.msra.mxu0 0.0
      %1280 = vmatprep.subr.mxu0 0.0
      %1281 = vmatpush1.msra.mxu0 0.0
      %1282 = vmatprep.subr.mxu0 0.0
      %1283 = vmatpush1.msra.mxu0 0.0
      %1284 = vmatprep.subr.mxu0 0.0
      %1285 = vmatpush1.msra.mxu0 0.0
      %1286 = vmatprep.subr.mxu0 0.0
      %1287 = vmatpush1.msra.mxu0 0.0
      %1288 = vmatprep.subr.mxu0 0.0
      %1289 = vmatpush1.msra.mxu0 0.0
      %1290 = vmatprep.subr.mxu0 0.0
      %1291 = vmatpush1.msra.mxu0 0.0
      %1292 = vmatprep.subr.mxu0 0.0
      %1293 = vmatpush1.msra.mxu0 0.0
      %1294 = vmatprep.subr.mxu0 0.0
      %1295 = vmatpush1.msra.mxu0 0.0
      %1296 = vmatprep.mubr.f32.mxu0 0.0
      %1297 = vmatmul.mubr.f32.gmra.mrb[0].mxu0 %v1230
      %v1298 = vpop.f32.mrb[0].mxu0
      %v1299 = vadd.f32 0.0, %v1298
      %v1300 = vpop.f32.mrb[0].mxu0
      %1301 = vdwg.mxu0
      %v1302 = vld [vmem:[%s4] sm:$0xf]
      %s1303 = scalar_lea.vmem %s3, 24
      %v1304 = vld [vmem:[%s1303] sm:$0xff]
      %v1305 = vld [vmem:[%s1303 + $0x8] sm:$0xff]
      %v1306 = vld [vmem:[%s1303 + $0x10] sm:$0xff]
      %1307 = vmatprep.subr.mxu0 0.0
      %1308 = vmatpush1.msra.mxu0 %v1304
      %1309 = vmatprep.subr.mxu0 0.0
      %1310 = vmatpush1.msra.mxu0 %v1305
      %1311 = vmatprep.subr.mxu0 0.0
      %1312 = vmatpush1.msra.mxu0 %v1306
      %1313 = vmatprep.subr.mxu0 0.0
      %1314 = vmatpush1.msra.mxu0 0.0
      %1315 = vmatprep.subr.mxu0 0.0
      %1316 = vmatpush1.msra.mxu0 0.0
      %1317 = vmatprep.subr.mxu0 0.0
      %1318 = vmatpush1.msra.mxu0 0.0
      %1319 = vmatprep.subr.mxu0 0.0
      %1320 = vmatpush1.msra.mxu0 0.0
      %1321 = vmatprep.subr.mxu0 0.0
      %1322 = vmatpush1.msra.mxu0 0.0
      %1323 = vmatprep.subr.mxu0 0.0
      %1324 = vmatpush1.msra.mxu0 0.0
      %1325 = vmatprep.subr.mxu0 0.0
      %1326 = vmatpush1.msra.mxu0 0.0
      %1327 = vmatprep.subr.mxu0 0.0
      %1328 = vmatpush1.msra.mxu0 0.0
      %1329 = vmatprep.subr.mxu0 0.0
      %1330 = vmatpush1.msra.mxu0 0.0
      %1331 = vmatprep.subr.mxu0 0.0
      %1332 = vmatpush1.msra.mxu0 0.0
      %1333 = vmatprep.subr.mxu0 0.0
      %1334 = vmatpush1.msra.mxu0 0.0
      %1335 = vmatprep.subr.mxu0 0.0
      %1336 = vmatpush1.msra.mxu0 0.0
      %1337 = vmatprep.subr.mxu0 0.0
      %1338 = vmatpush1.msra.mxu0 0.0
      %1339 = vmatprep.subr.mxu0 0.0
      %1340 = vmatpush1.msra.mxu0 0.0
      %1341 = vmatprep.subr.mxu0 0.0
      %1342 = vmatpush1.msra.mxu0 0.0
      %1343 = vmatprep.subr.mxu0 0.0
      %1344 = vmatpush1.msra.mxu0 0.0
      %1345 = vmatprep.subr.mxu0 0.0
      %1346 = vmatpush1.msra.mxu0 0.0
      %1347 = vmatprep.subr.mxu0 0.0
      %1348 = vmatpush1.msra.mxu0 0.0
      %1349 = vmatprep.subr.mxu0 0.0
      %1350 = vmatpush1.msra.mxu0 0.0
      %1351 = vmatprep.subr.mxu0 0.0
      %1352 = vmatpush1.msra.mxu0 0.0
      %1353 = vmatprep.subr.mxu0 0.0
      %1354 = vmatpush1.msra.mxu0 0.0
      %1355 = vmatprep.subr.mxu0 0.0
      %1356 = vmatpush1.msra.mxu0 0.0
      %1357 = vmatprep.subr.mxu0 0.0
      %1358 = vmatpush1.msra.mxu0 0.0
      %1359 = vmatprep.subr.mxu0 0.0
      %1360 = vmatpush1.msra.mxu0 0.0
      %1361 = vmatprep.subr.mxu0 0.0
      %1362 = vmatpush1.msra.mxu0 0.0
      %1363 = vmatprep.subr.mxu0 0.0
      %1364 = vmatpush1.msra.mxu0 0.0
      %1365 = vmatprep.subr.mxu0 0.0
      %1366 = vmatpush1.msra.mxu0 0.0
      %1367 = vmatprep.subr.mxu0 0.0
      %1368 = vmatpush1.msra.mxu0 0.0
      %1369 = vmatprep.subr.mxu0 0.0
      %1370 = vmatpush1.msra.mxu0 0.0
      %1371 = vmatprep.mubr.f32.mxu0 0.0
      %1372 = vmatmul.mubr.f32.gmra.mrb[0].mxu0 %v1230
      %v1373 = vpop.f32.mrb[0].mxu0
      %v1374 = vadd.f32 0.0, %v1373
      %v1375 = vpop.f32.mrb[0].mxu0
      %1376 = vdwg.mxu0
      %s1377 = scalar_lea.vmem %s4, 4
      %v1378 = vld [vmem:[%s1377] sm:$0xf]
      %vm1379 = vcmask 64512
      %v1381 = vsel %vm1379, %v1378, 0
      %1383 = vmatprep.subr.mxu0 0.0
      %1384 = vmatpush1.msra.mxu0 %v1374
      %1385 = vmatprep.subr.mxu0 0.0
      %1386 = vmatpush1.msra.mxu0 0.0
      %1387 = vmatprep.subr.mxu0 0.0
      %1388 = vmatpush1.msra.mxu0 0.0
      %1389 = vmatprep.subr.mxu0 0.0
      %1390 = vmatpush1.msra.mxu0 0.0
      %1391 = vmatprep.subr.mxu0 0.0
      %1392 = vmatpush1.msra.mxu0 0.0
      %1393 = vmatprep.subr.mxu0 0.0
      %1394 = vmatpush1.msra.mxu0 0.0
      %1395 = vmatprep.subr.mxu0 0.0
      %1396 = vmatpush1.msra.mxu0 0.0
      %1397 = vmatprep.subr.mxu0 0.0
      %1398 = vmatpush1.msra.mxu0 0.0
      %1399 = vmatprep.subr.mxu0 0.0
      %1400 = vmatpush1.msra.mxu0 0.0
      %1401 = vmatprep.subr.mxu0 0.0
      %1402 = vmatpush1.msra.mxu0 0.0
      %1403 = vmatprep.subr.mxu0 0.0
      %1404 = vmatpush1.msra.mxu0 0.0
      %1405 = vmatprep.subr.mxu0 0.0
      %1406 = vmatpush1.msra.mxu0 0.0
      %1407 = vmatprep.subr.mxu0 0.0
      %1408 = vmatpush1.msra.mxu0 0.0
      %1409 = vmatprep.subr.mxu0 0.0
      %1410 = vmatpush1.msra.mxu0 0.0
      %1411 = vmatprep.subr.mxu0 0.0
      %1412 = vmatpush1.msra.mxu0 0.0
      %1413 = vmatprep.subr.mxu0 0.0
      %1414 = vmatpush1.msra.mxu0 0.0
      %1415 = vmatprep.subr.mxu0 0.0
      %1416 = vmatpush1.msra.mxu0 0.0
      %1417 = vmatprep.subr.mxu0 0.0
      %1418 = vmatpush1.msra.mxu0 0.0
      %1419 = vmatprep.subr.mxu0 0.0
      %1420 = vmatpush1.msra.mxu0 0.0
      %1421 = vmatprep.subr.mxu0 0.0
      %1422 = vmatpush1.msra.mxu0 0.0
      %1423 = vmatprep.subr.mxu0 0.0
      %1424 = vmatpush1.msra.mxu0 0.0
      %1425 = vmatprep.subr.mxu0 0.0
      %1426 = vmatpush1.msra.mxu0 0.0
      %1427 = vmatprep.subr.mxu0 0.0
      %1428 = vmatpush1.msra.mxu0 0.0
      %1429 = vmatprep.subr.mxu0 0.0
      %1430 = vmatpush1.msra.mxu0 0.0
      %1431 = vmatprep.subr.mxu0 0.0
      %1432 = vmatpush1.msra.mxu0 0.0
      %1433 = vmatprep.subr.mxu0 0.0
      %1434 = vmatpush1.msra.mxu0 0.0
      %1435 = vmatprep.subr.mxu0 0.0
      %1436 = vmatpush1.msra.mxu0 0.0
      %1437 = vmatprep.subr.mxu0 0.0
      %1438 = vmatpush1.msra.mxu0 0.0
      %1439 = vmatprep.subr.mxu0 0.0
      %1440 = vmatpush1.msra.mxu0 0.0
      %1441 = vmatprep.subr.mxu0 0.0
      %1442 = vmatpush1.msra.mxu0 0.0
      %1443 = vmatprep.subr.mxu0 0.0
      %1444 = vmatpush1.msra.mxu0 0.0
      %1445 = vmatprep.subr.mxu0 0.0
      %1446 = vmatpush1.msra.mxu0 0.0
      %1447 = vmatprep.mubr.f32.mxu0 0.0
      %1448 = vmatmul.mubr.f32.gmra.mrb[0].mxu0 %v1381
      %v1449 = vpop.f32.mrb[0].mxu0
      %v1450 = vadd.f32 0.0, %v1449
      %v1451 = vpop.f32.mrb[0].mxu0
      %1452 = vdwg.mxu0
      %v1454 = vsel %vm1379, %v1302, 0
      %1456 = vmatprep.subr.mxu0 0.0
      %1457 = vmatpush1.msra.mxu0 %v1299
      %1458 = vmatprep.subr.mxu0 0.0
      %1459 = vmatpush1.msra.mxu0 0.0
      %1460 = vmatprep.subr.mxu0 0.0
      %1461 = vmatpush1.msra.mxu0 0.0
      %1462 = vmatprep.subr.mxu0 0.0
      %1463 = vmatpush1.msra.mxu0 0.0
      %1464 = vmatprep.subr.mxu0 0.0
      %1465 = vmatpush1.msra.mxu0 0.0
      %1466 = vmatprep.subr.mxu0 0.0
      %1467 = vmatpush1.msra.mxu0 0.0
      %1468 = vmatprep.subr.mxu0 0.0
      %1469 = vmatpush1.msra.mxu0 0.0
      %1470 = vmatprep.subr.mxu0 0.0
      %1471 = vmatpush1.msra.mxu0 0.0
      %1472 = vmatprep.subr.mxu0 0.0
      %1473 = vmatpush1.msra.mxu0 0.0
      %1474 = vmatprep.subr.mxu0 0.0
      %1475 = vmatpush1.msra.mxu0 0.0
      %1476 = vmatprep.subr.mxu0 0.0
      %1477 = vmatpush1.msra.mxu0 0.0
      %1478 = vmatprep.subr.mxu0 0.0
      %1479 = vmatpush1.msra.mxu0 0.0
      %1480 = vmatprep.subr.mxu0 0.0
      %1481 = vmatpush1.msra.mxu0 0.0
      %1482 = vmatprep.subr.mxu0 0.0
      %1483 = vmatpush1.msra.mxu0 0.0
      %1484 = vmatprep.subr.mxu0 0.0
      %1485 = vmatpush1.msra.mxu0 0.0
      %1486 = vmatprep.subr.mxu0 0.0
      %1487 = vmatpush1.msra.mxu0 0.0
      %1488 = vmatprep.subr.mxu0 0.0
      %1489 = vmatpush1.msra.mxu0 0.0
      %1490 = vmatprep.subr.mxu0 0.0
      %1491 = vmatpush1.msra.mxu0 0.0
      %1492 = vmatprep.subr.mxu0 0.0
      %1493 = vmatpush1.msra.mxu0 0.0
      %1494 = vmatprep.subr.mxu0 0.0
      %1495 = vmatpush1.msra.mxu0 0.0
      %1496 = vmatprep.subr.mxu0 0.0
      %1497 = vmatpush1.msra.mxu0 0.0
      %1498 = vmatprep.subr.mxu0 0.0
      %1499 = vmatpush1.msra.mxu0 0.0
      %1500 = vmatprep.subr.mxu0 0.0
      %1501 = vmatpush1.msra.mxu0 0.0
      %1502 = vmatprep.subr.mxu0 0.0
      %1503 = vmatpush1.msra.mxu0 0.0
      %1504 = vmatprep.subr.mxu0 0.0
      %1505 = vmatpush1.msra.mxu0 0.0
      %1506 = vmatprep.subr.mxu0 0.0
      %1507 = vmatpush1.msra.mxu0 0.0
      %1508 = vmatprep.subr.mxu0 0.0
      %1509 = vmatpush1.msra.mxu0 0.0
      %1510 = vmatprep.subr.mxu0 0.0
      %1511 = vmatpush1.msra.mxu0 0.0
      %1512 = vmatprep.subr.mxu0 0.0
      %1513 = vmatpush1.msra.mxu0 0.0
      %1514 = vmatprep.subr.mxu0 0.0
      %1515 = vmatpush1.msra.mxu0 0.0
      %1516 = vmatprep.subr.mxu0 0.0
      %1517 = vmatpush1.msra.mxu0 0.0
      %1518 = vmatprep.subr.mxu0 0.0
      %1519 = vmatpush1.msra.mxu0 0.0
      %1520 = vmatprep.mubr.f32.mxu0 0.0
      %1521 = vmatmul.mubr.f32.gmra.mrb[0].mxu0 %v1454
      %v1522 = vpop.f32.mrb[0].mxu0
      %v1523 = vadd.f32 %v1450, %v1522
      %v1524 = vpop.f32.mrb[0].mxu0
      %1525 = vdwg.mxu0
      %s1526 = scalar_lea.vmem %s3, 48
      %v1527 = vld [vmem:[%s1526] sm:$0xff]
      %v1528 = vld [vmem:[%s1526 + $0x8] sm:$0xff]
      %v1529 = vld [vmem:[%s1526 + $0x10] sm:$0xff]
      %1530 = vmatprep.subr.mxu0 0.0
      %1531 = vmatpush1.msra.mxu0 %v1527
      %1532 = vmatprep.subr.mxu0 0.0
      %1533 = vmatpush1.msra.mxu0 %v1528
      %1534 = vmatprep.subr.mxu0 0.0
      %1535 = vmatpush1.msra.mxu0 %v1529
      %1536 = vmatprep.subr.mxu0 0.0
      %1537 = vmatpush1.msra.mxu0 0.0
      %1538 = vmatprep.subr.mxu0 0.0
      %1539 = vmatpush1.msra.mxu0 0.0
      %1540 = vmatprep.subr.mxu0 0.0
      %1541 = vmatpush1.msra.mxu0 0.0
      %1542 = vmatprep.subr.mxu0 0.0
      %1543 = vmatpush1.msra.mxu0 0.0
      %1544 = vmatprep.subr.mxu0 0.0
      %1545 = vmatpush1.msra.mxu0 0.0
      %1546 = vmatprep.subr.mxu0 0.0
      %1547 = vmatpush1.msra.mxu0 0.0
      %1548 = vmatprep.subr.mxu0 0.0
      %1549 = vmatpush1.msra.mxu0 0.0
      %1550 = vmatprep.subr.mxu0 0.0
      %1551 = vmatpush1.msra.mxu0 0.0
      %1552 = vmatprep.subr.mxu0 0.0
      %1553 = vmatpush1.msra.mxu0 0.0
      %1554 = vmatprep.subr.mxu0 0.0
      %1555 = vmatpush1.msra.mxu0 0.0
      %1556 = vmatprep.subr.mxu0 0.0
      %1557 = vmatpush1.msra.mxu0 0.0
      %1558 = vmatprep.subr.mxu0 0.0
      %1559 = vmatpush1.msra.mxu0 0.0
      %1560 = vmatprep.subr.mxu0 0.0
      %1561 = vmatpush1.msra.mxu0 0.0
      %1562 = vmatprep.subr.mxu0 0.0
      %1563 = vmatpush1.msra.mxu0 0.0
      %1564 = vmatprep.subr.mxu0 0.0
      %1565 = vmatpush1.msra.mxu0 0.0
      %1566 = vmatprep.subr.mxu0 0.0
      %1567 = vmatpush1.msra.mxu0 0.0
      %1568 = vmatprep.subr.mxu0 0.0
      %1569 = vmatpush1.msra.mxu0 0.0
      %1570 = vmatprep.subr.mxu0 0.0
      %1571 = vmatpush1.msra.mxu0 0.0
      %1572 = vmatprep.subr.mxu0 0.0
      %1573 = vmatpush1.msra.mxu0 0.0
      %1574 = vmatprep.subr.mxu0 0.0
      %1575 = vmatpush1.msra.mxu0 0.0
      %1576 = vmatprep.subr.mxu0 0.0
      %1577 = vmatpush1.msra.mxu0 0.0
      %1578 = vmatprep.subr.mxu0 0.0
      %1579 = vmatpush1.msra.mxu0 0.0
      %1580 = vmatprep.subr.mxu0 0.0
      %1581 = vmatpush1.msra.mxu0 0.0
      %1582 = vmatprep.subr.mxu0 0.0
      %1583 = vmatpush1.msra.mxu0 0.0
      %1584 = vmatprep.subr.mxu0 0.0
      %1585 = vmatpush1.msra.mxu0 0.0
      %1586 = vmatprep.subr.mxu0 0.0
      %1587 = vmatpush1.msra.mxu0 0.0
      %1588 = vmatprep.subr.mxu0 0.0
      %1589 = vmatpush1.msra.mxu0 0.0
      %1590 = vmatprep.subr.mxu0 0.0
      %1591 = vmatpush1.msra.mxu0 0.0
      %1592 = vmatprep.subr.mxu0 0.0
      %1593 = vmatpush1.msra.mxu0 0.0
      %1594 = vmatprep.mubr.f32.mxu0 0.0
      %1595 = vmatmul.mubr.f32.gmra.mrb[0].mxu0 %v1230
      %v1596 = vpop.f32.mrb[0].mxu0
      %v1597 = vadd.f32 0.0, %v1596
      %v1598 = vpop.f32.mrb[0].mxu0
      %1599 = vdwg.mxu0
      %s1600 = scalar_lea.vmem %s4, 8
      %v1601 = vld [vmem:[%s1600] sm:$0xf]
      %v1603 = vsel %vm1379, %v1601, 0
      %1605 = vmatprep.subr.mxu0 0.0
      %1606 = vmatpush1.msra.mxu0 %v1597
      %1607 = vmatprep.subr.mxu0 0.0
      %1608 = vmatpush1.msra.mxu0 0.0
      %1609 = vmatprep.subr.mxu0 0.0
      %1610 = vmatpush1.msra.mxu0 0.0
      %1611 = vmatprep.subr.mxu0 0.0
      %1612 = vmatpush1.msra.mxu0 0.0
      %1613 = vmatprep.subr.mxu0 0.0
      %1614 = vmatpush1.msra.mxu0 0.0
      %1615 = vmatprep.subr.mxu0 0.0
      %1616 = vmatpush1.msra.mxu0 0.0
      %1617 = vmatprep.subr.mxu0 0.0
      %1618 = vmatpush1.msra.mxu0 0.0
      %1619 = vmatprep.subr.mxu0 0.0
      %1620 = vmatpush1.msra.mxu0 0.0
      %1621 = vmatprep.subr.mxu0 0.0
      %1622 = vmatpush1.msra.mxu0 0.0
      %1623 = vmatprep.subr.mxu0 0.0
      %1624 = vmatpush1.msra.mxu0 0.0
      %1625 = vmatprep.subr.mxu0 0.0
      %1626 = vmatpush1.msra.mxu0 0.0
      %1627 = vmatprep.subr.mxu0 0.0
      %1628 = vmatpush1.msra.mxu0 0.0
      %1629 = vmatprep.subr.mxu0 0.0
      %1630 = vmatpush1.msra.mxu0 0.0
      %1631 = vmatprep.subr.mxu0 0.0
      %1632 = vmatpush1.msra.mxu0 0.0
      %1633 = vmatprep.subr.mxu0 0.0
      %1634 = vmatpush1.msra.mxu0 0.0
      %1635 = vmatprep.subr.mxu0 0.0
      %1636 = vmatpush1.msra.mxu0 0.0
      %1637 = vmatprep.subr.mxu0 0.0
      %1638 = vmatpush1.msra.mxu0 0.0
      %1639 = vmatprep.subr.mxu0 0.0
      %1640 = vmatpush1.msra.mxu0 0.0
      %1641 = vmatprep.subr.mxu0 0.0
      %1642 = vmatpush1.msra.mxu0 0.0
      %1643 = vmatprep.subr.mxu0 0.0
      %1644 = vmatpush1.msra.mxu0 0.0
      %1645 = vmatprep.subr.mxu0 0.0
      %1646 = vmatpush1.msra.mxu0 0.0
      %1647 = vmatprep.subr.mxu0 0.0
      %1648 = vmatpush1.msra.mxu0 0.0
      %1649 = vmatprep.subr.mxu0 0.0
      %1650 = vmatpush1.msra.mxu0 0.0
      %1651 = vmatprep.subr.mxu0 0.0
      %1652 = vmatpush1.msra.mxu0 0.0
      %1653 = vmatprep.subr.mxu0 0.0
      %1654 = vmatpush1.msra.mxu0 0.0
      %1655 = vmatprep.subr.mxu0 0.0
      %1656 = vmatpush1.msra.mxu0 0.0
      %1657 = vmatprep.subr.mxu0 0.0
      %1658 = vmatpush1.msra.mxu0 0.0
      %1659 = vmatprep.subr.mxu0 0.0
      %1660 = vmatpush1.msra.mxu0 0.0
      %1661 = vmatprep.subr.mxu0 0.0
      %1662 = vmatpush1.msra.mxu0 0.0
      %1663 = vmatprep.subr.mxu0 0.0
      %1664 = vmatpush1.msra.mxu0 0.0
      %1665 = vmatprep.subr.mxu0 0.0
      %1666 = vmatpush1.msra.mxu0 0.0
      %1667 = vmatprep.subr.mxu0 0.0
      %1668 = vmatpush1.msra.mxu0 0.0
      %1669 = vmatprep.mubr.f32.mxu0 0.0
      %1670 = vmatmul.mubr.f32.gmra.mrb[0].mxu0 %v1603
      %v1671 = vpop.f32.mrb[0].mxu0
      %v1672 = vadd.f32 0.0, %v1671
      %v1673 = vpop.f32.mrb[0].mxu0
      %1674 = vdwg.mxu0
      %v1675 = vadd.f32 %v1523, %v1672
      %v1676 = vlaneseq
      %v1677 = vshrl.u32 %v1676, 7
      %v1678 = vsub.s32 1, %v1677
      %v1679 = vrot.slane %v738, %v1678
      %v1680 = vadd.f32 %v1675, %v1679
      %v1681 = vld [vmem:[%s5] sm:$0xff]
      %v1682 = vld [vmem:[%s5 + $0x8] sm:$0xf]
      %vm1683 = vcmask 97280
      %v1685 = vsel %vm1683, %v1680, 0
      %vm1687 = vcmask 1043456
      %v1689 = vsel %vm1687, %v1682, 0
      %1691 = vmatprep.subr.mxu0 0.0
      %1692 = vmatpush1.msra.mxu0 %v1681
      %1693 = vmatprep.subr.mxu0 0.0
      %1694 = vmatpush1.msra.mxu0 %v1689
      %1695 = vmatprep.subr.mxu0 0.0
      %1696 = vmatpush1.msra.mxu0 0.0
      %1697 = vmatprep.subr.mxu0 0.0
      %1698 = vmatpush1.msra.mxu0 0.0
      %1699 = vmatprep.subr.mxu0 0.0
      %1700 = vmatpush1.msra.mxu0 0.0
      %1701 = vmatprep.subr.mxu0 0.0
      %1702 = vmatpush1.msra.mxu0 0.0
      %1703 = vmatprep.subr.mxu0 0.0
      %1704 = vmatpush1.msra.mxu0 0.0
      %1705 = vmatprep.subr.mxu0 0.0
      %1706 = vmatpush1.msra.mxu0 0.0
      %1707 = vmatprep.subr.mxu0 0.0
      %1708 = vmatpush1.msra.mxu0 0.0
      %1709 = vmatprep.subr.mxu0 0.0
      %1710 = vmatpush1.msra.mxu0 0.0
      %1711 = vmatprep.subr.mxu0 0.0
      %1712 = vmatpush1.msra.mxu0 0.0
      %1713 = vmatprep.subr.mxu0 0.0
      %1714 = vmatpush1.msra.mxu0 0.0
      %1715 = vmatprep.subr.mxu0 0.0
      %1716 = vmatpush1.msra.mxu0 0.0
      %1717 = vmatprep.subr.mxu0 0.0
      %1718 = vmatpush1.msra.mxu0 0.0
      %1719 = vmatprep.subr.mxu0 0.0
      %1720 = vmatpush1.msra.mxu0 0.0
      %1721 = vmatprep.subr.mxu0 0.0
      %1722 = vmatpush1.msra.mxu0 0.0
      %1723 = vmatprep.subr.mxu0 0.0
      %1724 = vmatpush1.msra.mxu0 0.0
      %1725 = vmatprep.subr.mxu0 0.0
      %1726 = vmatpush1.msra.mxu0 0.0
      %1727 = vmatprep.subr.mxu0 0.0
      %1728 = vmatpush1.msra.mxu0 0.0
      %1729 = vmatprep.subr.mxu0 0.0
      %1730 = vmatpush1.msra.mxu0 0.0
      %1731 = vmatprep.subr.mxu0 0.0
      %1732 = vmatpush1.msra.mxu0 0.0
      %1733 = vmatprep.subr.mxu0 0.0
      %1734 = vmatpush1.msra.mxu0 0.0
      %1735 = vmatprep.subr.mxu0 0.0
      %1736 = vmatpush1.msra.mxu0 0.0
      %1737 = vmatprep.subr.mxu0 0.0
      %1738 = vmatpush1.msra.mxu0 0.0
      %1739 = vmatprep.subr.mxu0 0.0
      %1740 = vmatpush1.msra.mxu0 0.0
      %1741 = vmatprep.subr.mxu0 0.0
      %1742 = vmatpush1.msra.mxu0 0.0
      %1743 = vmatprep.subr.mxu0 0.0
      %1744 = vmatpush1.msra.mxu0 0.0
      %1745 = vmatprep.subr.mxu0 0.0
      %1746 = vmatpush1.msra.mxu0 0.0
      %1747 = vmatprep.subr.mxu0 0.0
      %1748 = vmatpush1.msra.mxu0 0.0
      %1749 = vmatprep.subr.mxu0 0.0
      %1750 = vmatpush1.msra.mxu0 0.0
      %1751 = vmatprep.subr.mxu0 0.0
      %1752 = vmatpush1.msra.mxu0 0.0
      %1753 = vmatprep.subr.mxu0 0.0
      %1754 = vmatpush1.msra.mxu0 0.0
      %1755 = vmatprep.mubr.f32.mxu0 0.0
      %1756 = vmatmul.mubr.f32.gmra.mrb[0].mxu0 %v1685
      %v1757 = vpop.f32.mrb[0].mxu0
      %v1758 = vadd.f32 0.0, %v1757
      %v1759 = vpop.f32.mrb[0].mxu0
      %1760 = vdwg.mxu0
      %v1761 = vld [vmem:[%s6] sm:$0x3]
      %s1762 = scalar_lea.vmem %s5, 16
      %v1763 = vld [vmem:[%s1762] sm:$0xff]
      %v1764 = vld [vmem:[%s1762 + $0x8] sm:$0xf]
      %v1766 = vsel %vm1687, %v1764, 0
      %1768 = vmatprep.subr.mxu0 0.0
      %1769 = vmatpush1.msra.mxu0 %v1763
      %1770 = vmatprep.subr.mxu0 0.0
      %1771 = vmatpush1.msra.mxu0 %v1766
      %1772 = vmatprep.subr.mxu0 0.0
      %1773 = vmatpush1.msra.mxu0 0.0
      %1774 = vmatprep.subr.mxu0 0.0
      %1775 = vmatpush1.msra.mxu0 0.0
      %1776 = vmatprep.subr.mxu0 0.0
      %1777 = vmatpush1.msra.mxu0 0.0
      %1778 = vmatprep.subr.mxu0 0.0
      %1779 = vmatpush1.msra.mxu0 0.0
      %1780 = vmatprep.subr.mxu0 0.0
      %1781 = vmatpush1.msra.mxu0 0.0
      %1782 = vmatprep.subr.mxu0 0.0
      %1783 = vmatpush1.msra.mxu0 0.0
      %1784 = vmatprep.subr.mxu0 0.0
      %1785 = vmatpush1.msra.mxu0 0.0
      %1786 = vmatprep.subr.mxu0 0.0
      %1787 = vmatpush1.msra.mxu0 0.0
      %1788 = vmatprep.subr.mxu0 0.0
      %1789 = vmatpush1.msra.mxu0 0.0
      %1790 = vmatprep.subr.mxu0 0.0
      %1791 = vmatpush1.msra.mxu0 0.0
      %1792 = vmatprep.subr.mxu0 0.0
      %1793 = vmatpush1.msra.mxu0 0.0
      %1794 = vmatprep.subr.mxu0 0.0
      %1795 = vmatpush1.msra.mxu0 0.0
      %1796 = vmatprep.subr.mxu0 0.0
      %1797 = vmatpush1.msra.mxu0 0.0
      %1798 = vmatprep.subr.mxu0 0.0
      %1799 = vmatpush1.msra.mxu0 0.0
      %1800 = vmatprep.subr.mxu0 0.0
      %1801 = vmatpush1.msra.mxu0 0.0
      %1802 = vmatprep.subr.mxu0 0.0
      %1803 = vmatpush1.msra.mxu0 0.0
      %1804 = vmatprep.subr.mxu0 0.0
      %1805 = vmatpush1.msra.mxu0 0.0
      %1806 = vmatprep.subr.mxu0 0.0
      %1807 = vmatpush1.msra.mxu0 0.0
      %1808 = vmatprep.subr.mxu0 0.0
      %1809 = vmatpush1.msra.mxu0 0.0
      %1810 = vmatprep.subr.mxu0 0.0
      %1811 = vmatpush1.msra.mxu0 0.0
      %1812 = vmatprep.subr.mxu0 0.0
      %1813 = vmatpush1.msra.mxu0 0.0
      %1814 = vmatprep.subr.mxu0 0.0
      %1815 = vmatpush1.msra.mxu0 0.0
      %1816 = vmatprep.subr.mxu0 0.0
      %1817 = vmatpush1.msra.mxu0 0.0
      %1818 = vmatprep.subr.mxu0 0.0
      %1819 = vmatpush1.msra.mxu0 0.0
      %1820 = vmatprep.subr.mxu0 0.0
      %1821 = vmatpush1.msra.mxu0 0.0
      %1822 = vmatprep.subr.mxu0 0.0
      %1823 = vmatpush1.msra.mxu0 0.0
      %1824 = vmatprep.subr.mxu0 0.0
      %1825 = vmatpush1.msra.mxu0 0.0
      %1826 = vmatprep.subr.mxu0 0.0
      %1827 = vmatpush1.msra.mxu0 0.0
      %1828 = vmatprep.subr.mxu0 0.0
      %1829 = vmatpush1.msra.mxu0 0.0
      %1830 = vmatprep.subr.mxu0 0.0
      %1831 = vmatpush1.msra.mxu0 0.0
      %1832 = vmatprep.mubr.f32.mxu0 0.0
      %1833 = vmatmul.mubr.f32.gmra.mrb[0].mxu0 %v1685
      %v1834 = vpop.f32.mrb[0].mxu0
      %v1835 = vadd.f32 0.0, %v1834
      %v1836 = vpop.f32.mrb[0].mxu0
      %1837 = vdwg.mxu0
      %s1838 = scalar_lea.vmem %s6, 2
      %v1839 = vld [vmem:[%s1838] sm:$0x3]
      %vm1840 = vcmask 31744
      %v1842 = vsel %vm1840, %v1839, 0
      %v1845 = vsel %vm1687, %v1835, 0
      %1847 = vmatprep.subr.mxu0 0.0
      %1848 = vmatpush1.msra.mxu0 %v1845
      %1849 = vmatprep.subr.mxu0 0.0
      %1850 = vmatpush1.msra.mxu0 0.0
      %1851 = vmatprep.subr.mxu0 0.0
      %1852 = vmatpush1.msra.mxu0 0.0
      %1853 = vmatprep.subr.mxu0 0.0
      %1854 = vmatpush1.msra.mxu0 0.0
      %1855 = vmatprep.subr.mxu0 0.0
      %1856 = vmatpush1.msra.mxu0 0.0
      %1857 = vmatprep.subr.mxu0 0.0
      %1858 = vmatpush1.msra.mxu0 0.0
      %1859 = vmatprep.subr.mxu0 0.0
      %1860 = vmatpush1.msra.mxu0 0.0
      %1861 = vmatprep.subr.mxu0 0.0
      %1862 = vmatpush1.msra.mxu0 0.0
      %1863 = vmatprep.subr.mxu0 0.0
      %1864 = vmatpush1.msra.mxu0 0.0
      %1865 = vmatprep.subr.mxu0 0.0
      %1866 = vmatpush1.msra.mxu0 0.0
      %1867 = vmatprep.subr.mxu0 0.0
      %1868 = vmatpush1.msra.mxu0 0.0
      %1869 = vmatprep.subr.mxu0 0.0
      %1870 = vmatpush1.msra.mxu0 0.0
      %1871 = vmatprep.subr.mxu0 0.0
      %1872 = vmatpush1.msra.mxu0 0.0
      %1873 = vmatprep.subr.mxu0 0.0
      %1874 = vmatpush1.msra.mxu0 0.0
      %1875 = vmatprep.subr.mxu0 0.0
      %1876 = vmatpush1.msra.mxu0 0.0
      %1877 = vmatprep.subr.mxu0 0.0
      %1878 = vmatpush1.msra.mxu0 0.0
      %1879 = vmatprep.subr.mxu0 0.0
      %1880 = vmatpush1.msra.mxu0 0.0
      %1881 = vmatprep.subr.mxu0 0.0
      %1882 = vmatpush1.msra.mxu0 0.0
      %1883 = vmatprep.subr.mxu0 0.0
      %1884 = vmatpush1.msra.mxu0 0.0
      %1885 = vmatprep.subr.mxu0 0.0
      %1886 = vmatpush1.msra.mxu0 0.0
      %1887 = vmatprep.subr.mxu0 0.0
      %1888 = vmatpush1.msra.mxu0 0.0
      %1889 = vmatprep.subr.mxu0 0.0
      %1890 = vmatpush1.msra.mxu0 0.0
      %1891 = vmatprep.subr.mxu0 0.0
      %1892 = vmatpush1.msra.mxu0 0.0
      %1893 = vmatprep.subr.mxu0 0.0
      %1894 = vmatpush1.msra.mxu0 0.0
      %1895 = vmatprep.subr.mxu0 0.0
      %1896 = vmatpush1.msra.mxu0 0.0
      %1897 = vmatprep.subr.mxu0 0.0
      %1898 = vmatpush1.msra.mxu0 0.0
      %1899 = vmatprep.subr.mxu0 0.0
      %1900 = vmatpush1.msra.mxu0 0.0
      %1901 = vmatprep.subr.mxu0 0.0
      %1902 = vmatpush1.msra.mxu0 0.0
      %1903 = vmatprep.subr.mxu0 0.0
      %1904 = vmatpush1.msra.mxu0 0.0
      %1905 = vmatprep.subr.mxu0 0.0
      %1906 = vmatpush1.msra.mxu0 0.0
      %1907 = vmatprep.subr.mxu0 0.0
      %1908 = vmatpush1.msra.mxu0 0.0
      %1909 = vmatprep.subr.mxu0 0.0
      %1910 = vmatpush1.msra.mxu0 0.0
      %1911 = vmatprep.mubr.f32.mxu0 0.0
      %1912 = vmatmul.mubr.f32.gmra.mrb[0].mxu0 %v1842
      %v1913 = vpop.f32.mrb[0].mxu0
      %v1914 = vadd.f32 0.0, %v1913
      %v1915 = vpop.f32.mrb[0].mxu0
      %1916 = vdwg.mxu0
      %v1918 = vsel %vm1840, %v1761, 0
      %v1921 = vsel %vm1687, %v1758, 0
      %1923 = vmatprep.subr.mxu0 0.0
      %1924 = vmatpush1.msra.mxu0 %v1921
      %1925 = vmatprep.subr.mxu0 0.0
      %1926 = vmatpush1.msra.mxu0 0.0
      %1927 = vmatprep.subr.mxu0 0.0
      %1928 = vmatpush1.msra.mxu0 0.0
      %1929 = vmatprep.subr.mxu0 0.0
      %1930 = vmatpush1.msra.mxu0 0.0
      %1931 = vmatprep.subr.mxu0 0.0
      %1932 = vmatpush1.msra.mxu0 0.0
      %1933 = vmatprep.subr.mxu0 0.0
      %1934 = vmatpush1.msra.mxu0 0.0
      %1935 = vmatprep.subr.mxu0 0.0
      %1936 = vmatpush1.msra.mxu0 0.0
      %1937 = vmatprep.subr.mxu0 0.0
      %1938 = vmatpush1.msra.mxu0 0.0
      %1939 = vmatprep.subr.mxu0 0.0
      %1940 = vmatpush1.msra.mxu0 0.0
      %1941 = vmatprep.subr.mxu0 0.0
      %1942 = vmatpush1.msra.mxu0 0.0
      %1943 = vmatprep.subr.mxu0 0.0
      %1944 = vmatpush1.msra.mxu0 0.0
      %1945 = vmatprep.subr.mxu0 0.0
      %1946 = vmatpush1.msra.mxu0 0.0
      %1947 = vmatprep.subr.mxu0 0.0
      %1948 = vmatpush1.msra.mxu0 0.0
      %1949 = vmatprep.subr.mxu0 0.0
      %1950 = vmatpush1.msra.mxu0 0.0
      %1951 = vmatprep.subr.mxu0 0.0
      %1952 = vmatpush1.msra.mxu0 0.0
      %1953 = vmatprep.subr.mxu0 0.0
      %1954 = vmatpush1.msra.mxu0 0.0
      %1955 = vmatprep.subr.mxu0 0.0
      %1956 = vmatpush1.msra.mxu0 0.0
      %1957 = vmatprep.subr.mxu0 0.0
      %1958 = vmatpush1.msra.mxu0 0.0
      %1959 = vmatprep.subr.mxu0 0.0
      %1960 = vmatpush1.msra.mxu0 0.0
      %1961 = vmatprep.subr.mxu0 0.0
      %1962 = vmatpush1.msra.mxu0 0.0
      %1963 = vmatprep.subr.mxu0 0.0
      %1964 = vmatpush1.msra.mxu0 0.0
      %1965 = vmatprep.subr.mxu0 0.0
      %1966 = vmatpush1.msra.mxu0 0.0
      %1967 = vmatprep.subr.mxu0 0.0
      %1968 = vmatpush1.msra.mxu0 0.0
      %1969 = vmatprep.subr.mxu0 0.0
      %1970 = vmatpush1.msra.mxu0 0.0
      %1971 = vmatprep.subr.mxu0 0.0
      %1972 = vmatpush1.msra.mxu0 0.0
      %1973 = vmatprep.subr.mxu0 0.0
      %1974 = vmatpush1.msra.mxu0 0.0
      %1975 = vmatprep.subr.mxu0 0.0
      %1976 = vmatpush1.msra.mxu0 0.0
      %1977 = vmatprep.subr.mxu0 0.0
      %1978 = vmatpush1.msra.mxu0 0.0
      %1979 = vmatprep.subr.mxu0 0.0
      %1980 = vmatpush1.msra.mxu0 0.0
      %1981 = vmatprep.subr.mxu0 0.0
      %1982 = vmatpush1.msra.mxu0 0.0
      %1983 = vmatprep.subr.mxu0 0.0
      %1984 = vmatpush1.msra.mxu0 0.0
      %1985 = vmatprep.subr.mxu0 0.0
      %1986 = vmatpush1.msra.mxu0 0.0
      %1987 = vmatprep.mubr.f32.mxu0 0.0
      %1988 = vmatmul.mubr.f32.gmra.mrb[0].mxu0 %v1918
      %v1989 = vpop.f32.mrb[0].mxu0
      %v1990 = vadd.f32 %v1914, %v1989
      %v1991 = vpop.f32.mrb[0].mxu0
      %1992 = vdwg.mxu0
      %s1993 = scalar_lea.vmem %s5, 32
      %v1994 = vld [vmem:[%s1993] sm:$0xff]
      %v1995 = vld [vmem:[%s1993 + $0x8] sm:$0xf]
      %v1997 = vsel %vm1687, %v1995, 0
      %1999 = vmatprep.subr.mxu0 0.0
      %2000 = vmatpush1.msra.mxu0 %v1994
      %2001 = vmatprep.subr.mxu0 0.0
      %2002 = vmatpush1.msra.mxu0 %v1997
      %2003 = vmatprep.subr.mxu0 0.0
      %2004 = vmatpush1.msra.mxu0 0.0
      %2005 = vmatprep.subr.mxu0 0.0
      %2006 = vmatpush1.msra.mxu0 0.0
      %2007 = vmatprep.subr.mxu0 0.0
      %2008 = vmatpush1.msra.mxu0 0.0
      %2009 = vmatprep.subr.mxu0 0.0
      %2010 = vmatpush1.msra.mxu0 0.0
      %2011 = vmatprep.subr.mxu0 0.0
      %2012 = vmatpush1.msra.mxu0 0.0
      %2013 = vmatprep.subr.mxu0 0.0
      %2014 = vmatpush1.msra.mxu0 0.0
      %2015 = vmatprep.subr.mxu0 0.0
      %2016 = vmatpush1.msra.mxu0 0.0
      %2017 = vmatprep.subr.mxu0 0.0
      %2018 = vmatpush1.msra.mxu0 0.0
      %2019 = vmatprep.subr.mxu0 0.0
      %2020 = vmatpush1.msra.mxu0 0.0
      %2021 = vmatprep.subr.mxu0 0.0
      %2022 = vmatpush1.msra.mxu0 0.0
      %2023 = vmatprep.subr.mxu0 0.0
      %2024 = vmatpush1.msra.mxu0 0.0
      %2025 = vmatprep.subr.mxu0 0.0
      %2026 = vmatpush1.msra.mxu0 0.0
      %2027 = vmatprep.subr.mxu0 0.0
      %2028 = vmatpush1.msra.mxu0 0.0
      %2029 = vmatprep.subr.mxu0 0.0
      %2030 = vmatpush1.msra.mxu0 0.0
      %2031 = vmatprep.subr.mxu0 0.0
      %2032 = vmatpush1.msra.mxu0 0.0
      %2033 = vmatprep.subr.mxu0 0.0
      %2034 = vmatpush1.msra.mxu0 0.0
      %2035 = vmatprep.subr.mxu0 0.0
      %2036 = vmatpush1.msra.mxu0 0.0
      %2037 = vmatprep.subr.mxu0 0.0
      %2038 = vmatpush1.msra.mxu0 0.0
      %2039 = vmatprep.subr.mxu0 0.0
      %2040 = vmatpush1.msra.mxu0 0.0
      %2041 = vmatprep.subr.mxu0 0.0
      %2042 = vmatpush1.msra.mxu0 0.0
      %2043 = vmatprep.subr.mxu0 0.0
      %2044 = vmatpush1.msra.mxu0 0.0
      %2045 = vmatprep.subr.mxu0 0.0
      %2046 = vmatpush1.msra.mxu0 0.0
      %2047 = vmatprep.subr.mxu0 0.0
      %2048 = vmatpush1.msra.mxu0 0.0
      %2049 = vmatprep.subr.mxu0 0.0
      %2050 = vmatpush1.msra.mxu0 0.0
      %2051 = vmatprep.subr.mxu0 0.0
      %2052 = vmatpush1.msra.mxu0 0.0
      %2053 = vmatprep.subr.mxu0 0.0
      %2054 = vmatpush1.msra.mxu0 0.0
      %2055 = vmatprep.subr.mxu0 0.0
      %2056 = vmatpush1.msra.mxu0 0.0
      %2057 = vmatprep.subr.mxu0 0.0
      %2058 = vmatpush1.msra.mxu0 0.0
      %2059 = vmatprep.subr.mxu0 0.0
      %2060 = vmatpush1.msra.mxu0 0.0
      %2061 = vmatprep.subr.mxu0 0.0
      %2062 = vmatpush1.msra.mxu0 0.0
      %2063 = vmatprep.mubr.f32.mxu0 0.0
      %2064 = vmatmul.mubr.f32.gmra.mrb[0].mxu0 %v1685
      %v2065 = vpop.f32.mrb[0].mxu0
      %v2066 = vadd.f32 0.0, %v2065
      %v2067 = vpop.f32.mrb[0].mxu0
      %2068 = vdwg.mxu0
      %s2069 = scalar_lea.vmem %s6, 4
      %v2070 = vld [vmem:[%s2069] sm:$0x3]
      %v2072 = vsel %vm1840, %v2070, 0
      %v2075 = vsel %vm1687, %v2066, 0
      %2077 = vmatprep.subr.mxu0 0.0
      %2078 = vmatpush1.msra.mxu0 %v2075
      %2079 = vmatprep.subr.mxu0 0.0
      %2080 = vmatpush1.msra.mxu0 0.0
      %2081 = vmatprep.subr.mxu0 0.0
      %2082 = vmatpush1.msra.mxu0 0.0
      %2083 = vmatprep.subr.mxu0 0.0
      %2084 = vmatpush1.msra.mxu0 0.0
      %2085 = vmatprep.subr.mxu0 0.0
      %2086 = vmatpush1.msra.mxu0 0.0
      %2087 = vmatprep.subr.mxu0 0.0
      %2088 = vmatpush1.msra.mxu0 0.0
      %2089 = vmatprep.subr.mxu0 0.0
      %2090 = vmatpush1.msra.mxu0 0.0
      %2091 = vmatprep.subr.mxu0 0.0
      %2092 = vmatpush1.msra.mxu0 0.0
      %2093 = vmatprep.subr.mxu0 0.0
      %2094 = vmatpush1.msra.mxu0 0.0
      %2095 = vmatprep.subr.mxu0 0.0
      %2096 = vmatpush1.msra.mxu0 0.0
      %2097 = vmatprep.subr.mxu0 0.0
      %2098 = vmatpush1.msra.mxu0 0.0
      %2099 = vmatprep.subr.mxu0 0.0
      %2100 = vmatpush1.msra.mxu0 0.0
      %2101 = vmatprep.subr.mxu0 0.0
      %2102 = vmatpush1.msra.mxu0 0.0
      %2103 = vmatprep.subr.mxu0 0.0
      %2104 = vmatpush1.msra.mxu0 0.0
      %2105 = vmatprep.subr.mxu0 0.0
      %2106 = vmatpush1.msra.mxu0 0.0
      %2107 = vmatprep.subr.mxu0 0.0
      %2108 = vmatpush1.msra.mxu0 0.0
      %2109 = vmatprep.subr.mxu0 0.0
      %2110 = vmatpush1.msra.mxu0 0.0
      %2111 = vmatprep.subr.mxu0 0.0
      %2112 = vmatpush1.msra.mxu0 0.0
      %2113 = vmatprep.subr.mxu0 0.0
      %2114 = vmatpush1.msra.mxu0 0.0
      %2115 = vmatprep.subr.mxu0 0.0
      %2116 = vmatpush1.msra.mxu0 0.0
      %2117 = vmatprep.subr.mxu0 0.0
      %2118 = vmatpush1.msra.mxu0 0.0
      %2119 = vmatprep.subr.mxu0 0.0
      %2120 = vmatpush1.msra.mxu0 0.0
      %2121 = vmatprep.subr.mxu0 0.0
      %2122 = vmatpush1.msra.mxu0 0.0
      %2123 = vmatprep.subr.mxu0 0.0
      %2124 = vmatpush1.msra.mxu0 0.0
      %2125 = vmatprep.subr.mxu0 0.0
      %2126 = vmatpush1.msra.mxu0 0.0
      %2127 = vmatprep.subr.mxu0 0.0
      %2128 = vmatpush1.msra.mxu0 0.0
      %2129 = vmatprep.subr.mxu0 0.0
      %2130 = vmatpush1.msra.mxu0 0.0
      %2131 = vmatprep.subr.mxu0 0.0
      %2132 = vmatpush1.msra.mxu0 0.0
      %2133 = vmatprep.subr.mxu0 0.0
      %2134 = vmatpush1.msra.mxu0 0.0
      %2135 = vmatprep.subr.mxu0 0.0
      %2136 = vmatpush1.msra.mxu0 0.0
      %2137 = vmatprep.subr.mxu0 0.0
      %2138 = vmatpush1.msra.mxu0 0.0
      %2139 = vmatprep.subr.mxu0 0.0
      %2140 = vmatpush1.msra.mxu0 0.0
      %2141 = vmatprep.mubr.f32.mxu0 0.0
      %2142 = vmatmul.mubr.f32.gmra.mrb[0].mxu0 %v2072
      %v2143 = vpop.f32.mrb[0].mxu0
      %v2144 = vadd.f32 0.0, %v2143
      %v2145 = vpop.f32.mrb[0].mxu0
      %2146 = vdwg.mxu0
      %v2147 = vadd.f32 %v1990, %v2144
      %v2148 = vlaneseq
      %v2149 = vshrl.u32 %v2148, 7
      %v2150 = vsub.s32 2, %v2149
      %v2151 = vrot.slane %v738, %v2150
      %v2152 = vadd.f32 %v2147, %v2151
      %v2153 = vld [vmem:[%s7] sm:$0xff]
      %v2154 = vld [vmem:[%s7 + $0x8] sm:$0xff]
      %v2155 = vld [vmem:[%s7 + $0x10] sm:$0xff]
      %2156 = vmatprep.subr.mxu0 0.0
      %2157 = vmatpush1.msra.mxu0 %v2153
      %2158 = vmatprep.subr.mxu0 0.0
      %2159 = vmatpush1.msra.mxu0 %v2154
      %2160 = vmatprep.subr.mxu0 0.0
      %2161 = vmatpush1.msra.mxu0 %v2155
      %2162 = vmatprep.subr.mxu0 0.0
      %2163 = vmatpush1.msra.mxu0 0.0
      %2164 = vmatprep.subr.mxu0 0.0
      %2165 = vmatpush1.msra.mxu0 0.0
      %2166 = vmatprep.subr.mxu0 0.0
      %2167 = vmatpush1.msra.mxu0 0.0
      %2168 = vmatprep.subr.mxu0 0.0
      %2169 = vmatpush1.msra.mxu0 0.0
      %2170 = vmatprep.subr.mxu0 0.0
      %2171 = vmatpush1.msra.mxu0 0.0
      %2172 = vmatprep.subr.mxu0 0.0
      %2173 = vmatpush1.msra.mxu0 0.0
      %2174 = vmatprep.subr.mxu0 0.0
      %2175 = vmatpush1.msra.mxu0 0.0
      %2176 = vmatprep.subr.mxu0 0.0
      %2177 = vmatpush1.msra.mxu0 0.0
      %2178 = vmatprep.subr.mxu0 0.0
      %2179 = vmatpush1.msra.mxu0 0.0
      %2180 = vmatprep.subr.mxu0 0.0
      %2181 = vmatpush1.msra.mxu0 0.0
      %2182 = vmatprep.subr.mxu0 0.0
      %2183 = vmatpush1.msra.mxu0 0.0
      %2184 = vmatprep.subr.mxu0 0.0
      %2185 = vmatpush1.msra.mxu0 0.0
      %2186 = vmatprep.subr.mxu0 0.0
      %2187 = vmatpush1.msra.mxu0 0.0
      %2188 = vmatprep.subr.mxu0 0.0
      %2189 = vmatpush1.msra.mxu0 0.0
      %2190 = vmatprep.subr.mxu0 0.0
      %2191 = vmatpush1.msra.mxu0 0.0
      %2192 = vmatprep.subr.mxu0 0.0
      %2193 = vmatpush1.msra.mxu0 0.0
      %2194 = vmatprep.subr.mxu0 0.0
      %2195 = vmatpush1.msra.mxu0 0.0
      %2196 = vmatprep.subr.mxu0 0.0
      %2197 = vmatpush1.msra.mxu0 0.0
      %2198 = vmatprep.subr.mxu0 0.0
      %2199 = vmatpush1.msra.mxu0 0.0
      %2200 = vmatprep.subr.mxu0 0.0
      %2201 = vmatpush1.msra.mxu0 0.0
      %2202 = vmatprep.subr.mxu0 0.0
      %2203 = vmatpush1.msra.mxu0 0.0
      %2204 = vmatprep.subr.mxu0 0.0
      %2205 = vmatpush1.msra.mxu0 0.0
      %2206 = vmatprep.subr.mxu0 0.0
      %2207 = vmatpush1.msra.mxu0 0.0
      %2208 = vmatprep.subr.mxu0 0.0
      %2209 = vmatpush1.msra.mxu0 0.0
      %2210 = vmatprep.subr.mxu0 0.0
      %2211 = vmatpush1.msra.mxu0 0.0
      %2212 = vmatprep.subr.mxu0 0.0
      %2213 = vmatpush1.msra.mxu0 0.0
      %2214 = vmatprep.subr.mxu0 0.0
      %2215 = vmatpush1.msra.mxu0 0.0
      %2216 = vmatprep.subr.mxu0 0.0
      %2217 = vmatpush1.msra.mxu0 0.0
      %2218 = vmatprep.subr.mxu0 0.0
      %2219 = vmatpush1.msra.mxu0 0.0
      %2220 = vmatprep.mubr.f32.mxu0 0.0
      %2221 = vmatmul.mubr.f32.gmra.mrb[0].mxu0 %v1230
      %v2222 = vpop.f32.mrb[0].mxu0
      %v2223 = vadd.f32 0.0, %v2222
      %v2224 = vpop.f32.mrb[0].mxu0
      %2225 = vdwg.mxu0
      %v2226 = vld [vmem:[%s8] sm:$0xff]
      %v2227 = vld [vmem:[%s8 + $0x8] sm:$0xff]
      %s2228 = scalar_lea.vmem %s7, 24
      %v2229 = vld [vmem:[%s2228] sm:$0xff]
      %v2230 = vld [vmem:[%s2228 + $0x8] sm:$0xff]
      %v2231 = vld [vmem:[%s2228 + $0x10] sm:$0xff]
      %2232 = vmatprep.subr.mxu0 0.0
      %2233 = vmatpush1.msra.mxu0 %v2229
      %2234 = vmatprep.subr.mxu0 0.0
      %2235 = vmatpush1.msra.mxu0 %v2230
      %2236 = vmatprep.subr.mxu0 0.0
      %2237 = vmatpush1.msra.mxu0 %v2231
      %2238 = vmatprep.subr.mxu0 0.0
      %2239 = vmatpush1.msra.mxu0 0.0
      %2240 = vmatprep.subr.mxu0 0.0
      %2241 = vmatpush1.msra.mxu0 0.0
      %2242 = vmatprep.subr.mxu0 0.0
      %2243 = vmatpush1.msra.mxu0 0.0
      %2244 = vmatprep.subr.mxu0 0.0
      %2245 = vmatpush1.msra.mxu0 0.0
      %2246 = vmatprep.subr.mxu0 0.0
      %2247 = vmatpush1.msra.mxu0 0.0
      %2248 = vmatprep.subr.mxu0 0.0
      %2249 = vmatpush1.msra.mxu0 0.0
      %2250 = vmatprep.subr.mxu0 0.0
      %2251 = vmatpush1.msra.mxu0 0.0
      %2252 = vmatprep.subr.mxu0 0.0
      %2253 = vmatpush1.msra.mxu0 0.0
      %2254 = vmatprep.subr.mxu0 0.0
      %2255 = vmatpush1.msra.mxu0 0.0
      %2256 = vmatprep.subr.mxu0 0.0
      %2257 = vmatpush1.msra.mxu0 0.0
      %2258 = vmatprep.subr.mxu0 0.0
      %2259 = vmatpush1.msra.mxu0 0.0
      %2260 = vmatprep.subr.mxu0 0.0
      %2261 = vmatpush1.msra.mxu0 0.0
      %2262 = vmatprep.subr.mxu0 0.0
      %2263 = vmatpush1.msra.mxu0 0.0
      %2264 = vmatprep.subr.mxu0 0.0
      %2265 = vmatpush1.msra.mxu0 0.0
      %2266 = vmatprep.subr.mxu0 0.0
      %2267 = vmatpush1.msra.mxu0 0.0
      %2268 = vmatprep.subr.mxu0 0.0
      %2269 = vmatpush1.msra.mxu0 0.0
      %2270 = vmatprep.subr.mxu0 0.0
      %2271 = vmatpush1.msra.mxu0 0.0
      %2272 = vmatprep.subr.mxu0 0.0
      %2273 = vmatpush1.msra.mxu0 0.0
      %2274 = vmatprep.subr.mxu0 0.0
      %2275 = vmatpush1.msra.mxu0 0.0
      %2276 = vmatprep.subr.mxu0 0.0
      %2277 = vmatpush1.msra.mxu0 0.0
      %2278 = vmatprep.subr.mxu0 0.0
      %2279 = vmatpush1.msra.mxu0 0.0
      %2280 = vmatprep.subr.mxu0 0.0
      %2281 = vmatpush1.msra.mxu0 0.0
      %2282 = vmatprep.subr.mxu0 0.0
      %2283 = vmatpush1.msra.mxu0 0.0
      %2284 = vmatprep.subr.mxu0 0.0
      %2285 = vmatpush1.msra.mxu0 0.0
      %2286 = vmatprep.subr.mxu0 0.0
      %2287 = vmatpush1.msra.mxu0 0.0
      %2288 = vmatprep.subr.mxu0 0.0
      %2289 = vmatpush1.msra.mxu0 0.0
      %2290 = vmatprep.subr.mxu0 0.0
      %2291 = vmatpush1.msra.mxu0 0.0
      %2292 = vmatprep.subr.mxu0 0.0
      %2293 = vmatpush1.msra.mxu0 0.0
      %2294 = vmatprep.subr.mxu0 0.0
      %2295 = vmatpush1.msra.mxu0 0.0
      %2296 = vmatprep.mubr.f32.mxu0 0.0
      %2297 = vmatmul.mubr.f32.gmra.mrb[0].mxu0 %v1230
      %v2298 = vpop.f32.mrb[0].mxu0
      %v2299 = vadd.f32 0.0, %v2298
      %v2300 = vpop.f32.mrb[0].mxu0
      %2301 = vdwg.mxu0
      %s2302 = scalar_lea.vmem %s8, 16
      %v2303 = vld [vmem:[%s2302] sm:$0xff]
      %v2304 = vld [vmem:[%s2302 + $0x8] sm:$0xff]
      %v2306 = vsel %vm1379, %v2303, 0
      %v2309 = vsel %vm1379, %v2304, 0
      %2311 = vmatprep.subr.mxu0 0.0
      %2312 = vmatpush1.msra.mxu0 %v2299
      %2313 = vmatprep.subr.mxu0 0.0
      %2314 = vmatpush1.msra.mxu0 0.0
      %2315 = vmatprep.subr.mxu0 0.0
      %2316 = vmatpush1.msra.mxu0 0.0
      %2317 = vmatprep.subr.mxu0 0.0
      %2318 = vmatpush1.msra.mxu0 0.0
      %2319 = vmatprep.subr.mxu0 0.0
      %2320 = vmatpush1.msra.mxu0 0.0
      %2321 = vmatprep.subr.mxu0 0.0
      %2322 = vmatpush1.msra.mxu0 0.0
      %2323 = vmatprep.subr.mxu0 0.0
      %2324 = vmatpush1.msra.mxu0 0.0
      %2325 = vmatprep.subr.mxu0 0.0
      %2326 = vmatpush1.msra.mxu0 0.0
      %2327 = vmatprep.subr.mxu0 0.0
      %2328 = vmatpush1.msra.mxu0 0.0
      %2329 = vmatprep.subr.mxu0 0.0
      %2330 = vmatpush1.msra.mxu0 0.0
      %2331 = vmatprep.subr.mxu0 0.0
      %2332 = vmatpush1.msra.mxu0 0.0
      %2333 = vmatprep.subr.mxu0 0.0
      %2334 = vmatpush1.msra.mxu0 0.0
      %2335 = vmatprep.subr.mxu0 0.0
      %2336 = vmatpush1.msra.mxu0 0.0
      %2337 = vmatprep.subr.mxu0 0.0
      %2338 = vmatpush1.msra.mxu0 0.0
      %2339 = vmatprep.subr.mxu0 0.0
      %2340 = vmatpush1.msra.mxu0 0.0
      %2341 = vmatprep.subr.mxu0 0.0
      %2342 = vmatpush1.msra.mxu0 0.0
      %2343 = vmatprep.subr.mxu0 0.0
      %2344 = vmatpush1.msra.mxu0 0.0
      %2345 = vmatprep.subr.mxu0 0.0
      %2346 = vmatpush1.msra.mxu0 0.0
      %2347 = vmatprep.subr.mxu0 0.0
      %2348 = vmatpush1.msra.mxu0 0.0
      %2349 = vmatprep.subr.mxu0 0.0
      %2350 = vmatpush1.msra.mxu0 0.0
      %2351 = vmatprep.subr.mxu0 0.0
      %2352 = vmatpush1.msra.mxu0 0.0
      %2353 = vmatprep.subr.mxu0 0.0
      %2354 = vmatpush1.msra.mxu0 0.0
      %2355 = vmatprep.subr.mxu0 0.0
      %2356 = vmatpush1.msra.mxu0 0.0
      %2357 = vmatprep.subr.mxu0 0.0
      %2358 = vmatpush1.msra.mxu0 0.0
      %2359 = vmatprep.subr.mxu0 0.0
      %2360 = vmatpush1.msra.mxu0 0.0
      %2361 = vmatprep.subr.mxu0 0.0
      %2362 = vmatpush1.msra.mxu0 0.0
      %2363 = vmatprep.subr.mxu0 0.0
      %2364 = vmatpush1.msra.mxu0 0.0
      %2365 = vmatprep.subr.mxu0 0.0
      %2366 = vmatpush1.msra.mxu0 0.0
      %2367 = vmatprep.subr.mxu0 0.0
      %2368 = vmatpush1.msra.mxu0 0.0
      %2369 = vmatprep.subr.mxu0 0.0
      %2370 = vmatpush1.msra.mxu0 0.0
      %2371 = vmatprep.subr.mxu0 0.0
      %2372 = vmatpush1.msra.mxu0 0.0
      %2373 = vmatprep.subr.mxu0 0.0
      %2374 = vmatpush1.msra.mxu0 0.0
      %2375 = vmatprep.mubr.f32.mxu0 0.0
      %2376 = vmatmul.mubr.f32.gmra.mrb[0].mxu0 %v2306
      %v2377 = vpop.f32.mrb[0].mxu0
      %v2378 = vadd.f32 0.0, %v2377
      %v2379 = vpop.f32.mrb[0].mxu0
      %2380 = vmatprep.mubr.f32.mxu0 0.0
      %2381 = vmatmul.mubr.f32.gmra.mrb[0].mxu0 %v2309
      %v2382 = vpop.f32.mrb[0].mxu0
      %v2383 = vadd.f32 0.0, %v2382
      %v2384 = vpop.f32.mrb[0].mxu0
      %2385 = vdwg.mxu0
      %v2387 = vsel %vm1379, %v2226, 0
      %v2390 = vsel %vm1379, %v2227, 0
      %2392 = vmatprep.subr.mxu0 0.0
      %2393 = vmatpush1.msra.mxu0 %v2223
      %2394 = vmatprep.subr.mxu0 0.0
      %2395 = vmatpush1.msra.mxu0 0.0
      %2396 = vmatprep.subr.mxu0 0.0
      %2397 = vmatpush1.msra.mxu0 0.0
      %2398 = vmatprep.subr.mxu0 0.0
      %2399 = vmatpush1.msra.mxu0 0.0
      %2400 = vmatprep.subr.mxu0 0.0
      %2401 = vmatpush1.msra.mxu0 0.0
      %2402 = vmatprep.subr.mxu0 0.0
      %2403 = vmatpush1.msra.mxu0 0.0
      %2404 = vmatprep.subr.mxu0 0.0
      %2405 = vmatpush1.msra.mxu0 0.0
      %2406 = vmatprep.subr.mxu0 0.0
      %2407 = vmatpush1.msra.mxu0 0.0
      %2408 = vmatprep.subr.mxu0 0.0
      %2409 = vmatpush1.msra.mxu0 0.0
      %2410 = vmatprep.subr.mxu0 0.0
      %2411 = vmatpush1.msra.mxu0 0.0
      %2412 = vmatprep.subr.mxu0 0.0
      %2413 = vmatpush1.msra.mxu0 0.0
      %2414 = vmatprep.subr.mxu0 0.0
      %2415 = vmatpush1.msra.mxu0 0.0
      %2416 = vmatprep.subr.mxu0 0.0
      %2417 = vmatpush1.msra.mxu0 0.0
      %2418 = vmatprep.subr.mxu0 0.0
      %2419 = vmatpush1.msra.mxu0 0.0
      %2420 = vmatprep.subr.mxu0 0.0
      %2421 = vmatpush1.msra.mxu0 0.0
      %2422 = vmatprep.subr.mxu0 0.0
      %2423 = vmatpush1.msra.mxu0 0.0
      %2424 = vmatprep.subr.mxu0 0.0
      %2425 = vmatpush1.msra.mxu0 0.0
      %2426 = vmatprep.subr.mxu0 0.0
      %2427 = vmatpush1.msra.mxu0 0.0
      %2428 = vmatprep.subr.mxu0 0.0
      %2429 = vmatpush1.msra.mxu0 0.0
      %2430 = vmatprep.subr.mxu0 0.0
      %2431 = vmatpush1.msra.mxu0 0.0
      %2432 = vmatprep.subr.mxu0 0.0
      %2433 = vmatpush1.msra.mxu0 0.0
      %2434 = vmatprep.subr.mxu0 0.0
      %2435 = vmatpush1.msra.mxu0 0.0
      %2436 = vmatprep.subr.mxu0 0.0
      %2437 = vmatpush1.msra.mxu0 0.0
      %2438 = vmatprep.subr.mxu0 0.0
      %2439 = vmatpush1.msra.mxu0 0.0
      %2440 = vmatprep.subr.mxu0 0.0
      %2441 = vmatpush1.msra.mxu0 0.0
      %2442 = vmatprep.subr.mxu0 0.0
      %2443 = vmatpush1.msra.mxu0 0.0
      %2444 = vmatprep.subr.mxu0 0.0
      %2445 = vmatpush1.msra.mxu0 0.0
      %2446 = vmatprep.subr.mxu0 0.0
      %2447 = vmatpush1.msra.mxu0 0.0
      %2448 = vmatprep.subr.mxu0 0.0
      %2449 = vmatpush1.msra.mxu0 0.0
      %2450 = vmatprep.subr.mxu0 0.0
      %2451 = vmatpush1.msra.mxu0 0.0
      %2452 = vmatprep.subr.mxu0 0.0
      %2453 = vmatpush1.msra.mxu0 0.0
      %2454 = vmatprep.subr.mxu0 0.0
      %2455 = vmatpush1.msra.mxu0 0.0
      %2456 = vmatprep.mubr.f32.mxu0 0.0
      %2457 = vmatmul.mubr.f32.gmra.mrb[0].mxu0 %v2387
      %v2458 = vpop.f32.mrb[0].mxu0
      %v2459 = vadd.f32 %v2378, %v2458
      %v2460 = vpop.f32.mrb[0].mxu0
      %2461 = vmatprep.mubr.f32.mxu0 0.0
      %2462 = vmatmul.mubr.f32.gmra.mrb[0].mxu0 %v2390
      %v2463 = vpop.f32.mrb[0].mxu0
      %v2464 = vadd.f32 %v2383, %v2463
      %v2465 = vpop.f32.mrb[0].mxu0
      %2466 = vdwg.mxu0
      %s2467 = scalar_lea.vmem %s7, 48
      %v2468 = vld [vmem:[%s2467] sm:$0xff]
      %v2469 = vld [vmem:[%s2467 + $0x8] sm:$0xff]
      %v2470 = vld [vmem:[%s2467 + $0x10] sm:$0xff]
      %2471 = vmatprep.subr.mxu0 0.0
      %2472 = vmatpush1.msra.mxu0 %v2468
      %2473 = vmatprep.subr.mxu0 0.0
      %2474 = vmatpush1.msra.mxu0 %v2469
      %2475 = vmatprep.subr.mxu0 0.0
      %2476 = vmatpush1.msra.mxu0 %v2470
      %2477 = vmatprep.subr.mxu0 0.0
      %2478 = vmatpush1.msra.mxu0 0.0
      %2479 = vmatprep.subr.mxu0 0.0
      %2480 = vmatpush1.msra.mxu0 0.0
      %2481 = vmatprep.subr.mxu0 0.0
      %2482 = vmatpush1.msra.mxu0 0.0
      %2483 = vmatprep.subr.mxu0 0.0
      %2484 = vmatpush1.msra.mxu0 0.0
      %2485 = vmatprep.subr.mxu0 0.0
      %2486 = vmatpush1.msra.mxu0 0.0
      %2487 = vmatprep.subr.mxu0 0.0
      %2488 = vmatpush1.msra.mxu0 0.0
      %2489 = vmatprep.subr.mxu0 0.0
      %2490 = vmatpush1.msra.mxu0 0.0
      %2491 = vmatprep.subr.mxu0 0.0
      %2492 = vmatpush1.msra.mxu0 0.0
      %2493 = vmatprep.subr.mxu0 0.0
      %2494 = vmatpush1.msra.mxu0 0.0
      %2495 = vmatprep.subr.mxu0 0.0
      %2496 = vmatpush1.msra.mxu0 0.0
      %2497 = vmatprep.subr.mxu0 0.0
      %2498 = vmatpush1.msra.mxu0 0.0
      %2499 = vmatprep.subr.mxu0 0.0
      %2500 = vmatpush1.msra.mxu0 0.0
      %2501 = vmatprep.subr.mxu0 0.0
      %2502 = vmatpush1.msra.mxu0 0.0
      %2503 = vmatprep.subr.mxu0 0.0
      %2504 = vmatpush1.msra.mxu0 0.0
      %2505 = vmatprep.subr.mxu0 0.0
      %2506 = vmatpush1.msra.mxu0 0.0
      %2507 = vmatprep.subr.mxu0 0.0
      %2508 = vmatpush1.msra.mxu0 0.0
      %2509 = vmatprep.subr.mxu0 0.0
      %2510 = vmatpush1.msra.mxu0 0.0
      %2511 = vmatprep.subr.mxu0 0.0
      %2512 = vmatpush1.msra.mxu0 0.0
      %2513 = vmatprep.subr.mxu0 0.0
      %2514 = vmatpush1.msra.mxu0 0.0
      %2515 = vmatprep.subr.mxu0 0.0
      %2516 = vmatpush1.msra.mxu0 0.0
      %2517 = vmatprep.subr.mxu0 0.0
      %2518 = vmatpush1.msra.mxu0 0.0
      %2519 = vmatprep.subr.mxu0 0.0
      %2520 = vmatpush1.msra.mxu0 0.0
      %2521 = vmatprep.subr.mxu0 0.0
      %2522 = vmatpush1.msra.mxu0 0.0
      %2523 = vmatprep.subr.mxu0 0.0
      %2524 = vmatpush1.msra.mxu0 0.0
      %2525 = vmatprep.subr.mxu0 0.0
      %2526 = vmatpush1.msra.mxu0 0.0
      %2527 = vmatprep.subr.mxu0 0.0
      %2528 = vmatpush1.msra.mxu0 0.0
      %2529 = vmatprep.subr.mxu0 0.0
      %2530 = vmatpush1.msra.mxu0 0.0
      %2531 = vmatprep.subr.mxu0 0.0
      %2532 = vmatpush1.msra.mxu0 0.0
      %2533 = vmatprep.subr.mxu0 0.0
      %2534 = vmatpush1.msra.mxu0 0.0
      %2535 = vmatprep.mubr.f32.mxu0 0.0
      %2536 = vmatmul.mubr.f32.gmra.mrb[0].mxu0 %v1230
      %v2537 = vpop.f32.mrb[0].mxu0
      %v2538 = vadd.f32 0.0, %v2537
      %v2539 = vpop.f32.mrb[0].mxu0
      %2540 = vdwg.mxu0
      %s2541 = scalar_lea.vmem %s8, 32
      %v2542 = vld [vmem:[%s2541] sm:$0xff]
      %v2543 = vld [vmem:[%s2541 + $0x8] sm:$0xff]
      %v2545 = vsel %vm1379, %v2542, 0
      %v2548 = vsel %vm1379, %v2543, 0
      %2550 = vmatprep.subr.mxu0 0.0
      %2551 = vmatpush1.msra.mxu0 %v2538
      %2552 = vmatprep.subr.mxu0 0.0
      %2553 = vmatpush1.msra.mxu0 0.0
      %2554 = vmatprep.subr.mxu0 0.0
      %2555 = vmatpush1.msra.mxu0 0.0
      %2556 = vmatprep.subr.mxu0 0.0
      %2557 = vmatpush1.msra.mxu0 0.0
      %2558 = vmatprep.subr.mxu0 0.0
      %2559 = vmatpush1.msra.mxu0 0.0
      %2560 = vmatprep.subr.mxu0 0.0
      %2561 = vmatpush1.msra.mxu0 0.0
      %2562 = vmatprep.subr.mxu0 0.0
      %2563 = vmatpush1.msra.mxu0 0.0
      %2564 = vmatprep.subr.mxu0 0.0
      %2565 = vmatpush1.msra.mxu0 0.0
      %2566 = vmatprep.subr.mxu0 0.0
      %2567 = vmatpush1.msra.mxu0 0.0
      %2568 = vmatprep.subr.mxu0 0.0
      %2569 = vmatpush1.msra.mxu0 0.0
      %2570 = vmatprep.subr.mxu0 0.0
      %2571 = vmatpush1.msra.mxu0 0.0
      %2572 = vmatprep.subr.mxu0 0.0
      %2573 = vmatpush1.msra.mxu0 0.0
      %2574 = vmatprep.subr.mxu0 0.0
      %2575 = vmatpush1.msra.mxu0 0.0
      %2576 = vmatprep.subr.mxu0 0.0
      %2577 = vmatpush1.msra.mxu0 0.0
      %2578 = vmatprep.subr.mxu0 0.0
      %2579 = vmatpush1.msra.mxu0 0.0
      %2580 = vmatprep.subr.mxu0 0.0
      %2581 = vmatpush1.msra.mxu0 0.0
      %2582 = vmatprep.subr.mxu0 0.0
      %2583 = vmatpush1.msra.mxu0 0.0
      %2584 = vmatprep.subr.mxu0 0.0
      %2585 = vmatpush1.msra.mxu0 0.0
      %2586 = vmatprep.subr.mxu0 0.0
      %2587 = vmatpush1.msra.mxu0 0.0
      %2588 = vmatprep.subr.mxu0 0.0
      %2589 = vmatpush1.msra.mxu0 0.0
      %2590 = vmatprep.subr.mxu0 0.0
      %2591 = vmatpush1.msra.mxu0 0.0
      %2592 = vmatprep.subr.mxu0 0.0
      %2593 = vmatpush1.msra.mxu0 0.0
      %2594 = vmatprep.subr.mxu0 0.0
      %2595 = vmatpush1.msra.mxu0 0.0
      %2596 = vmatprep.subr.mxu0 0.0
      %2597 = vmatpush1.msra.mxu0 0.0
      %2598 = vmatprep.subr.mxu0 0.0
      %2599 = vmatpush1.msra.mxu0 0.0
      %2600 = vmatprep.subr.mxu0 0.0
      %2601 = vmatpush1.msra.mxu0 0.0
      %2602 = vmatprep.subr.mxu0 0.0
      %2603 = vmatpush1.msra.mxu0 0.0
      %2604 = vmatprep.subr.mxu0 0.0
      %2605 = vmatpush1.msra.mxu0 0.0
      %2606 = vmatprep.subr.mxu0 0.0
      %2607 = vmatpush1.msra.mxu0 0.0
      %2608 = vmatprep.subr.mxu0 0.0
      %2609 = vmatpush1.msra.mxu0 0.0
      %2610 = vmatprep.subr.mxu0 0.0
      %2611 = vmatpush1.msra.mxu0 0.0
      %2612 = vmatprep.subr.mxu0 0.0
      %2613 = vmatpush1.msra.mxu0 0.0
      %2614 = vmatprep.mubr.f32.mxu0 0.0
      %2615 = vmatmul.mubr.f32.gmra.mrb[0].mxu0 %v2545
      %v2616 = vpop.f32.mrb[0].mxu0
      %v2617 = vadd.f32 0.0, %v2616
      %v2618 = vpop.f32.mrb[0].mxu0
      %2619 = vmatprep.mubr.f32.mxu0 0.0
      %2620 = vmatmul.mubr.f32.gmra.mrb[0].mxu0 %v2548
      %v2621 = vpop.f32.mrb[0].mxu0
      %v2622 = vadd.f32 0.0, %v2621
      %v2623 = vpop.f32.mrb[0].mxu0
      %2624 = vdwg.mxu0
      %v2625 = vadd.f32 %v2459, %v2617
      %v2626 = vadd.f32 %v2464, %v2622
      %v2627 = vlaneseq
      %v2628 = vshrl.u32 %v2627, 7
      %v2629 = vsub.s32 3, %v2628
      %v2630 = vrot.slane %v738, %v2629
      %v2631 = vadd.f32 %v2625, %v2630
      %v2632 = vadd.f32 %v2626, %v2630
      %v2633 = vsub.f32 %v740, %v2631
      %v2634 = vsub.f32 %v741, %v2632
      %v2635 = vld [vmem:[%s9] sm:$0xff]
      %v2636 = vld [vmem:[%s9 + $0x8] sm:$0xf]
      %v2638 = vsel %vm1687, %v2636, 0
      %2640 = vmatprep.subr.mxu0 0.0
      %2641 = vmatpush1.msra.mxu0 %v2635
      %2642 = vmatprep.subr.mxu0 0.0
      %2643 = vmatpush1.msra.mxu0 %v2638
      %2644 = vmatprep.subr.mxu0 0.0
      %2645 = vmatpush1.msra.mxu0 0.0
      %2646 = vmatprep.subr.mxu0 0.0
      %2647 = vmatpush1.msra.mxu0 0.0
      %2648 = vmatprep.subr.mxu0 0.0
      %2649 = vmatpush1.msra.mxu0 0.0
      %2650 = vmatprep.subr.mxu0 0.0
      %2651 = vmatpush1.msra.mxu0 0.0
      %2652 = vmatprep.subr.mxu0 0.0
      %2653 = vmatpush1.msra.mxu0 0.0
      %2654 = vmatprep.subr.mxu0 0.0
      %2655 = vmatpush1.msra.mxu0 0.0
      %2656 = vmatprep.subr.mxu0 0.0
      %2657 = vmatpush1.msra.mxu0 0.0
      %2658 = vmatprep.subr.mxu0 0.0
      %2659 = vmatpush1.msra.mxu0 0.0
      %2660 = vmatprep.subr.mxu0 0.0
      %2661 = vmatpush1.msra.mxu0 0.0
      %2662 = vmatprep.subr.mxu0 0.0
      %2663 = vmatpush1.msra.mxu0 0.0
      %2664 = vmatprep.subr.mxu0 0.0
      %2665 = vmatpush1.msra.mxu0 0.0
      %2666 = vmatprep.subr.mxu0 0.0
      %2667 = vmatpush1.msra.mxu0 0.0
      %2668 = vmatprep.subr.mxu0 0.0
      %2669 = vmatpush1.msra.mxu0 0.0
      %2670 = vmatprep.subr.mxu0 0.0
      %2671 = vmatpush1.msra.mxu0 0.0
      %2672 = vmatprep.subr.mxu0 0.0
      %2673 = vmatpush1.msra.mxu0 0.0
      %2674 = vmatprep.subr.mxu0 0.0
      %2675 = vmatpush1.msra.mxu0 0.0
      %2676 = vmatprep.subr.mxu0 0.0
      %2677 = vmatpush1.msra.mxu0 0.0
      %2678 = vmatprep.subr.mxu0 0.0
      %2679 = vmatpush1.msra.mxu0 0.0
      %2680 = vmatprep.subr.mxu0 0.0
      %2681 = vmatpush1.msra.mxu0 0.0
      %2682 = vmatprep.subr.mxu0 0.0
      %2683 = vmatpush1.msra.mxu0 0.0
      %2684 = vmatprep.subr.mxu0 0.0
      %2685 = vmatpush1.msra.mxu0 0.0
      %2686 = vmatprep.subr.mxu0 0.0
      %2687 = vmatpush1.msra.mxu0 0.0
      %2688 = vmatprep.subr.mxu0 0.0
      %2689 = vmatpush1.msra.mxu0 0.0
      %2690 = vmatprep.subr.mxu0 0.0
      %2691 = vmatpush1.msra.mxu0 0.0
      %2692 = vmatprep.subr.mxu0 0.0
      %2693 = vmatpush1.msra.mxu0 0.0
      %2694 = vmatprep.subr.mxu0 0.0
      %2695 = vmatpush1.msra.mxu0 0.0
      %2696 = vmatprep.subr.mxu0 0.0
      %2697 = vmatpush1.msra.mxu0 0.0
      %2698 = vmatprep.subr.mxu0 0.0
      %2699 = vmatpush1.msra.mxu0 0.0
      %2700 = vmatprep.subr.mxu0 0.0
      %2701 = vmatpush1.msra.mxu0 0.0
      %2702 = vmatprep.subr.mxu0 0.0
      %2703 = vmatpush1.msra.mxu0 0.0
      %2704 = vmatprep.mubr.f32.mxu0 0.0
      %2705 = vmatmul.mubr.f32.gmra.mrb[0].mxu0 %v1685
      %v2706 = vpop.f32.mrb[0].mxu0
      %v2707 = vadd.f32 0.0, %v2706
      %v2708 = vpop.f32.mrb[0].mxu0
      %2709 = vdwg.mxu0
      %v2710 = vld [vmem:[%s10] sm:$0xff]
      %s2711 = scalar_lea.vmem %s9, 16
      %v2712 = vld [vmem:[%s2711] sm:$0xff]
      %v2713 = vld [vmem:[%s2711 + $0x8] sm:$0xf]
      %v2715 = vsel %vm1687, %v2713, 0
      %2717 = vmatprep.subr.mxu0 0.0
      %2718 = vmatpush1.msra.mxu0 %v2712
      %2719 = vmatprep.subr.mxu0 0.0
      %2720 = vmatpush1.msra.mxu0 %v2715
      %2721 = vmatprep.subr.mxu0 0.0
      %2722 = vmatpush1.msra.mxu0 0.0
      %2723 = vmatprep.subr.mxu0 0.0
      %2724 = vmatpush1.msra.mxu0 0.0
      %2725 = vmatprep.subr.mxu0 0.0
      %2726 = vmatpush1.msra.mxu0 0.0
      %2727 = vmatprep.subr.mxu0 0.0
      %2728 = vmatpush1.msra.mxu0 0.0
      %2729 = vmatprep.subr.mxu0 0.0
      %2730 = vmatpush1.msra.mxu0 0.0
      %2731 = vmatprep.subr.mxu0 0.0
      %2732 = vmatpush1.msra.mxu0 0.0
      %2733 = vmatprep.subr.mxu0 0.0
      %2734 = vmatpush1.msra.mxu0 0.0
      %2735 = vmatprep.subr.mxu0 0.0
      %2736 = vmatpush1.msra.mxu0 0.0
      %2737 = vmatprep.subr.mxu0 0.0
      %2738 = vmatpush1.msra.mxu0 0.0
      %2739 = vmatprep.subr.mxu0 0.0
      %2740 = vmatpush1.msra.mxu0 0.0
      %2741 = vmatprep.subr.mxu0 0.0
      %2742 = vmatpush1.msra.mxu0 0.0
      %2743 = vmatprep.subr.mxu0 0.0
      %2744 = vmatpush1.msra.mxu0 0.0
      %2745 = vmatprep.subr.mxu0 0.0
      %2746 = vmatpush1.msra.mxu0 0.0
      %2747 = vmatprep.subr.mxu0 0.0
      %2748 = vmatpush1.msra.mxu0 0.0
      %2749 = vmatprep.subr.mxu0 0.0
      %2750 = vmatpush1.msra.mxu0 0.0
      %2751 = vmatprep.subr.mxu0 0.0
      %2752 = vmatpush1.msra.mxu0 0.0
      %2753 = vmatprep.subr.mxu0 0.0
      %2754 = vmatpush1.msra.mxu0 0.0
      %2755 = vmatprep.subr.mxu0 0.0
      %2756 = vmatpush1.msra.mxu0 0.0
      %2757 = vmatprep.subr.mxu0 0.0
      %2758 = vmatpush1.msra.mxu0 0.0
      %2759 = vmatprep.subr.mxu0 0.0
      %2760 = vmatpush1.msra.mxu0 0.0
      %2761 = vmatprep.subr.mxu0 0.0
      %2762 = vmatpush1.msra.mxu0 0.0
      %2763 = vmatprep.subr.mxu0 0.0
      %2764 = vmatpush1.msra.mxu0 0.0
      %2765 = vmatprep.subr.mxu0 0.0
      %2766 = vmatpush1.msra.mxu0 0.0
      %2767 = vmatprep.subr.mxu0 0.0
      %2768 = vmatpush1.msra.mxu0 0.0
      %2769 = vmatprep.subr.mxu0 0.0
      %2770 = vmatpush1.msra.mxu0 0.0
      %2771 = vmatprep.subr.mxu0 0.0
      %2772 = vmatpush1.msra.mxu0 0.0
      %2773 = vmatprep.subr.mxu0 0.0
      %2774 = vmatpush1.msra.mxu0 0.0
      %2775 = vmatprep.subr.mxu0 0.0
      %2776 = vmatpush1.msra.mxu0 0.0
      %2777 = vmatprep.subr.mxu0 0.0
      %2778 = vmatpush1.msra.mxu0 0.0
      %2779 = vmatprep.subr.mxu0 0.0
      %2780 = vmatpush1.msra.mxu0 0.0
      %2781 = vmatprep.mubr.f32.mxu0 0.0
      %2782 = vmatmul.mubr.f32.gmra.mrb[0].mxu0 %v1685
      %v2783 = vpop.f32.mrb[0].mxu0
      %v2784 = vadd.f32 0.0, %v2783
      %v2785 = vpop.f32.mrb[0].mxu0
      %2786 = vdwg.mxu0
      %s2787 = scalar_lea.vmem %s10, 8
      %v2788 = vld [vmem:[%s2787] sm:$0xff]
      %v2790 = vsel %vm1840, %v2788, 0
      %v2793 = vsel %vm1687, %v2784, 0
      %2795 = vmatprep.subr.mxu0 0.0
      %2796 = vmatpush1.msra.mxu0 %v2793
      %2797 = vmatprep.subr.mxu0 0.0
      %2798 = vmatpush1.msra.mxu0 0.0
      %2799 = vmatprep.subr.mxu0 0.0
      %2800 = vmatpush1.msra.mxu0 0.0
      %2801 = vmatprep.subr.mxu0 0.0
      %2802 = vmatpush1.msra.mxu0 0.0
      %2803 = vmatprep.subr.mxu0 0.0
      %2804 = vmatpush1.msra.mxu0 0.0
      %2805 = vmatprep.subr.mxu0 0.0
      %2806 = vmatpush1.msra.mxu0 0.0
      %2807 = vmatprep.subr.mxu0 0.0
      %2808 = vmatpush1.msra.mxu0 0.0
      %2809 = vmatprep.subr.mxu0 0.0
      %2810 = vmatpush1.msra.mxu0 0.0
      %2811 = vmatprep.subr.mxu0 0.0
      %2812 = vmatpush1.msra.mxu0 0.0
      %2813 = vmatprep.subr.mxu0 0.0
      %2814 = vmatpush1.msra.mxu0 0.0
      %2815 = vmatprep.subr.mxu0 0.0
      %2816 = vmatpush1.msra.mxu0 0.0
      %2817 = vmatprep.subr.mxu0 0.0
      %2818 = vmatpush1.msra.mxu0 0.0
      %2819 = vmatprep.subr.mxu0 0.0
      %2820 = vmatpush1.msra.mxu0 0.0
      %2821 = vmatprep.subr.mxu0 0.0
      %2822 = vmatpush1.msra.mxu0 0.0
      %2823 = vmatprep.subr.mxu0 0.0
      %2824 = vmatpush1.msra.mxu0 0.0
      %2825 = vmatprep.subr.mxu0 0.0
      %2826 = vmatpush1.msra.mxu0 0.0
      %2827 = vmatprep.subr.mxu0 0.0
      %2828 = vmatpush1.msra.mxu0 0.0
      %2829 = vmatprep.subr.mxu0 0.0
      %2830 = vmatpush1.msra.mxu0 0.0
      %2831 = vmatprep.subr.mxu0 0.0
      %2832 = vmatpush1.msra.mxu0 0.0
      %2833 = vmatprep.subr.mxu0 0.0
      %2834 = vmatpush1.msra.mxu0 0.0
      %2835 = vmatprep.subr.mxu0 0.0
      %2836 = vmatpush1.msra.mxu0 0.0
      %2837 = vmatprep.subr.mxu0 0.0
      %2838 = vmatpush1.msra.mxu0 0.0
      %2839 = vmatprep.subr.mxu0 0.0
      %2840 = vmatpush1.msra.mxu0 0.0
      %2841 = vmatprep.subr.mxu0 0.0
      %2842 = vmatpush1.msra.mxu0 0.0
      %2843 = vmatprep.subr.mxu0 0.0
      %2844 = vmatpush1.msra.mxu0 0.0
      %2845 = vmatprep.subr.mxu0 0.0
      %2846 = vmatpush1.msra.mxu0 0.0
      %2847 = vmatprep.subr.mxu0 0.0
      %2848 = vmatpush1.msra.mxu0 0.0
      %2849 = vmatprep.subr.mxu0 0.0
      %2850 = vmatpush1.msra.mxu0 0.0
      %2851 = vmatprep.subr.mxu0 0.0
      %2852 = vmatpush1.msra.mxu0 0.0
      %2853 = vmatprep.subr.mxu0 0.0
      %2854 = vmatpush1.msra.mxu0 0.0
      %2855 = vmatprep.subr.mxu0 0.0
      %2856 = vmatpush1.msra.mxu0 0.0
      %2857 = vmatprep.subr.mxu0 0.0
      %2858 = vmatpush1.msra.mxu0 0.0
      %2859 = vmatprep.mubr.f32.mxu0 0.0
      %2860 = vmatmul.mubr.f32.gmra.mrb[0].mxu0 %v2790
      %v2861 = vpop.f32.mrb[0].mxu0
      %v2862 = vadd.f32 0.0, %v2861
      %v2863 = vpop.f32.mrb[0].mxu0
      %2864 = vdwg.mxu0
      %v2866 = vsel %vm1840, %v2710, 0
      %v2869 = vsel %vm1687, %v2707, 0
      %2871 = vmatprep.subr.mxu0 0.0
      %2872 = vmatpush1.msra.mxu0 %v2869
      %2873 = vmatprep.subr.mxu0 0.0
      %2874 = vmatpush1.msra.mxu0 0.0
      %2875 = vmatprep.subr.mxu0 0.0
      %2876 = vmatpush1.msra.mxu0 0.0
      %2877 = vmatprep.subr.mxu0 0.0
      %2878 = vmatpush1.msra.mxu0 0.0
      %2879 = vmatprep.subr.mxu0 0.0
      %2880 = vmatpush1.msra.mxu0 0.0
      %2881 = vmatprep.subr.mxu0 0.0
      %2882 = vmatpush1.msra.mxu0 0.0
      %2883 = vmatprep.subr.mxu0 0.0
      %2884 = vmatpush1.msra.mxu0 0.0
      %2885 = vmatprep.subr.mxu0 0.0
      %2886 = vmatpush1.msra.mxu0 0.0
      %2887 = vmatprep.subr.mxu0 0.0
      %2888 = vmatpush1.msra.mxu0 0.0
      %2889 = vmatprep.subr.mxu0 0.0
      %2890 = vmatpush1.msra.mxu0 0.0
      %2891 = vmatprep.subr.mxu0 0.0
      %2892 = vmatpush1.msra.mxu0 0.0
      %2893 = vmatprep.subr.mxu0 0.0
      %2894 = vmatpush1.msra.mxu0 0.0
      %2895 = vmatprep.subr.mxu0 0.0
      %2896 = vmatpush1.msra.mxu0 0.0
      %2897 = vmatprep.subr.mxu0 0.0
      %2898 = vmatpush1.msra.mxu0 0.0
      %2899 = vmatprep.subr.mxu0 0.0
      %2900 = vmatpush1.msra.mxu0 0.0
      %2901 = vmatprep.subr.mxu0 0.0
      %2902 = vmatpush1.msra.mxu0 0.0
      %2903 = vmatprep.subr.mxu0 0.0
      %2904 = vmatpush1.msra.mxu0 0.0
      %2905 = vmatprep.subr.mxu0 0.0
      %2906 = vmatpush1.msra.mxu0 0.0
      %2907 = vmatprep.subr.mxu0 0.0
      %2908 = vmatpush1.msra.mxu0 0.0
      %2909 = vmatprep.subr.mxu0 0.0
      %2910 = vmatpush1.msra.mxu0 0.0
      %2911 = vmatprep.subr.mxu0 0.0
      %2912 = vmatpush1.msra.mxu0 0.0
      %2913 = vmatprep.subr.mxu0 0.0
      %2914 = vmatpush1.msra.mxu0 0.0
      %2915 = vmatprep.subr.mxu0 0.0
      %2916 = vmatpush1.msra.mxu0 0.0
      %2917 = vmatprep.subr.mxu0 0.0
      %2918 = vmatpush1.msra.mxu0 0.0
      %2919 = vmatprep.subr.mxu0 0.0
      %2920 = vmatpush1.msra.mxu0 0.0
      %2921 = vmatprep.subr.mxu0 0.0
      %2922 = vmatpush1.msra.mxu0 0.0
      %2923 = vmatprep.subr.mxu0 0.0
      %2924 = vmatpush1.msra.mxu0 0.0
      %2925 = vmatprep.subr.mxu0 0.0
      %2926 = vmatpush1.msra.mxu0 0.0
      %2927 = vmatprep.subr.mxu0 0.0
      %2928 = vmatpush1.msra.mxu0 0.0
      %2929 = vmatprep.subr.mxu0 0.0
      %2930 = vmatpush1.msra.mxu0 0.0
      %2931 = vmatprep.subr.mxu0 0.0
      %2932 = vmatpush1.msra.mxu0 0.0
      %2933 = vmatprep.subr.mxu0 0.0
      %2934 = vmatpush1.msra.mxu0 0.0
      %2935 = vmatprep.mubr.f32.mxu0 0.0
      %2936 = vmatmul.mubr.f32.gmra.mrb[0].mxu0 %v2866
      %v2937 = vpop.f32.mrb[0].mxu0
      %v2938 = vadd.f32 %v2862, %v2937
      %v2939 = vpop.f32.mrb[0].mxu0
      %2940 = vdwg.mxu0
      %s2941 = scalar_lea.vmem %s9, 32
      %v2942 = vld [vmem:[%s2941] sm:$0xff]
      %v2943 = vld [vmem:[%s2941 + $0x8] sm:$0xf]
      %v2945 = vsel %vm1687, %v2943, 0
      %2947 = vmatprep.subr.mxu0 0.0
      %2948 = vmatpush1.msra.mxu0 %v2942
      %2949 = vmatprep.subr.mxu0 0.0
      %2950 = vmatpush1.msra.mxu0 %v2945
      %2951 = vmatprep.subr.mxu0 0.0
      %2952 = vmatpush1.msra.mxu0 0.0
      %2953 = vmatprep.subr.mxu0 0.0
      %2954 = vmatpush1.msra.mxu0 0.0
      %2955 = vmatprep.subr.mxu0 0.0
      %2956 = vmatpush1.msra.mxu0 0.0
      %2957 = vmatprep.subr.mxu0 0.0
      %2958 = vmatpush1.msra.mxu0 0.0
      %2959 = vmatprep.subr.mxu0 0.0
      %2960 = vmatpush1.msra.mxu0 0.0
      %2961 = vmatprep.subr.mxu0 0.0
      %2962 = vmatpush1.msra.mxu0 0.0
      %2963 = vmatprep.subr.mxu0 0.0
      %2964 = vmatpush1.msra.mxu0 0.0
      %2965 = vmatprep.subr.mxu0 0.0
      %2966 = vmatpush1.msra.mxu0 0.0
      %2967 = vmatprep.subr.mxu0 0.0
      %2968 = vmatpush1.msra.mxu0 0.0
      %2969 = vmatprep.subr.mxu0 0.0
      %2970 = vmatpush1.msra.mxu0 0.0
      %2971 = vmatprep.subr.mxu0 0.0
      %2972 = vmatpush1.msra.mxu0 0.0
      %2973 = vmatprep.subr.mxu0 0.0
      %2974 = vmatpush1.msra.mxu0 0.0
      %2975 = vmatprep.subr.mxu0 0.0
      %2976 = vmatpush1.msra.mxu0 0.0
      %2977 = vmatprep.subr.mxu0 0.0
      %2978 = vmatpush1.msra.mxu0 0.0
      %2979 = vmatprep.subr.mxu0 0.0
      %2980 = vmatpush1.msra.mxu0 0.0
      %2981 = vmatprep.subr.mxu0 0.0
      %2982 = vmatpush1.msra.mxu0 0.0
      %2983 = vmatprep.subr.mxu0 0.0
      %2984 = vmatpush1.msra.mxu0 0.0
      %2985 = vmatprep.subr.mxu0 0.0
      %2986 = vmatpush1.msra.mxu0 0.0
      %2987 = vmatprep.subr.mxu0 0.0
      %2988 = vmatpush1.msra.mxu0 0.0
      %2989 = vmatprep.subr.mxu0 0.0
      %2990 = vmatpush1.msra.mxu0 0.0
      %2991 = vmatprep.subr.mxu0 0.0
      %2992 = vmatpush1.msra.mxu0 0.0
      %2993 = vmatprep.subr.mxu0 0.0
      %2994 = vmatpush1.msra.mxu0 0.0
      %2995 = vmatprep.subr.mxu0 0.0
      %2996 = vmatpush1.msra.mxu0 0.0
      %2997 = vmatprep.subr.mxu0 0.0
      %2998 = vmatpush1.msra.mxu0 0.0
      %2999 = vmatprep.subr.mxu0 0.0
      %3000 = vmatpush1.msra.mxu0 0.0
      %3001 = vmatprep.subr.mxu0 0.0
      %3002 = vmatpush1.msra.mxu0 0.0
      %3003 = vmatprep.subr.mxu0 0.0
      %3004 = vmatpush1.msra.mxu0 0.0
      %3005 = vmatprep.subr.mxu0 0.0
      %3006 = vmatpush1.msra.mxu0 0.0
      %3007 = vmatprep.subr.mxu0 0.0
      %3008 = vmatpush1.msra.mxu0 0.0
      %3009 = vmatprep.subr.mxu0 0.0
      %3010 = vmatpush1.msra.mxu0 0.0
      %3011 = vmatprep.mubr.f32.mxu0 0.0
      %3012 = vmatmul.mubr.f32.gmra.mrb[0].mxu0 %v1685
      %v3013 = vpop.f32.mrb[0].mxu0
      %v3014 = vadd.f32 0.0, %v3013
      %v3015 = vpop.f32.mrb[0].mxu0
      %3016 = vdwg.mxu0
      %s3017 = scalar_lea.vmem %s10, 16
      %v3018 = vld [vmem:[%s3017] sm:$0xff]
      %v3020 = vsel %vm1840, %v3018, 0
      %v3023 = vsel %vm1687, %v3014, 0
      %3025 = vmatprep.subr.mxu0 0.0
      %3026 = vmatpush1.msra.mxu0 %v3023
      %3027 = vmatprep.subr.mxu0 0.0
      %3028 = vmatpush1.msra.mxu0 0.0
      %3029 = vmatprep.subr.mxu0 0.0
      %3030 = vmatpush1.msra.mxu0 0.0
      %3031 = vmatprep.subr.mxu0 0.0
      %3032 = vmatpush1.msra.mxu0 0.0
      %3033 = vmatprep.subr.mxu0 0.0
      %3034 = vmatpush1.msra.mxu0 0.0
      %3035 = vmatprep.subr.mxu0 0.0
      %3036 = vmatpush1.msra.mxu0 0.0
      %3037 = vmatprep.subr.mxu0 0.0
      %3038 = vmatpush1.msra.mxu0 0.0
      %3039 = vmatprep.subr.mxu0 0.0
      %3040 = vmatpush1.msra.mxu0 0.0
      %3041 = vmatprep.subr.mxu0 0.0
      %3042 = vmatpush1.msra.mxu0 0.0
      %3043 = vmatprep.subr.mxu0 0.0
      %3044 = vmatpush1.msra.mxu0 0.0
      %3045 = vmatprep.subr.mxu0 0.0
      %3046 = vmatpush1.msra.mxu0 0.0
      %3047 = vmatprep.subr.mxu0 0.0
      %3048 = vmatpush1.msra.mxu0 0.0
      %3049 = vmatprep.subr.mxu0 0.0
      %3050 = vmatpush1.msra.mxu0 0.0
      %3051 = vmatprep.subr.mxu0 0.0
      %3052 = vmatpush1.msra.mxu0 0.0
      %3053 = vmatprep.subr.mxu0 0.0
      %3054 = vmatpush1.msra.mxu0 0.0
      %3055 = vmatprep.subr.mxu0 0.0
      %3056 = vmatpush1.msra.mxu0 0.0
      %3057 = vmatprep.subr.mxu0 0.0
      %3058 = vmatpush1.msra.mxu0 0.0
      %3059 = vmatprep.subr.mxu0 0.0
      %3060 = vmatpush1.msra.mxu0 0.0
      %3061 = vmatprep.subr.mxu0 0.0
      %3062 = vmatpush1.msra.mxu0 0.0
      %3063 = vmatprep.subr.mxu0 0.0
      %3064 = vmatpush1.msra.mxu0 0.0
      %3065 = vmatprep.subr.mxu0 0.0
      %3066 = vmatpush1.msra.mxu0 0.0
      %3067 = vmatprep.subr.mxu0 0.0
      %3068 = vmatpush1.msra.mxu0 0.0
      %3069 = vmatprep.subr.mxu0 0.0
      %3070 = vmatpush1.msra.mxu0 0.0
      %3071 = vmatprep.subr.mxu0 0.0
      %3072 = vmatpush1.msra.mxu0 0.0
      %3073 = vmatprep.subr.mxu0 0.0
      %3074 = vmatpush1.msra.mxu0 0.0
      %3075 = vmatprep.subr.mxu0 0.0
      %3076 = vmatpush1.msra.mxu0 0.0
      %3077 = vmatprep.subr.mxu0 0.0
      %3078 = vmatpush1.msra.mxu0 0.0
      %3079 = vmatprep.subr.mxu0 0.0
      %3080 = vmatpush1.msra.mxu0 0.0
      %3081 = vmatprep.subr.mxu0 0.0
      %3082 = vmatpush1.msra.mxu0 0.0
      %3083 = vmatprep.subr.mxu0 0.0
      %3084 = vmatpush1.msra.mxu0 0.0
      %3085 = vmatprep.subr.mxu0 0.0
      %3086 = vmatpush1.msra.mxu0 0.0
      %3087 = vmatprep.subr.mxu0 0.0
      %3088 = vmatpush1.msra.mxu0 0.0
      %3089 = vmatprep.mubr.f32.mxu0 0.0
      %3090 = vmatmul.mubr.f32.gmra.mrb[0].mxu0 %v3020
      %v3091 = vpop.f32.mrb[0].mxu0
      %v3092 = vadd.f32 0.0, %v3091
      %v3093 = vpop.f32.mrb[0].mxu0
      %3094 = vdwg.mxu0
      %v3095 = vadd.f32 %v2938, %v3092
      %v3096 = vlaneseq
      %v3097 = vshrl.u32 %v3096, 7
      %v3098 = vsub.s32 4, %v3097
      %v3099 = vrot.slane %v738, %v3098
      %v3100 = vadd.f32 %v3095, %v3099
      %v3101 = vsub.f32 %v1224, %v3100
      %v3102 = vld [vmem:[%s11] sm:$0x3f]
      %vm3103 = vcmask 48128
      %v3105 = vsel %vm3103, %v2152, 0
      %vm3107 = vcmask 1045504
      %v3109 = vsel %vm3107, %v3102, 0
      %3111 = vmatprep.subr.mxu0 0.0
      %3112 = vmatpush1.msra.mxu0 %v3109
      %3113 = vmatprep.subr.mxu0 0.0
      %3114 = vmatpush1.msra.mxu0 0.0
      %3115 = vmatprep.subr.mxu0 0.0
      %3116 = vmatpush1.msra.mxu0 0.0
      %3117 = vmatprep.subr.mxu0 0.0
      %3118 = vmatpush1.msra.mxu0 0.0
      %3119 = vmatprep.subr.mxu0 0.0
      %3120 = vmatpush1.msra.mxu0 0.0
      %3121 = vmatprep.subr.mxu0 0.0
      %3122 = vmatpush1.msra.mxu0 0.0
      %3123 = vmatprep.subr.mxu0 0.0
      %3124 = vmatpush1.msra.mxu0 0.0
      %3125 = vmatprep.subr.mxu0 0.0
      %3126 = vmatpush1.msra.mxu0 0.0
      %3127 = vmatprep.subr.mxu0 0.0
      %3128 = vmatpush1.msra.mxu0 0.0
      %3129 = vmatprep.subr.mxu0 0.0
      %3130 = vmatpush1.msra.mxu0 0.0
      %3131 = vmatprep.subr.mxu0 0.0
      %3132 = vmatpush1.msra.mxu0 0.0
      %3133 = vmatprep.subr.mxu0 0.0
      %3134 = vmatpush1.msra.mxu0 0.0
      %3135 = vmatprep.subr.mxu0 0.0
      %3136 = vmatpush1.msra.mxu0 0.0
      %3137 = vmatprep.subr.mxu0 0.0
      %3138 = vmatpush1.msra.mxu0 0.0
      %3139 = vmatprep.subr.mxu0 0.0
      %3140 = vmatpush1.msra.mxu0 0.0
      %3141 = vmatprep.subr.mxu0 0.0
      %3142 = vmatpush1.msra.mxu0 0.0
      %3143 = vmatprep.subr.mxu0 0.0
      %3144 = vmatpush1.msra.mxu0 0.0
      %3145 = vmatprep.subr.mxu0 0.0
      %3146 = vmatpush1.msra.mxu0 0.0
      %3147 = vmatprep.subr.mxu0 0.0
      %3148 = vmatpush1.msra.mxu0 0.0
      %3149 = vmatprep.subr.mxu0 0.0
      %3150 = vmatpush1.msra.mxu0 0.0
      %3151 = vmatprep.subr.mxu0 0.0
      %3152 = vmatpush1.msra.mxu0 0.0
      %3153 = vmatprep.subr.mxu0 0.0
      %3154 = vmatpush1.msra.mxu0 0.0
      %3155 = vmatprep.subr.mxu0 0.0
      %3156 = vmatpush1.msra.mxu0 0.0
      %3157 = vmatprep.subr.mxu0 0.0
      %3158 = vmatpush1.msra.mxu0 0.0
      %3159 = vmatprep.subr.mxu0 0.0
      %3160 = vmatpush1.msra.mxu0 0.0
      %3161 = vmatprep.subr.mxu0 0.0
      %3162 = vmatpush1.msra.mxu0 0.0
      %3163 = vmatprep.subr.mxu0 0.0
      %3164 = vmatpush1.msra.mxu0 0.0
      %3165 = vmatprep.subr.mxu0 0.0
      %3166 = vmatpush1.msra.mxu0 0.0
      %3167 = vmatprep.subr.mxu0 0.0
      %3168 = vmatpush1.msra.mxu0 0.0
      %3169 = vmatprep.subr.mxu0 0.0
      %3170 = vmatpush1.msra.mxu0 0.0
      %3171 = vmatprep.subr.mxu0 0.0
      %3172 = vmatpush1.msra.mxu0 0.0
      %3173 = vmatprep.subr.mxu0 0.0
      %3174 = vmatpush1.msra.mxu0 0.0
      %3175 = vmatprep.mubr.f32.mxu0 0.0
      %3176 = vmatmul.mubr.f32.gmra.mrb[0].mxu0 %v3105
      %v3177 = vpop.f32.mrb[0].mxu0
      %v3178 = vadd.f32 0.0, %v3177
      %v3179 = vpop.f32.mrb[0].mxu0
      %3180 = vdwg.mxu0
      %v3181 = vld [vmem:[%s12] sm:$0xf]
      %s3182 = scalar_lea.vmem %s11, 8
      %v3183 = vld [vmem:[%s3182] sm:$0x3f]
      %v3185 = vsel %vm3107, %v3183, 0
      %3187 = vmatprep.subr.mxu0 0.0
      %3188 = vmatpush1.msra.mxu0 %v3185
      %3189 = vmatprep.subr.mxu0 0.0
      %3190 = vmatpush1.msra.mxu0 0.0
      %3191 = vmatprep.subr.mxu0 0.0
      %3192 = vmatpush1.msra.mxu0 0.0
      %3193 = vmatprep.subr.mxu0 0.0
      %3194 = vmatpush1.msra.mxu0 0.0
      %3195 = vmatprep.subr.mxu0 0.0
      %3196 = vmatpush1.msra.mxu0 0.0
      %3197 = vmatprep.subr.mxu0 0.0
      %3198 = vmatpush1.msra.mxu0 0.0
      %3199 = vmatprep.subr.mxu0 0.0
      %3200 = vmatpush1.msra.mxu0 0.0
      %3201 = vmatprep.subr.mxu0 0.0
      %3202 = vmatpush1.msra.mxu0 0.0
      %3203 = vmatprep.subr.mxu0 0.0
      %3204 = vmatpush1.msra.mxu0 0.0
      %3205 = vmatprep.subr.mxu0 0.0
      %3206 = vmatpush1.msra.mxu0 0.0
      %3207 = vmatprep.subr.mxu0 0.0
      %3208 = vmatpush1.msra.mxu0 0.0
      %3209 = vmatprep.subr.mxu0 0.0
      %3210 = vmatpush1.msra.mxu0 0.0
      %3211 = vmatprep.subr.mxu0 0.0
      %3212 = vmatpush1.msra.mxu0 0.0
      %3213 = vmatprep.subr.mxu0 0.0
      %3214 = vmatpush1.msra.mxu0 0.0
      %3215 = vmatprep.subr.mxu0 0.0
      %3216 = vmatpush1.msra.mxu0 0.0
      %3217 = vmatprep.subr.mxu0 0.0
      %3218 = vmatpush1.msra.mxu0 0.0
      %3219 = vmatprep.subr.mxu0 0.0
      %3220 = vmatpush1.msra.mxu0 0.0
      %3221 = vmatprep.subr.mxu0 0.0
      %3222 = vmatpush1.msra.mxu0 0.0
      %3223 = vmatprep.subr.mxu0 0.0
      %3224 = vmatpush1.msra.mxu0 0.0
      %3225 = vmatprep.subr.mxu0 0.0
      %3226 = vmatpush1.msra.mxu0 0.0
      %3227 = vmatprep.subr.mxu0 0.0
      %3228 = vmatpush1.msra.mxu0 0.0
      %3229 = vmatprep.subr.mxu0 0.0
      %3230 = vmatpush1.msra.mxu0 0.0
      %3231 = vmatprep.subr.mxu0 0.0
      %3232 = vmatpush1.msra.mxu0 0.0
      %3233 = vmatprep.subr.mxu0 0.0
      %3234 = vmatpush1.msra.mxu0 0.0
      %3235 = vmatprep.subr.mxu0 0.0
      %3236 = vmatpush1.msra.mxu0 0.0
      %3237 = vmatprep.subr.mxu0 0.0
      %3238 = vmatpush1.msra.mxu0 0.0
      %3239 = vmatprep.subr.mxu0 0.0
      %3240 = vmatpush1.msra.mxu0 0.0
      %3241 = vmatprep.subr.mxu0 0.0
      %3242 = vmatpush1.msra.mxu0 0.0
      %3243 = vmatprep.subr.mxu0 0.0
      %3244 = vmatpush1.msra.mxu0 0.0
      %3245 = vmatprep.subr.mxu0 0.0
      %3246 = vmatpush1.msra.mxu0 0.0
      %3247 = vmatprep.subr.mxu0 0.0
      %3248 = vmatpush1.msra.mxu0 0.0
      %3249 = vmatprep.subr.mxu0 0.0
      %3250 = vmatpush1.msra.mxu0 0.0
      %3251 = vmatprep.mubr.f32.mxu0 0.0
      %3252 = vmatmul.mubr.f32.gmra.mrb[0].mxu0 %v3105
      %v3253 = vpop.f32.mrb[0].mxu0
      %v3254 = vadd.f32 0.0, %v3253
      %v3255 = vpop.f32.mrb[0].mxu0
      %3256 = vdwg.mxu0
      %s3257 = scalar_lea.vmem %s12, 4
      %v3258 = vld [vmem:[%s3257] sm:$0xf]
      %vm3259 = vcmask 15360
      %v3261 = vsel %vm3259, %v3258, 0
      %vm3263 = vcmask 1041408
      %v3265 = vsel %vm3263, %v3254, 0
      %3267 = vmatprep.subr.mxu0 0.0
      %3268 = vmatpush1.msra.mxu0 %v3265
      %3269 = vmatprep.subr.mxu0 0.0
      %3270 = vmatpush1.msra.mxu0 0.0
      %3271 = vmatprep.subr.mxu0 0.0
      %3272 = vmatpush1.msra.mxu0 0.0
      %3273 = vmatprep.subr.mxu0 0.0
      %3274 = vmatpush1.msra.mxu0 0.0
      %3275 = vmatprep.subr.mxu0 0.0
      %3276 = vmatpush1.msra.mxu0 0.0
      %3277 = vmatprep.subr.mxu0 0.0
      %3278 = vmatpush1.msra.mxu0 0.0
      %3279 = vmatprep.subr.mxu0 0.0
      %3280 = vmatpush1.msra.mxu0 0.0
      %3281 = vmatprep.subr.mxu0 0.0
      %3282 = vmatpush1.msra.mxu0 0.0
      %3283 = vmatprep.subr.mxu0 0.0
      %3284 = vmatpush1.msra.mxu0 0.0
      %3285 = vmatprep.subr.mxu0 0.0
      %3286 = vmatpush1.msra.mxu0 0.0
      %3287 = vmatprep.subr.mxu0 0.0
      %3288 = vmatpush1.msra.mxu0 0.0
      %3289 = vmatprep.subr.mxu0 0.0
      %3290 = vmatpush1.msra.mxu0 0.0
      %3291 = vmatprep.subr.mxu0 0.0
      %3292 = vmatpush1.msra.mxu0 0.0
      %3293 = vmatprep.subr.mxu0 0.0
      %3294 = vmatpush1.msra.mxu0 0.0
      %3295 = vmatprep.subr.mxu0 0.0
      %3296 = vmatpush1.msra.mxu0 0.0
      %3297 = vmatprep.subr.mxu0 0.0
      %3298 = vmatpush1.msra.mxu0 0.0
      %3299 = vmatprep.subr.mxu0 0.0
      %3300 = vmatpush1.msra.mxu0 0.0
      %3301 = vmatprep.subr.mxu0 0.0
      %3302 = vmatpush1.msra.mxu0 0.0
      %3303 = vmatprep.subr.mxu0 0.0
      %3304 = vmatpush1.msra.mxu0 0.0
      %3305 = vmatprep.subr.mxu0 0.0
      %3306 = vmatpush1.msra.mxu0 0.0
      %3307 = vmatprep.subr.mxu0 0.0
      %3308 = vmatpush1.msra.mxu0 0.0
      %3309 = vmatprep.subr.mxu0 0.0
      %3310 = vmatpush1.msra.mxu0 0.0
      %3311 = vmatprep.subr.mxu0 0.0
      %3312 = vmatpush1.msra.mxu0 0.0
      %3313 = vmatprep.subr.mxu0 0.0
      %3314 = vmatpush1.msra.mxu0 0.0
      %3315 = vmatprep.subr.mxu0 0.0
      %3316 = vmatpush1.msra.mxu0 0.0
      %3317 = vmatprep.subr.mxu0 0.0
      %3318 = vmatpush1.msra.mxu0 0.0
      %3319 = vmatprep.subr.mxu0 0.0
      %3320 = vmatpush1.msra.mxu0 0.0
      %3321 = vmatprep.subr.mxu0 0.0
      %3322 = vmatpush1.msra.mxu0 0.0
      %3323 = vmatprep.subr.mxu0 0.0
      %3324 = vmatpush1.msra.mxu0 0.0
      %3325 = vmatprep.subr.mxu0 0.0
      %3326 = vmatpush1.msra.mxu0 0.0
      %3327 = vmatprep.subr.mxu0 0.0
      %3328 = vmatpush1.msra.mxu0 0.0
      %3329 = vmatprep.subr.mxu0 0.0
      %3330 = vmatpush1.msra.mxu0 0.0
      %3331 = vmatprep.mubr.f32.mxu0 0.0
      %3332 = vmatmul.mubr.f32.gmra.mrb[0].mxu0 %v3261
      %v3333 = vpop.f32.mrb[0].mxu0
      %v3334 = vadd.f32 0.0, %v3333
      %v3335 = vpop.f32.mrb[0].mxu0
      %3336 = vdwg.mxu0
      %v3338 = vsel %vm3259, %v3181, 0
      %v3341 = vsel %vm3263, %v3178, 0
      %3343 = vmatprep.subr.mxu0 0.0
      %3344 = vmatpush1.msra.mxu0 %v3341
      %3345 = vmatprep.subr.mxu0 0.0
      %3346 = vmatpush1.msra.mxu0 0.0
      %3347 = vmatprep.subr.mxu0 0.0
      %3348 = vmatpush1.msra.mxu0 0.0
      %3349 = vmatprep.subr.mxu0 0.0
      %3350 = vmatpush1.msra.mxu0 0.0
      %3351 = vmatprep.subr.mxu0 0.0
      %3352 = vmatpush1.msra.mxu0 0.0
      %3353 = vmatprep.subr.mxu0 0.0
      %3354 = vmatpush1.msra.mxu0 0.0
      %3355 = vmatprep.subr.mxu0 0.0
      %3356 = vmatpush1.msra.mxu0 0.0
      %3357 = vmatprep.subr.mxu0 0.0
      %3358 = vmatpush1.msra.mxu0 0.0
      %3359 = vmatprep.subr.mxu0 0.0
      %3360 = vmatpush1.msra.mxu0 0.0
      %3361 = vmatprep.subr.mxu0 0.0
      %3362 = vmatpush1.msra.mxu0 0.0
      %3363 = vmatprep.subr.mxu0 0.0
      %3364 = vmatpush1.msra.mxu0 0.0
      %3365 = vmatprep.subr.mxu0 0.0
      %3366 = vmatpush1.msra.mxu0 0.0
      %3367 = vmatprep.subr.mxu0 0.0
      %3368 = vmatpush1.msra.mxu0 0.0
      %3369 = vmatprep.subr.mxu0 0.0
      %3370 = vmatpush1.msra.mxu0 0.0
      %3371 = vmatprep.subr.mxu0 0.0
      %3372 = vmatpush1.msra.mxu0 0.0
      %3373 = vmatprep.subr.mxu0 0.0
      %3374 = vmatpush1.msra.mxu0 0.0
      %3375 = vmatprep.subr.mxu0 0.0
      %3376 = vmatpush1.msra.mxu0 0.0
      %3377 = vmatprep.subr.mxu0 0.0
      %3378 = vmatpush1.msra.mxu0 0.0
      %3379 = vmatprep.subr.mxu0 0.0
      %3380 = vmatpush1.msra.mxu0 0.0
      %3381 = vmatprep.subr.mxu0 0.0
      %3382 = vmatpush1.msra.mxu0 0.0
      %3383 = vmatprep.subr.mxu0 0.0
      %3384 = vmatpush1.msra.mxu0 0.0
      %3385 = vmatprep.subr.mxu0 0.0
      %3386 = vmatpush1.msra.mxu0 0.0
      %3387 = vmatprep.subr.mxu0 0.0
      %3388 = vmatpush1.msra.mxu0 0.0
      %3389 = vmatprep.subr.mxu0 0.0
      %3390 = vmatpush1.msra.mxu0 0.0
      %3391 = vmatprep.subr.mxu0 0.0
      %3392 = vmatpush1.msra.mxu0 0.0
      %3393 = vmatprep.subr.mxu0 0.0
      %3394 = vmatpush1.msra.mxu0 0.0
      %3395 = vmatprep.subr.mxu0 0.0
      %3396 = vmatpush1.msra.mxu0 0.0
      %3397 = vmatprep.subr.mxu0 0.0
      %3398 = vmatpush1.msra.mxu0 0.0
      %3399 = vmatprep.subr.mxu0 0.0
      %3400 = vmatpush1.msra.mxu0 0.0
      %3401 = vmatprep.subr.mxu0 0.0
      %3402 = vmatpush1.msra.mxu0 0.0
      %3403 = vmatprep.subr.mxu0 0.0
      %3404 = vmatpush1.msra.mxu0 0.0
      %3405 = vmatprep.subr.mxu0 0.0
      %3406 = vmatpush1.msra.mxu0 0.0
      %3407 = vmatprep.mubr.f32.mxu0 0.0
      %3408 = vmatmul.mubr.f32.gmra.mrb[0].mxu0 %v3338
      %v3409 = vpop.f32.mrb[0].mxu0
      %v3410 = vadd.f32 %v3334, %v3409
      %v3411 = vpop.f32.mrb[0].mxu0
      %3412 = vdwg.mxu0
      %s3413 = scalar_lea.vmem %s11, 16
      %v3414 = vld [vmem:[%s3413] sm:$0x3f]
      %v3416 = vsel %vm3107, %v3414, 0
      %3418 = vmatprep.subr.mxu0 0.0
      %3419 = vmatpush1.msra.mxu0 %v3416
      %3420 = vmatprep.subr.mxu0 0.0
      %3421 = vmatpush1.msra.mxu0 0.0
      %3422 = vmatprep.subr.mxu0 0.0
      %3423 = vmatpush1.msra.mxu0 0.0
      %3424 = vmatprep.subr.mxu0 0.0
      %3425 = vmatpush1.msra.mxu0 0.0
      %3426 = vmatprep.subr.mxu0 0.0
      %3427 = vmatpush1.msra.mxu0 0.0
      %3428 = vmatprep.subr.mxu0 0.0
      %3429 = vmatpush1.msra.mxu0 0.0
      %3430 = vmatprep.subr.mxu0 0.0
      %3431 = vmatpush1.msra.mxu0 0.0
      %3432 = vmatprep.subr.mxu0 0.0
      %3433 = vmatpush1.msra.mxu0 0.0
      %3434 = vmatprep.subr.mxu0 0.0
      %3435 = vmatpush1.msra.mxu0 0.0
      %3436 = vmatprep.subr.mxu0 0.0
      %3437 = vmatpush1.msra.mxu0 0.0
      %3438 = vmatprep.subr.mxu0 0.0
      %3439 = vmatpush1.msra.mxu0 0.0
      %3440 = vmatprep.subr.mxu0 0.0
      %3441 = vmatpush1.msra.mxu0 0.0
      %3442 = vmatprep.subr.mxu0 0.0
      %3443 = vmatpush1.msra.mxu0 0.0
      %3444 = vmatprep.subr.mxu0 0.0
      %3445 = vmatpush1.msra.mxu0 0.0
      %3446 = vmatprep.subr.mxu0 0.0
      %3447 = vmatpush1.msra.mxu0 0.0
      %3448 = vmatprep.subr.mxu0 0.0
      %3449 = vmatpush1.msra.mxu0 0.0
      %3450 = vmatprep.subr.mxu0 0.0
      %3451 = vmatpush1.msra.mxu0 0.0
      %3452 = vmatprep.subr.mxu0 0.0
      %3453 = vmatpush1.msra.mxu0 0.0
      %3454 = vmatprep.subr.mxu0 0.0
      %3455 = vmatpush1.msra.mxu0 0.0
      %3456 = vmatprep.subr.mxu0 0.0
      %3457 = vmatpush1.msra.mxu0 0.0
      %3458 = vmatprep.subr.mxu0 0.0
      %3459 = vmatpush1.msra.mxu0 0.0
      %3460 = vmatprep.subr.mxu0 0.0
      %3461 = vmatpush1.msra.mxu0 0.0
      %3462 = vmatprep.subr.mxu0 0.0
      %3463 = vmatpush1.msra.mxu0 0.0
      %3464 = vmatprep.subr.mxu0 0.0
      %3465 = vmatpush1.msra.mxu0 0.0
      %3466 = vmatprep.subr.mxu0 0.0
      %3467 = vmatpush1.msra.mxu0 0.0
      %3468 = vmatprep.subr.mxu0 0.0
      %3469 = vmatpush1.msra.mxu0 0.0
      %3470 = vmatprep.subr.mxu0 0.0
      %3471 = vmatpush1.msra.mxu0 0.0
      %3472 = vmatprep.subr.mxu0 0.0
      %3473 = vmatpush1.msra.mxu0 0.0
      %3474 = vmatprep.subr.mxu0 0.0
      %3475 = vmatpush1.msra.mxu0 0.0
      %3476 = vmatprep.subr.mxu0 0.0
      %3477 = vmatpush1.msra.mxu0 0.0
      %3478 = vmatprep.subr.mxu0 0.0
      %3479 = vmatpush1.msra.mxu0 0.0
      %3480 = vmatprep.subr.mxu0 0.0
      %3481 = vmatpush1.msra.mxu0 0.0
      %3482 = vmatprep.mubr.f32.mxu0 0.0
      %3483 = vmatmul.mubr.f32.gmra.mrb[0].mxu0 %v3105
      %v3484 = vpop.f32.mrb[0].mxu0
      %v3485 = vadd.f32 0.0, %v3484
      %v3486 = vpop.f32.mrb[0].mxu0
      %3487 = vdwg.mxu0
      %s3488 = scalar_lea.vmem %s12, 8
      %v3489 = vld [vmem:[%s3488] sm:$0xf]
      %v3491 = vsel %vm3259, %v3489, 0
      %v3494 = vsel %vm3263, %v3485, 0
      %3496 = vmatprep.subr.mxu0 0.0
      %3497 = vmatpush1.msra.mxu0 %v3494
      %3498 = vmatprep.subr.mxu0 0.0
      %3499 = vmatpush1.msra.mxu0 0.0
      %3500 = vmatprep.subr.mxu0 0.0
      %3501 = vmatpush1.msra.mxu0 0.0
      %3502 = vmatprep.subr.mxu0 0.0
      %3503 = vmatpush1.msra.mxu0 0.0
      %3504 = vmatprep.subr.mxu0 0.0
      %3505 = vmatpush1.msra.mxu0 0.0
      %3506 = vmatprep.subr.mxu0 0.0
      %3507 = vmatpush1.msra.mxu0 0.0
      %3508 = vmatprep.subr.mxu0 0.0
      %3509 = vmatpush1.msra.mxu0 0.0
      %3510 = vmatprep.subr.mxu0 0.0
      %3511 = vmatpush1.msra.mxu0 0.0
      %3512 = vmatprep.subr.mxu0 0.0
      %3513 = vmatpush1.msra.mxu0 0.0
      %3514 = vmatprep.subr.mxu0 0.0
      %3515 = vmatpush1.msra.mxu0 0.0
      %3516 = vmatprep.subr.mxu0 0.0
      %3517 = vmatpush1.msra.mxu0 0.0
      %3518 = vmatprep.subr.mxu0 0.0
      %3519 = vmatpush1.msra.mxu0 0.0
      %3520 = vmatprep.subr.mxu0 0.0
      %3521 = vmatpush1.msra.mxu0 0.0
      %3522 = vmatprep.subr.mxu0 0.0
      %3523 = vmatpush1.msra.mxu0 0.0
      %3524 = vmatprep.subr.mxu0 0.0
      %3525 = vmatpush1.msra.mxu0 0.0
      %3526 = vmatprep.subr.mxu0 0.0
      %3527 = vmatpush1.msra.mxu0 0.0
      %3528 = vmatprep.subr.mxu0 0.0
      %3529 = vmatpush1.msra.mxu0 0.0
      %3530 = vmatprep.subr.mxu0 0.0
      %3531 = vmatpush1.msra.mxu0 0.0
      %3532 = vmatprep.subr.mxu0 0.0
      %3533 = vmatpush1.msra.mxu0 0.0
      %3534 = vmatprep.subr.mxu0 0.0
      %3535 = vmatpush1.msra.mxu0 0.0
      %3536 = vmatprep.subr.mxu0 0.0
      %3537 = vmatpush1.msra.mxu0 0.0
      %3538 = vmatprep.subr.mxu0 0.0
      %3539 = vmatpush1.msra.mxu0 0.0
      %3540 = vmatprep.subr.mxu0 0.0
      %3541 = vmatpush1.msra.mxu0 0.0
      %3542 = vmatprep.subr.mxu0 0.0
      %3543 = vmatpush1.msra.mxu0 0.0
      %3544 = vmatprep.subr.mxu0 0.0
      %3545 = vmatpush1.msra.mxu0 0.0
      %3546 = vmatprep.subr.mxu0 0.0
      %3547 = vmatpush1.msra.mxu0 0.0
      %3548 = vmatprep.subr.mxu0 0.0
      %3549 = vmatpush1.msra.mxu0 0.0
      %3550 = vmatprep.subr.mxu0 0.0
      %3551 = vmatpush1.msra.mxu0 0.0
      %3552 = vmatprep.subr.mxu0 0.0
      %3553 = vmatpush1.msra.mxu0 0.0
      %3554 = vmatprep.subr.mxu0 0.0
      %3555 = vmatpush1.msra.mxu0 0.0
      %3556 = vmatprep.subr.mxu0 0.0
      %3557 = vmatpush1.msra.mxu0 0.0
      %3558 = vmatprep.subr.mxu0 0.0
      %3559 = vmatpush1.msra.mxu0 0.0
      %3560 = vmatprep.mubr.f32.mxu0 0.0
      %3561 = vmatmul.mubr.f32.gmra.mrb[0].mxu0 %v3491
      %v3562 = vpop.f32.mrb[0].mxu0
      %v3563 = vadd.f32 0.0, %v3562
      %v3564 = vpop.f32.mrb[0].mxu0
      %3565 = vdwg.mxu0
      %v3566 = vadd.f32 %v3410, %v3563
      %v3567 = vlaneseq
      %v3568 = vshrl.u32 %v3567, 7
      %v3569 = vsub.s32 5, %v3568
      %v3570 = vrot.slane %v738, %v3569
      %v3571 = vadd.f32 %v3566, %v3570
      %v3572 = vsub.f32 %v1680, %v3571
      %v3573 = vld [vmem:[%s14] sm:$0x3f]
      %v3575 = vsel %vm3107, %v3573, 0
      %3577 = vmatprep.subr.mxu0 0.0
      %3578 = vmatpush1.msra.mxu0 %v3575
      %3579 = vmatprep.subr.mxu0 0.0
      %3580 = vmatpush1.msra.mxu0 0.0
      %3581 = vmatprep.subr.mxu0 0.0
      %3582 = vmatpush1.msra.mxu0 0.0
      %3583 = vmatprep.subr.mxu0 0.0
      %3584 = vmatpush1.msra.mxu0 0.0
      %3585 = vmatprep.subr.mxu0 0.0
      %3586 = vmatpush1.msra.mxu0 0.0
      %3587 = vmatprep.subr.mxu0 0.0
      %3588 = vmatpush1.msra.mxu0 0.0
      %3589 = vmatprep.subr.mxu0 0.0
      %3590 = vmatpush1.msra.mxu0 0.0
      %3591 = vmatprep.subr.mxu0 0.0
      %3592 = vmatpush1.msra.mxu0 0.0
      %3593 = vmatprep.subr.mxu0 0.0
      %3594 = vmatpush1.msra.mxu0 0.0
      %3595 = vmatprep.subr.mxu0 0.0
      %3596 = vmatpush1.msra.mxu0 0.0
      %3597 = vmatprep.subr.mxu0 0.0
      %3598 = vmatpush1.msra.mxu0 0.0
      %3599 = vmatprep.subr.mxu0 0.0
      %3600 = vmatpush1.msra.mxu0 0.0
      %3601 = vmatprep.subr.mxu0 0.0
      %3602 = vmatpush1.msra.mxu0 0.0
      %3603 = vmatprep.subr.mxu0 0.0
      %3604 = vmatpush1.msra.mxu0 0.0
      %3605 = vmatprep.subr.mxu0 0.0
      %3606 = vmatpush1.msra.mxu0 0.0
      %3607 = vmatprep.subr.mxu0 0.0
      %3608 = vmatpush1.msra.mxu0 0.0
      %3609 = vmatprep.subr.mxu0 0.0
      %3610 = vmatpush1.msra.mxu0 0.0
      %3611 = vmatprep.subr.mxu0 0.0
      %3612 = vmatpush1.msra.mxu0 0.0
      %3613 = vmatprep.subr.mxu0 0.0
      %3614 = vmatpush1.msra.mxu0 0.0
      %3615 = vmatprep.subr.mxu0 0.0
      %3616 = vmatpush1.msra.mxu0 0.0
      %3617 = vmatprep.subr.mxu0 0.0
      %3618 = vmatpush1.msra.mxu0 0.0
      %3619 = vmatprep.subr.mxu0 0.0
      %3620 = vmatpush1.msra.mxu0 0.0
      %3621 = vmatprep.subr.mxu0 0.0
      %3622 = vmatpush1.msra.mxu0 0.0
      %3623 = vmatprep.subr.mxu0 0.0
      %3624 = vmatpush1.msra.mxu0 0.0
      %3625 = vmatprep.subr.mxu0 0.0
      %3626 = vmatpush1.msra.mxu0 0.0
      %3627 = vmatprep.subr.mxu0 0.0
      %3628 = vmatpush1.msra.mxu0 0.0
      %3629 = vmatprep.subr.mxu0 0.0
      %3630 = vmatpush1.msra.mxu0 0.0
      %3631 = vmatprep.subr.mxu0 0.0
      %3632 = vmatpush1.msra.mxu0 0.0
      %3633 = vmatprep.subr.mxu0 0.0
      %3634 = vmatpush1.msra.mxu0 0.0
      %3635 = vmatprep.subr.mxu0 0.0
      %3636 = vmatpush1.msra.mxu0 0.0
      %3637 = vmatprep.subr.mxu0 0.0
      %3638 = vmatpush1.msra.mxu0 0.0
      %3639 = vmatprep.subr.mxu0 0.0
      %3640 = vmatpush1.msra.mxu0 0.0
      %3641 = vmatprep.mubr.f32.mxu0 0.0
      %3642 = vmatmul.mubr.f32.gmra.mrb[0].mxu0 %v3105
      %v3643 = vpop.f32.mrb[0].mxu0
      %v3644 = vadd.f32 0.0, %v3643
      %v3645 = vpop.f32.mrb[0].mxu0
      %3646 = vdwg.mxu0
      %v3647 = vld [vmem:[%s18] sm:$0xf]
      %v3649 = vsel %vm3259, %v3647, 0
      %v3652 = vsel %vm3263, %v3644, 0
      %3654 = vmatprep.subr.mxu0 0.0
      %3655 = vmatpush1.msra.mxu0 %v3652
      %3656 = vmatprep.subr.mxu0 0.0
      %3657 = vmatpush1.msra.mxu0 0.0
      %3658 = vmatprep.subr.mxu0 0.0
      %3659 = vmatpush1.msra.mxu0 0.0
      %3660 = vmatprep.subr.mxu0 0.0
      %3661 = vmatpush1.msra.mxu0 0.0
      %3662 = vmatprep.subr.mxu0 0.0
      %3663 = vmatpush1.msra.mxu0 0.0
      %3664 = vmatprep.subr.mxu0 0.0
      %3665 = vmatpush1.msra.mxu0 0.0
      %3666 = vmatprep.subr.mxu0 0.0
      %3667 = vmatpush1.msra.mxu0 0.0
      %3668 = vmatprep.subr.mxu0 0.0
      %3669 = vmatpush1.msra.mxu0 0.0
      %3670 = vmatprep.subr.mxu0 0.0
      %3671 = vmatpush1.msra.mxu0 0.0
      %3672 = vmatprep.subr.mxu0 0.0
      %3673 = vmatpush1.msra.mxu0 0.0
      %3674 = vmatprep.subr.mxu0 0.0
      %3675 = vmatpush1.msra.mxu0 0.0
      %3676 = vmatprep.subr.mxu0 0.0
      %3677 = vmatpush1.msra.mxu0 0.0
      %3678 = vmatprep.subr.mxu0 0.0
      %3679 = vmatpush1.msra.mxu0 0.0
      %3680 = vmatprep.subr.mxu0 0.0
      %3681 = vmatpush1.msra.mxu0 0.0
      %3682 = vmatprep.subr.mxu0 0.0
      %3683 = vmatpush1.msra.mxu0 0.0
      %3684 = vmatprep.subr.mxu0 0.0
      %3685 = vmatpush1.msra.mxu0 0.0
      %3686 = vmatprep.subr.mxu0 0.0
      %3687 = vmatpush1.msra.mxu0 0.0
      %3688 = vmatprep.subr.mxu0 0.0
      %3689 = vmatpush1.msra.mxu0 0.0
      %3690 = vmatprep.subr.mxu0 0.0
      %3691 = vmatpush1.msra.mxu0 0.0
      %3692 = vmatprep.subr.mxu0 0.0
      %3693 = vmatpush1.msra.mxu0 0.0
      %3694 = vmatprep.subr.mxu0 0.0
      %3695 = vmatpush1.msra.mxu0 0.0
      %3696 = vmatprep.subr.mxu0 0.0
      %3697 = vmatpush1.msra.mxu0 0.0
      %3698 = vmatprep.subr.mxu0 0.0
      %3699 = vmatpush1.msra.mxu0 0.0
      %3700 = vmatprep.subr.mxu0 0.0
      %3701 = vmatpush1.msra.mxu0 0.0
      %3702 = vmatprep.subr.mxu0 0.0
      %3703 = vmatpush1.msra.mxu0 0.0
      %3704 = vmatprep.subr.mxu0 0.0
      %3705 = vmatpush1.msra.mxu0 0.0
      %3706 = vmatprep.subr.mxu0 0.0
      %3707 = vmatpush1.msra.mxu0 0.0
      %3708 = vmatprep.subr.mxu0 0.0
      %3709 = vmatpush1.msra.mxu0 0.0
      %3710 = vmatprep.subr.mxu0 0.0
      %3711 = vmatpush1.msra.mxu0 0.0
      %3712 = vmatprep.subr.mxu0 0.0
      %3713 = vmatpush1.msra.mxu0 0.0
      %3714 = vmatprep.subr.mxu0 0.0
      %3715 = vmatpush1.msra.mxu0 0.0
      %3716 = vmatprep.subr.mxu0 0.0
      %3717 = vmatpush1.msra.mxu0 0.0
      %3718 = vmatprep.mubr.f32.mxu0 0.0
      %3719 = vmatmul.mubr.f32.gmra.mrb[0].mxu0 %v3649
      %v3720 = vpop.f32.mrb[0].mxu0
      %v3721 = vadd.f32 0.0, %v3720
      %v3722 = vpop.f32.mrb[0].mxu0
      %3723 = vdwg.mxu0
      %v3724 = vld [vmem:[%s13] sm:$0xff]
      %v3725 = vld [vmem:[%s13 + $0x8] sm:$0xf]
      %v3727 = vsel %vm1683, %v3572, 0
      %v3730 = vsel %vm1687, %v3725, 0
      %3732 = vmatprep.subr.mxu0 0.0
      %3733 = vmatpush1.msra.mxu0 %v3724
      %3734 = vmatprep.subr.mxu0 0.0
      %3735 = vmatpush1.msra.mxu0 %v3730
      %3736 = vmatprep.subr.mxu0 0.0
      %3737 = vmatpush1.msra.mxu0 0.0
      %3738 = vmatprep.subr.mxu0 0.0
      %3739 = vmatpush1.msra.mxu0 0.0
      %3740 = vmatprep.subr.mxu0 0.0
      %3741 = vmatpush1.msra.mxu0 0.0
      %3742 = vmatprep.subr.mxu0 0.0
      %3743 = vmatpush1.msra.mxu0 0.0
      %3744 = vmatprep.subr.mxu0 0.0
      %3745 = vmatpush1.msra.mxu0 0.0
      %3746 = vmatprep.subr.mxu0 0.0
      %3747 = vmatpush1.msra.mxu0 0.0
      %3748 = vmatprep.subr.mxu0 0.0
      %3749 = vmatpush1.msra.mxu0 0.0
      %3750 = vmatprep.subr.mxu0 0.0
      %3751 = vmatpush1.msra.mxu0 0.0
      %3752 = vmatprep.subr.mxu0 0.0
      %3753 = vmatpush1.msra.mxu0 0.0
      %3754 = vmatprep.subr.mxu0 0.0
      %3755 = vmatpush1.msra.mxu0 0.0
      %3756 = vmatprep.subr.mxu0 0.0
      %3757 = vmatpush1.msra.mxu0 0.0
      %3758 = vmatprep.subr.mxu0 0.0
      %3759 = vmatpush1.msra.mxu0 0.0
      %3760 = vmatprep.subr.mxu0 0.0
      %3761 = vmatpush1.msra.mxu0 0.0
      %3762 = vmatprep.subr.mxu0 0.0
      %3763 = vmatpush1.msra.mxu0 0.0
      %3764 = vmatprep.subr.mxu0 0.0
      %3765 = vmatpush1.msra.mxu0 0.0
      %3766 = vmatprep.subr.mxu0 0.0
      %3767 = vmatpush1.msra.mxu0 0.0
      %3768 = vmatprep.subr.mxu0 0.0
      %3769 = vmatpush1.msra.mxu0 0.0
      %3770 = vmatprep.subr.mxu0 0.0
      %3771 = vmatpush1.msra.mxu0 0.0
      %3772 = vmatprep.subr.mxu0 0.0
      %3773 = vmatpush1.msra.mxu0 0.0
      %3774 = vmatprep.subr.mxu0 0.0
      %3775 = vmatpush1.msra.mxu0 0.0
      %3776 = vmatprep.subr.mxu0 0.0
      %3777 = vmatpush1.msra.mxu0 0.0
      %3778 = vmatprep.subr.mxu0 0.0
      %3779 = vmatpush1.msra.mxu0 0.0
      %3780 = vmatprep.subr.mxu0 0.0
      %3781 = vmatpush1.msra.mxu0 0.0
      %3782 = vmatprep.subr.mxu0 0.0
      %3783 = vmatpush1.msra.mxu0 0.0
      %3784 = vmatprep.subr.mxu0 0.0
      %3785 = vmatpush1.msra.mxu0 0.0
      %3786 = vmatprep.subr.mxu0 0.0
      %3787 = vmatpush1.msra.mxu0 0.0
      %3788 = vmatprep.subr.mxu0 0.0
      %3789 = vmatpush1.msra.mxu0 0.0
      %3790 = vmatprep.subr.mxu0 0.0
      %3791 = vmatpush1.msra.mxu0 0.0
      %3792 = vmatprep.subr.mxu0 0.0
      %3793 = vmatpush1.msra.mxu0 0.0
      %3794 = vmatprep.subr.mxu0 0.0
      %3795 = vmatpush1.msra.mxu0 0.0
      %3796 = vmatprep.mubr.f32.mxu0 0.0
      %3797 = vmatmul.mubr.f32.gmra.mrb[0].mxu0 %v3727
      %v3798 = vpop.f32.mrb[0].mxu0
      %v3799 = vadd.f32 %v3721, %v3798
      %v3800 = vpop.f32.mrb[0].mxu0
      %3801 = vdwg.mxu0
      %v3802 = vlaneseq
      %v3803 = vshrl.u32 %v3802, 7
      %v3804 = vsub.s32 6, %v3803
      %v3805 = vrot.slane %v738, %v3804
      %v3806 = vadd.f32 %v3799, %v3805
      %vm3807 = vcmp.ge.f32.partialorder %v3806, 0.0
      %v3808 = vmul.f32 %v3806, 0.01
      %v3809 = vsel %vm3807, %v3806, %v3808
      %v3810 = vld [vmem:[%s15] sm:$0xff]
      %v3811 = vld [vmem:[%s15 + $0x8] sm:$0xff]
      %v3812 = vld [vmem:[%s15 + $0x10] sm:$0xff]
      %v3813 = vld [vmem:[%s15 + $0x18] sm:$0xff]
      %v3814 = vld [vmem:[%s15 + $0x20] sm:$0xf]
      %v3815 = vlaneseq
      %v3816 = vshrl.u32 %v3815, 7
      %v3817 = vsub.s32 7, %v3816
      %v3818 = vrot.slane %v738, %v3817
      %vm3819 = vcmask 293888
      %v3821 = vsel %vm3819, %v3809, 0
      %v3824 = vsel %vm1687, %v3814, 0
      %3826 = vmatprep.subr.mxu0 0.0
      %3827 = vmatpush1.msra.mxu0 %v3810
      %3828 = vmatprep.subr.mxu0 0.0
      %3829 = vmatpush1.msra.mxu0 %v3811
      %3830 = vmatprep.subr.mxu0 0.0
      %3831 = vmatpush1.msra.mxu0 %v3812
      %3832 = vmatprep.subr.mxu0 0.0
      %3833 = vmatpush1.msra.mxu0 %v3813
      %3834 = vmatprep.subr.mxu0 0.0
      %3835 = vmatpush1.msra.mxu0 %v3824
      %3836 = vmatprep.subr.mxu0 0.0
      %3837 = vmatpush1.msra.mxu0 0.0
      %3838 = vmatprep.subr.mxu0 0.0
      %3839 = vmatpush1.msra.mxu0 0.0
      %3840 = vmatprep.subr.mxu0 0.0
      %3841 = vmatpush1.msra.mxu0 0.0
      %3842 = vmatprep.subr.mxu0 0.0
      %3843 = vmatpush1.msra.mxu0 0.0
      %3844 = vmatprep.subr.mxu0 0.0
      %3845 = vmatpush1.msra.mxu0 0.0
      %3846 = vmatprep.subr.mxu0 0.0
      %3847 = vmatpush1.msra.mxu0 0.0
      %3848 = vmatprep.subr.mxu0 0.0
      %3849 = vmatpush1.msra.mxu0 0.0
      %3850 = vmatprep.subr.mxu0 0.0
      %3851 = vmatpush1.msra.mxu0 0.0
      %3852 = vmatprep.subr.mxu0 0.0
      %3853 = vmatpush1.msra.mxu0 0.0
      %3854 = vmatprep.subr.mxu0 0.0
      %3855 = vmatpush1.msra.mxu0 0.0
      %3856 = vmatprep.subr.mxu0 0.0
      %3857 = vmatpush1.msra.mxu0 0.0
      %3858 = vmatprep.subr.mxu0 0.0
      %3859 = vmatpush1.msra.mxu0 0.0
      %3860 = vmatprep.subr.mxu0 0.0
      %3861 = vmatpush1.msra.mxu0 0.0
      %3862 = vmatprep.subr.mxu0 0.0
      %3863 = vmatpush1.msra.mxu0 0.0
      %3864 = vmatprep.subr.mxu0 0.0
      %3865 = vmatpush1.msra.mxu0 0.0
      %3866 = vmatprep.subr.mxu0 0.0
      %3867 = vmatpush1.msra.mxu0 0.0
      %3868 = vmatprep.subr.mxu0 0.0
      %3869 = vmatpush1.msra.mxu0 0.0
      %3870 = vmatprep.subr.mxu0 0.0
      %3871 = vmatpush1.msra.mxu0 0.0
      %3872 = vmatprep.subr.mxu0 0.0
      %3873 = vmatpush1.msra.mxu0 0.0
      %3874 = vmatprep.subr.mxu0 0.0
      %3875 = vmatpush1.msra.mxu0 0.0
      %3876 = vmatprep.subr.mxu0 0.0
      %3877 = vmatpush1.msra.mxu0 0.0
      %3878 = vmatprep.subr.mxu0 0.0
      %3879 = vmatpush1.msra.mxu0 0.0
      %3880 = vmatprep.subr.mxu0 0.0
      %3881 = vmatpush1.msra.mxu0 0.0
      %3882 = vmatprep.subr.mxu0 0.0
      %3883 = vmatpush1.msra.mxu0 0.0
      %3884 = vmatprep.subr.mxu0 0.0
      %3885 = vmatpush1.msra.mxu0 0.0
      %3886 = vmatprep.subr.mxu0 0.0
      %3887 = vmatpush1.msra.mxu0 0.0
      %3888 = vmatprep.subr.mxu0 0.0
      %3889 = vmatpush1.msra.mxu0 0.0
      %3890 = vmatprep.mubr.f32.mxu0 0.0
      %3891 = vmatmul.mubr.f32.gmra.mrb[0].mxu0 %v3821
      %v3892 = vpop.f32.mrb[0].mxu0
      %v3893 = vadd.f32 %v3818, %v3892
      %v3894 = vpop.f32.mrb[0].mxu0
      %3895 = vdwg.mxu0
      %v3896 = vmul.f32 %v3572, %v3893
      %v3897 = vld [vmem:[%s16] sm:$0xff]
      %v3898 = vld [vmem:[%s16 + $0x8] sm:$0xf]
      %v3899 = vlaneseq
      %v3900 = vshrl.u32 %v3899, 7
      %v3901 = vsub.s32 0, %v3900
      %v3902 = vrot.slane %v739, %v3901
      %v3904 = vsel %vm1683, %v3893, 0
      %v3907 = vsel %vm1687, %v3898, 0
      %3909 = vmatprep.subr.mxu0 0.0
      %3910 = vmatpush1.msra.mxu0 %v3897
      %3911 = vmatprep.subr.mxu0 0.0
      %3912 = vmatpush1.msra.mxu0 %v3907
      %3913 = vmatprep.subr.mxu0 0.0
      %3914 = vmatpush1.msra.mxu0 0.0
      %3915 = vmatprep.subr.mxu0 0.0
      %3916 = vmatpush1.msra.mxu0 0.0
      %3917 = vmatprep.subr.mxu0 0.0
      %3918 = vmatpush1.msra.mxu0 0.0
      %3919 = vmatprep.subr.mxu0 0.0
      %3920 = vmatpush1.msra.mxu0 0.0
      %3921 = vmatprep.subr.mxu0 0.0
      %3922 = vmatpush1.msra.mxu0 0.0
      %3923 = vmatprep.subr.mxu0 0.0
      %3924 = vmatpush1.msra.mxu0 0.0
      %3925 = vmatprep.subr.mxu0 0.0
      %3926 = vmatpush1.msra.mxu0 0.0
      %3927 = vmatprep.subr.mxu0 0.0
      %3928 = vmatpush1.msra.mxu0 0.0
      %3929 = vmatprep.subr.mxu0 0.0
      %3930 = vmatpush1.msra.mxu0 0.0
      %3931 = vmatprep.subr.mxu0 0.0
      %3932 = vmatpush1.msra.mxu0 0.0
      %3933 = vmatprep.subr.mxu0 0.0
      %3934 = vmatpush1.msra.mxu0 0.0
      %3935 = vmatprep.subr.mxu0 0.0
      %3936 = vmatpush1.msra.mxu0 0.0
      %3937 = vmatprep.subr.mxu0 0.0
      %3938 = vmatpush1.msra.mxu0 0.0
      %3939 = vmatprep.subr.mxu0 0.0
      %3940 = vmatpush1.msra.mxu0 0.0
      %3941 = vmatprep.subr.mxu0 0.0
      %3942 = vmatpush1.msra.mxu0 0.0
      %3943 = vmatprep.subr.mxu0 0.0
      %3944 = vmatpush1.msra.mxu0 0.0
      %3945 = vmatprep.subr.mxu0 0.0
      %3946 = vmatpush1.msra.mxu0 0.0
      %3947 = vmatprep.subr.mxu0 0.0
      %3948 = vmatpush1.msra.mxu0 0.0
      %3949 = vmatprep.subr.mxu0 0.0
      %3950 = vmatpush1.msra.mxu0 0.0
      %3951 = vmatprep.subr.mxu0 0.0
      %3952 = vmatpush1.msra.mxu0 0.0
      %3953 = vmatprep.subr.mxu0 0.0
      %3954 = vmatpush1.msra.mxu0 0.0
      %3955 = vmatprep.subr.mxu0 0.0
      %3956 = vmatpush1.msra.mxu0 0.0
      %3957 = vmatprep.subr.mxu0 0.0
      %3958 = vmatpush1.msra.mxu0 0.0
      %3959 = vmatprep.subr.mxu0 0.0
      %3960 = vmatpush1.msra.mxu0 0.0
      %3961 = vmatprep.subr.mxu0 0.0
      %3962 = vmatpush1.msra.mxu0 0.0
      %3963 = vmatprep.subr.mxu0 0.0
      %3964 = vmatpush1.msra.mxu0 0.0
      %3965 = vmatprep.subr.mxu0 0.0
      %3966 = vmatpush1.msra.mxu0 0.0
      %3967 = vmatprep.subr.mxu0 0.0
      %3968 = vmatpush1.msra.mxu0 0.0
      %3969 = vmatprep.subr.mxu0 0.0
      %3970 = vmatpush1.msra.mxu0 0.0
      %3971 = vmatprep.subr.mxu0 0.0
      %3972 = vmatpush1.msra.mxu0 0.0
      %3973 = vmatprep.mubr.f32.mxu0 0.0
      %3974 = vmatmul.mubr.f32.gmra.mrb[0].mxu0 %v3904
      %v3975 = vpop.f32.mrb[0].mxu0
      %v3976 = vadd.f32 %v3902, %v3975
      %v3977 = vpop.f32.mrb[0].mxu0
      %3978 = vdwg.mxu0
      %vm3979 = vcmp.ge.f32.partialorder %v3976, 0.0
      %v3980 = vmul.f32 %v3976, 0.01
      %v3981 = vsel %vm3979, %v3976, %v3980
      %v3982 = vld [vmem:[%s17] sm:$0xff]
      %v3983 = vld [vmem:[%s17 + $0x8] sm:$0xf]
      %v3984 = vlaneseq
      %v3985 = vshrl.u32 %v3984, 7
      %v3986 = vsub.s32 1, %v3985
      %v3987 = vrot.slane %v739, %v3986
      %v3989 = vsel %vm1683, %v3981, 0
      %v3992 = vsel %vm1687, %v3983, 0
      %3994 = vmatprep.subr.mxu0 0.0
      %3995 = vmatpush1.msra.mxu0 %v3982
      %3996 = vmatprep.subr.mxu0 0.0
      %3997 = vmatpush1.msra.mxu0 %v3992
      %3998 = vmatprep.subr.mxu0 0.0
      %3999 = vmatpush1.msra.mxu0 0.0
      %4000 = vmatprep.subr.mxu0 0.0
      %4001 = vmatpush1.msra.mxu0 0.0
      %4002 = vmatprep.subr.mxu0 0.0
      %4003 = vmatpush1.msra.mxu0 0.0
      %4004 = vmatprep.subr.mxu0 0.0
      %4005 = vmatpush1.msra.mxu0 0.0
      %4006 = vmatprep.subr.mxu0 0.0
      %4007 = vmatpush1.msra.mxu0 0.0
      %4008 = vmatprep.subr.mxu0 0.0
      %4009 = vmatpush1.msra.mxu0 0.0
      %4010 = vmatprep.subr.mxu0 0.0
      %4011 = vmatpush1.msra.mxu0 0.0
      %4012 = vmatprep.subr.mxu0 0.0
      %4013 = vmatpush1.msra.mxu0 0.0
      %4014 = vmatprep.subr.mxu0 0.0
      %4015 = vmatpush1.msra.mxu0 0.0
      %4016 = vmatprep.subr.mxu0 0.0
      %4017 = vmatpush1.msra.mxu0 0.0
      %4018 = vmatprep.subr.mxu0 0.0
      %4019 = vmatpush1.msra.mxu0 0.0
      %4020 = vmatprep.subr.mxu0 0.0
      %4021 = vmatpush1.msra.mxu0 0.0
      %4022 = vmatprep.subr.mxu0 0.0
      %4023 = vmatpush1.msra.mxu0 0.0
      %4024 = vmatprep.subr.mxu0 0.0
      %4025 = vmatpush1.msra.mxu0 0.0
      %4026 = vmatprep.subr.mxu0 0.0
      %4027 = vmatpush1.msra.mxu0 0.0
      %4028 = vmatprep.subr.mxu0 0.0
      %4029 = vmatpush1.msra.mxu0 0.0
      %4030 = vmatprep.subr.mxu0 0.0
      %4031 = vmatpush1.msra.mxu0 0.0
      %4032 = vmatprep.subr.mxu0 0.0
      %4033 = vmatpush1.msra.mxu0 0.0
      %4034 = vmatprep.subr.mxu0 0.0
      %4035 = vmatpush1.msra.mxu0 0.0
      %4036 = vmatprep.subr.mxu0 0.0
      %4037 = vmatpush1.msra.mxu0 0.0
      %4038 = vmatprep.subr.mxu0 0.0
      %4039 = vmatpush1.msra.mxu0 0.0
      %4040 = vmatprep.subr.mxu0 0.0
      %4041 = vmatpush1.msra.mxu0 0.0
      %4042 = vmatprep.subr.mxu0 0.0
      %4043 = vmatpush1.msra.mxu0 0.0
      %4044 = vmatprep.subr.mxu0 0.0
      %4045 = vmatpush1.msra.mxu0 0.0
      %4046 = vmatprep.subr.mxu0 0.0
      %4047 = vmatpush1.msra.mxu0 0.0
      %4048 = vmatprep.subr.mxu0 0.0
      %4049 = vmatpush1.msra.mxu0 0.0
      %4050 = vmatprep.subr.mxu0 0.0
      %4051 = vmatpush1.msra.mxu0 0.0
      %4052 = vmatprep.subr.mxu0 0.0
      %4053 = vmatpush1.msra.mxu0 0.0
      %4054 = vmatprep.subr.mxu0 0.0
      %4055 = vmatpush1.msra.mxu0 0.0
      %4056 = vmatprep.subr.mxu0 0.0
      %4057 = vmatpush1.msra.mxu0 0.0
      %4058 = vmatprep.mubr.f32.mxu0 0.0
      %4059 = vmatmul.mubr.f32.gmra.mrb[0].mxu0 %v3989
      %v4060 = vpop.f32.mrb[0].mxu0
      %v4061 = vadd.f32 %v3987, %v4060
      %v4062 = vpop.f32.mrb[0].mxu0
      %4063 = vdwg.mxu0
      %v4064 = vld [vmem:[%s19] sm:$0xff]
      %v4065 = vld [vmem:[%s20] sm:$0xff]
      %v4066 = vld [vmem:[%s20 + $0x8] sm:$0xf]
      %v4068 = vsel %vm1683, %v4061, 0
      %v4071 = vsel %vm1687, %v4066, 0
      %4073 = vmatprep.subr.mxu0 0.0
      %4074 = vmatpush1.msra.mxu0 %v4065
      %4075 = vmatprep.subr.mxu0 0.0
      %4076 = vmatpush1.msra.mxu0 %v4071
      %4077 = vmatprep.subr.mxu0 0.0
      %4078 = vmatpush1.msra.mxu0 0.0
      %4079 = vmatprep.subr.mxu0 0.0
      %4080 = vmatpush1.msra.mxu0 0.0
      %4081 = vmatprep.subr.mxu0 0.0
      %4082 = vmatpush1.msra.mxu0 0.0
      %4083 = vmatprep.subr.mxu0 0.0
      %4084 = vmatpush1.msra.mxu0 0.0
      %4085 = vmatprep.subr.mxu0 0.0
      %4086 = vmatpush1.msra.mxu0 0.0
      %4087 = vmatprep.subr.mxu0 0.0
      %4088 = vmatpush1.msra.mxu0 0.0
      %4089 = vmatprep.subr.mxu0 0.0
      %4090 = vmatpush1.msra.mxu0 0.0
      %4091 = vmatprep.subr.mxu0 0.0
      %4092 = vmatpush1.msra.mxu0 0.0
      %4093 = vmatprep.subr.mxu0 0.0
      %4094 = vmatpush1.msra.mxu0 0.0
      %4095 = vmatprep.subr.mxu0 0.0
      %4096 = vmatpush1.msra.mxu0 0.0
      %4097 = vmatprep.subr.mxu0 0.0
      %4098 = vmatpush1.msra.mxu0 0.0
      %4099 = vmatprep.subr.mxu0 0.0
      %4100 = vmatpush1.msra.mxu0 0.0
      %4101 = vmatprep.subr.mxu0 0.0
      %4102 = vmatpush1.msra.mxu0 0.0
      %4103 = vmatprep.subr.mxu0 0.0
      %4104 = vmatpush1.msra.mxu0 0.0
      %4105 = vmatprep.subr.mxu0 0.0
      %4106 = vmatpush1.msra.mxu0 0.0
      %4107 = vmatprep.subr.mxu0 0.0
      %4108 = vmatpush1.msra.mxu0 0.0
      %4109 = vmatprep.subr.mxu0 0.0
      %4110 = vmatpush1.msra.mxu0 0.0
      %4111 = vmatprep.subr.mxu0 0.0
      %4112 = vmatpush1.msra.mxu0 0.0
      %4113 = vmatprep.subr.mxu0 0.0
      %4114 = vmatpush1.msra.mxu0 0.0
      %4115 = vmatprep.subr.mxu0 0.0
      %4116 = vmatpush1.msra.mxu0 0.0
      %4117 = vmatprep.subr.mxu0 0.0
      %4118 = vmatpush1.msra.mxu0 0.0
      %4119 = vmatprep.subr.mxu0 0.0
      %4120 = vmatpush1.msra.mxu0 0.0
      %4121 = vmatprep.subr.mxu0 0.0
      %4122 = vmatpush1.msra.mxu0 0.0
      %4123 = vmatprep.subr.mxu0 0.0
      %4124 = vmatpush1.msra.mxu0 0.0
      %4125 = vmatprep.subr.mxu0 0.0
      %4126 = vmatpush1.msra.mxu0 0.0
      %4127 = vmatprep.subr.mxu0 0.0
      %4128 = vmatpush1.msra.mxu0 0.0
      %4129 = vmatprep.subr.mxu0 0.0
      %4130 = vmatpush1.msra.mxu0 0.0
      %4131 = vmatprep.subr.mxu0 0.0
      %4132 = vmatpush1.msra.mxu0 0.0
      %4133 = vmatprep.subr.mxu0 0.0
      %4134 = vmatpush1.msra.mxu0 0.0
      %4135 = vmatprep.subr.mxu0 0.0
      %4136 = vmatpush1.msra.mxu0 0.0
      %4137 = vmatprep.mubr.f32.mxu0 0.0
      %4138 = vmatmul.mubr.f32.gmra.mrb[0].mxu0 %v4068
      %v4139 = vpop.f32.mrb[0].mxu0
      %v4140 = vadd.f32 0.0, %v4139
      %v4141 = vpop.f32.mrb[0].mxu0
      %4142 = vdwg.mxu0
      %v4144 = vsel %vm1840, %v4064, 0
      %v4147 = vsel %vm1687, %v4140, 0
      %4149 = vmatprep.subr.mxu0 0.0
      %4150 = vmatpush1.msra.mxu0 %v4147
      %4151 = vmatprep.subr.mxu0 0.0
      %4152 = vmatpush1.msra.mxu0 0.0
      %4153 = vmatprep.subr.mxu0 0.0
      %4154 = vmatpush1.msra.mxu0 0.0
      %4155 = vmatprep.subr.mxu0 0.0
      %4156 = vmatpush1.msra.mxu0 0.0
      %4157 = vmatprep.subr.mxu0 0.0
      %4158 = vmatpush1.msra.mxu0 0.0
      %4159 = vmatprep.subr.mxu0 0.0
      %4160 = vmatpush1.msra.mxu0 0.0
      %4161 = vmatprep.subr.mxu0 0.0
      %4162 = vmatpush1.msra.mxu0 0.0
      %4163 = vmatprep.subr.mxu0 0.0
      %4164 = vmatpush1.msra.mxu0 0.0
      %4165 = vmatprep.subr.mxu0 0.0
      %4166 = vmatpush1.msra.mxu0 0.0
      %4167 = vmatprep.subr.mxu0 0.0
      %4168 = vmatpush1.msra.mxu0 0.0
      %4169 = vmatprep.subr.mxu0 0.0
      %4170 = vmatpush1.msra.mxu0 0.0
      %4171 = vmatprep.subr.mxu0 0.0
      %4172 = vmatpush1.msra.mxu0 0.0
      %4173 = vmatprep.subr.mxu0 0.0
      %4174 = vmatpush1.msra.mxu0 0.0
      %4175 = vmatprep.subr.mxu0 0.0
      %4176 = vmatpush1.msra.mxu0 0.0
      %4177 = vmatprep.subr.mxu0 0.0
      %4178 = vmatpush1.msra.mxu0 0.0
      %4179 = vmatprep.subr.mxu0 0.0
      %4180 = vmatpush1.msra.mxu0 0.0
      %4181 = vmatprep.subr.mxu0 0.0
      %4182 = vmatpush1.msra.mxu0 0.0
      %4183 = vmatprep.subr.mxu0 0.0
      %4184 = vmatpush1.msra.mxu0 0.0
      %4185 = vmatprep.subr.mxu0 0.0
      %4186 = vmatpush1.msra.mxu0 0.0
      %4187 = vmatprep.subr.mxu0 0.0
      %4188 = vmatpush1.msra.mxu0 0.0
      %4189 = vmatprep.subr.mxu0 0.0
      %4190 = vmatpush1.msra.mxu0 0.0
      %4191 = vmatprep.subr.mxu0 0.0
      %4192 = vmatpush1.msra.mxu0 0.0
      %4193 = vmatprep.subr.mxu0 0.0
      %4194 = vmatpush1.msra.mxu0 0.0
      %4195 = vmatprep.subr.mxu0 0.0
      %4196 = vmatpush1.msra.mxu0 0.0
      %4197 = vmatprep.subr.mxu0 0.0
      %4198 = vmatpush1.msra.mxu0 0.0
      %4199 = vmatprep.subr.mxu0 0.0
      %4200 = vmatpush1.msra.mxu0 0.0
      %4201 = vmatprep.subr.mxu0 0.0
      %4202 = vmatpush1.msra.mxu0 0.0
      %4203 = vmatprep.subr.mxu0 0.0
      %4204 = vmatpush1.msra.mxu0 0.0
      %4205 = vmatprep.subr.mxu0 0.0
      %4206 = vmatpush1.msra.mxu0 0.0
      %4207 = vmatprep.subr.mxu0 0.0
      %4208 = vmatpush1.msra.mxu0 0.0
      %4209 = vmatprep.subr.mxu0 0.0
      %4210 = vmatpush1.msra.mxu0 0.0
      %4211 = vmatprep.subr.mxu0 0.0
      %4212 = vmatpush1.msra.mxu0 0.0
      %4213 = vmatprep.mubr.f32.mxu0 0.0
      %4214 = vmatmul.mubr.f32.gmra.mrb[0].mxu0 %v4144
      %v4215 = vpop.f32.mrb[0].mxu0
      %v4216 = vadd.f32 0.0, %v4215
      %v4217 = vpop.f32.mrb[0].mxu0
      %4218 = vdwg.mxu0
      %v4219 = vmul.f32 %v3101, %v4216
      %v4220 = vld [vmem:[%s21] sm:$0xff]
      %v4221 = vld [vmem:[%s21 + $0x8] sm:$0xff]
      %v4222 = vld [vmem:[%s22] sm:$0xff]
      %v4223 = vld [vmem:[%s22 + $0x8] sm:$0xf]
      %v4225 = vsel %vm1687, %v4223, 0
      %4227 = vmatprep.subr.mxu0 0.0
      %4228 = vmatpush1.msra.mxu0 %v4222
      %4229 = vmatprep.subr.mxu0 0.0
      %4230 = vmatpush1.msra.mxu0 %v4225
      %4231 = vmatprep.subr.mxu0 0.0
      %4232 = vmatpush1.msra.mxu0 0.0
      %4233 = vmatprep.subr.mxu0 0.0
      %4234 = vmatpush1.msra.mxu0 0.0
      %4235 = vmatprep.subr.mxu0 0.0
      %4236 = vmatpush1.msra.mxu0 0.0
      %4237 = vmatprep.subr.mxu0 0.0
      %4238 = vmatpush1.msra.mxu0 0.0
      %4239 = vmatprep.subr.mxu0 0.0
      %4240 = vmatpush1.msra.mxu0 0.0
      %4241 = vmatprep.subr.mxu0 0.0
      %4242 = vmatpush1.msra.mxu0 0.0
      %4243 = vmatprep.subr.mxu0 0.0
      %4244 = vmatpush1.msra.mxu0 0.0
      %4245 = vmatprep.subr.mxu0 0.0
      %4246 = vmatpush1.msra.mxu0 0.0
      %4247 = vmatprep.subr.mxu0 0.0
      %4248 = vmatpush1.msra.mxu0 0.0
      %4249 = vmatprep.subr.mxu0 0.0
      %4250 = vmatpush1.msra.mxu0 0.0
      %4251 = vmatprep.subr.mxu0 0.0
      %4252 = vmatpush1.msra.mxu0 0.0
      %4253 = vmatprep.subr.mxu0 0.0
      %4254 = vmatpush1.msra.mxu0 0.0
      %4255 = vmatprep.subr.mxu0 0.0
      %4256 = vmatpush1.msra.mxu0 0.0
      %4257 = vmatprep.subr.mxu0 0.0
      %4258 = vmatpush1.msra.mxu0 0.0
      %4259 = vmatprep.subr.mxu0 0.0
      %4260 = vmatpush1.msra.mxu0 0.0
      %4261 = vmatprep.subr.mxu0 0.0
      %4262 = vmatpush1.msra.mxu0 0.0
      %4263 = vmatprep.subr.mxu0 0.0
      %4264 = vmatpush1.msra.mxu0 0.0
      %4265 = vmatprep.subr.mxu0 0.0
      %4266 = vmatpush1.msra.mxu0 0.0
      %4267 = vmatprep.subr.mxu0 0.0
      %4268 = vmatpush1.msra.mxu0 0.0
      %4269 = vmatprep.subr.mxu0 0.0
      %4270 = vmatpush1.msra.mxu0 0.0
      %4271 = vmatprep.subr.mxu0 0.0
      %4272 = vmatpush1.msra.mxu0 0.0
      %4273 = vmatprep.subr.mxu0 0.0
      %4274 = vmatpush1.msra.mxu0 0.0
      %4275 = vmatprep.subr.mxu0 0.0
      %4276 = vmatpush1.msra.mxu0 0.0
      %4277 = vmatprep.subr.mxu0 0.0
      %4278 = vmatpush1.msra.mxu0 0.0
      %4279 = vmatprep.subr.mxu0 0.0
      %4280 = vmatpush1.msra.mxu0 0.0
      %4281 = vmatprep.subr.mxu0 0.0
      %4282 = vmatpush1.msra.mxu0 0.0
      %4283 = vmatprep.subr.mxu0 0.0
      %4284 = vmatpush1.msra.mxu0 0.0
      %4285 = vmatprep.subr.mxu0 0.0
      %4286 = vmatpush1.msra.mxu0 0.0
      %4287 = vmatprep.subr.mxu0 0.0
      %4288 = vmatpush1.msra.mxu0 0.0
      %4289 = vmatprep.subr.mxu0 0.0
      %4290 = vmatpush1.msra.mxu0 0.0
      %4291 = vmatprep.mubr.f32.mxu0 0.0
      %4292 = vmatmul.mubr.f32.gmra.mrb[0].mxu0 %v4068
      %v4293 = vpop.f32.mrb[0].mxu0
      %v4294 = vadd.f32 0.0, %v4293
      %v4295 = vpop.f32.mrb[0].mxu0
      %4296 = vdwg.mxu0
      %v4298 = vsel %vm1840, %v4220, 0
      %v4301 = vsel %vm1840, %v4221, 0
      %v4304 = vsel %vm1687, %v4294, 0
      %4306 = vmatprep.subr.mxu0 0.0
      %4307 = vmatpush1.msra.mxu0 %v4304
      %4308 = vmatprep.subr.mxu0 0.0
      %4309 = vmatpush1.msra.mxu0 0.0
      %4310 = vmatprep.subr.mxu0 0.0
      %4311 = vmatpush1.msra.mxu0 0.0
      %4312 = vmatprep.subr.mxu0 0.0
      %4313 = vmatpush1.msra.mxu0 0.0
      %4314 = vmatprep.subr.mxu0 0.0
      %4315 = vmatpush1.msra.mxu0 0.0
      %4316 = vmatprep.subr.mxu0 0.0
      %4317 = vmatpush1.msra.mxu0 0.0
      %4318 = vmatprep.subr.mxu0 0.0
      %4319 = vmatpush1.msra.mxu0 0.0
      %4320 = vmatprep.subr.mxu0 0.0
      %4321 = vmatpush1.msra.mxu0 0.0
      %4322 = vmatprep.subr.mxu0 0.0
      %4323 = vmatpush1.msra.mxu0 0.0
      %4324 = vmatprep.subr.mxu0 0.0
      %4325 = vmatpush1.msra.mxu0 0.0
      %4326 = vmatprep.subr.mxu0 0.0
      %4327 = vmatpush1.msra.mxu0 0.0
      %4328 = vmatprep.subr.mxu0 0.0
      %4329 = vmatpush1.msra.mxu0 0.0
      %4330 = vmatprep.subr.mxu0 0.0
      %4331 = vmatpush1.msra.mxu0 0.0
      %4332 = vmatprep.subr.mxu0 0.0
      %4333 = vmatpush1.msra.mxu0 0.0
      %4334 = vmatprep.subr.mxu0 0.0
      %4335 = vmatpush1.msra.mxu0 0.0
      %4336 = vmatprep.subr.mxu0 0.0
      %4337 = vmatpush1.msra.mxu0 0.0
      %4338 = vmatprep.subr.mxu0 0.0
      %4339 = vmatpush1.msra.mxu0 0.0
      %4340 = vmatprep.subr.mxu0 0.0
      %4341 = vmatpush1.msra.mxu0 0.0
      %4342 = vmatprep.subr.mxu0 0.0
      %4343 = vmatpush1.msra.mxu0 0.0
      %4344 = vmatprep.subr.mxu0 0.0
      %4345 = vmatpush1.msra.mxu0 0.0
      %4346 = vmatprep.subr.mxu0 0.0
      %4347 = vmatpush1.msra.mxu0 0.0
      %4348 = vmatprep.subr.mxu0 0.0
      %4349 = vmatpush1.msra.mxu0 0.0
      %4350 = vmatprep.subr.mxu0 0.0
      %4351 = vmatpush1.msra.mxu0 0.0
      %4352 = vmatprep.subr.mxu0 0.0
      %4353 = vmatpush1.msra.mxu0 0.0
      %4354 = vmatprep.subr.mxu0 0.0
      %4355 = vmatpush1.msra.mxu0 0.0
      %4356 = vmatprep.subr.mxu0 0.0
      %4357 = vmatpush1.msra.mxu0 0.0
      %4358 = vmatprep.subr.mxu0 0.0
      %4359 = vmatpush1.msra.mxu0 0.0
      %4360 = vmatprep.subr.mxu0 0.0
      %4361 = vmatpush1.msra.mxu0 0.0
      %4362 = vmatprep.subr.mxu0 0.0
      %4363 = vmatpush1.msra.mxu0 0.0
      %4364 = vmatprep.subr.mxu0 0.0
      %4365 = vmatpush1.msra.mxu0 0.0
      %4366 = vmatprep.subr.mxu0 0.0
      %4367 = vmatpush1.msra.mxu0 0.0
      %4368 = vmatprep.subr.mxu0 0.0
      %4369 = vmatpush1.msra.mxu0 0.0
      %4370 = vmatprep.mubr.f32.mxu0 0.0
      %4371 = vmatmul.mubr.f32.gmra.mrb[0].mxu0 %v4298
      %v4372 = vpop.f32.mrb[0].mxu0
      %v4373 = vadd.f32 0.0, %v4372
      %v4374 = vpop.f32.mrb[0].mxu0
      %4375 = vmatprep.mubr.f32.mxu0 0.0
      %4376 = vmatmul.mubr.f32.gmra.mrb[0].mxu0 %v4301
      %v4377 = vpop.f32.mrb[0].mxu0
      %v4378 = vadd.f32 0.0, %v4377
      %v4379 = vpop.f32.mrb[0].mxu0
      %4380 = vdwg.mxu0
      %v4381 = vmul.f32 %v2633, %v4373
      %v4382 = vmul.f32 %v2634, %v4378
      %v4383 = vadd.f32 %v3571, %v3896
      %v4385 = vsel %vm1683, %v4383, 0
      %4387 = vmatprep.subr.mxu0 0.0
      %4388 = vmatpush1.msra.mxu0 %v2635
      %4389 = vmatprep.subr.mxu0 0.0
      %4390 = vmatpush1.msra.mxu0 %v2638
      %4391 = vmatprep.subr.mxu0 0.0
      %4392 = vmatpush1.msra.mxu0 0.0
      %4393 = vmatprep.subr.mxu0 0.0
      %4394 = vmatpush1.msra.mxu0 0.0
      %4395 = vmatprep.subr.mxu0 0.0
      %4396 = vmatpush1.msra.mxu0 0.0
      %4397 = vmatprep.subr.mxu0 0.0
      %4398 = vmatpush1.msra.mxu0 0.0
      %4399 = vmatprep.subr.mxu0 0.0
      %4400 = vmatpush1.msra.mxu0 0.0
      %4401 = vmatprep.subr.mxu0 0.0
      %4402 = vmatpush1.msra.mxu0 0.0
      %4403 = vmatprep.subr.mxu0 0.0
      %4404 = vmatpush1.msra.mxu0 0.0
      %4405 = vmatprep.subr.mxu0 0.0
      %4406 = vmatpush1.msra.mxu0 0.0
      %4407 = vmatprep.subr.mxu0 0.0
      %4408 = vmatpush1.msra.mxu0 0.0
      %4409 = vmatprep.subr.mxu0 0.0
      %4410 = vmatpush1.msra.mxu0 0.0
      %4411 = vmatprep.subr.mxu0 0.0
      %4412 = vmatpush1.msra.mxu0 0.0
      %4413 = vmatprep.subr.mxu0 0.0
      %4414 = vmatpush1.msra.mxu0 0.0
      %4415 = vmatprep.subr.mxu0 0.0
      %4416 = vmatpush1.msra.mxu0 0.0
      %4417 = vmatprep.subr.mxu0 0.0
      %4418 = vmatpush1.msra.mxu0 0.0
      %4419 = vmatprep.subr.mxu0 0.0
      %4420 = vmatpush1.msra.mxu0 0.0
      %4421 = vmatprep.subr.mxu0 0.0
      %4422 = vmatpush1.msra.mxu0 0.0
      %4423 = vmatprep.subr.mxu0 0.0
      %4424 = vmatpush1.msra.mxu0 0.0
      %4425 = vmatprep.subr.mxu0 0.0
      %4426 = vmatpush1.msra.mxu0 0.0
      %4427 = vmatprep.subr.mxu0 0.0
      %4428 = vmatpush1.msra.mxu0 0.0
      %4429 = vmatprep.subr.mxu0 0.0
      %4430 = vmatpush1.msra.mxu0 0.0
      %4431 = vmatprep.subr.mxu0 0.0
      %4432 = vmatpush1.msra.mxu0 0.0
      %4433 = vmatprep.subr.mxu0 0.0
      %4434 = vmatpush1.msra.mxu0 0.0
      %4435 = vmatprep.subr.mxu0 0.0
      %4436 = vmatpush1.msra.mxu0 0.0
      %4437 = vmatprep.subr.mxu0 0.0
      %4438 = vmatpush1.msra.mxu0 0.0
      %4439 = vmatprep.subr.mxu0 0.0
      %4440 = vmatpush1.msra.mxu0 0.0
      %4441 = vmatprep.subr.mxu0 0.0
      %4442 = vmatpush1.msra.mxu0 0.0
      %4443 = vmatprep.subr.mxu0 0.0
      %4444 = vmatpush1.msra.mxu0 0.0
      %4445 = vmatprep.subr.mxu0 0.0
      %4446 = vmatpush1.msra.mxu0 0.0
      %4447 = vmatprep.subr.mxu0 0.0
      %4448 = vmatpush1.msra.mxu0 0.0
      %4449 = vmatprep.subr.mxu0 0.0
      %4450 = vmatpush1.msra.mxu0 0.0
      %4451 = vmatprep.mubr.f32.mxu0 0.0
      %4452 = vmatmul.mubr.f32.gmra.mrb[0].mxu0 %v4385
      %v4453 = vpop.f32.mrb[0].mxu0
      %v4454 = vadd.f32 0.0, %v4453
      %v4455 = vpop.f32.mrb[0].mxu0
      %4456 = vdwg.mxu0
      %4457 = vmatprep.subr.mxu0 0.0
      %4458 = vmatpush1.msra.mxu0 %v2712
      %4459 = vmatprep.subr.mxu0 0.0
      %4460 = vmatpush1.msra.mxu0 %v2715
      %4461 = vmatprep.subr.mxu0 0.0
      %4462 = vmatpush1.msra.mxu0 0.0
      %4463 = vmatprep.subr.mxu0 0.0
      %4464 = vmatpush1.msra.mxu0 0.0
      %4465 = vmatprep.subr.mxu0 0.0
      %4466 = vmatpush1.msra.mxu0 0.0
      %4467 = vmatprep.subr.mxu0 0.0
      %4468 = vmatpush1.msra.mxu0 0.0
      %4469 = vmatprep.subr.mxu0 0.0
      %4470 = vmatpush1.msra.mxu0 0.0
      %4471 = vmatprep.subr.mxu0 0.0
      %4472 = vmatpush1.msra.mxu0 0.0
      %4473 = vmatprep.subr.mxu0 0.0
      %4474 = vmatpush1.msra.mxu0 0.0
      %4475 = vmatprep.subr.mxu0 0.0
      %4476 = vmatpush1.msra.mxu0 0.0
      %4477 = vmatprep.subr.mxu0 0.0
      %4478 = vmatpush1.msra.mxu0 0.0
      %4479 = vmatprep.subr.mxu0 0.0
      %4480 = vmatpush1.msra.mxu0 0.0
      %4481 = vmatprep.subr.mxu0 0.0
      %4482 = vmatpush1.msra.mxu0 0.0
      %4483 = vmatprep.subr.mxu0 0.0
      %4484 = vmatpush1.msra.mxu0 0.0
      %4485 = vmatprep.subr.mxu0 0.0
      %4486 = vmatpush1.msra.mxu0 0.0
      %4487 = vmatprep.subr.mxu0 0.0
      %4488 = vmatpush1.msra.mxu0 0.0
      %4489 = vmatprep.subr.mxu0 0.0
      %4490 = vmatpush1.msra.mxu0 0.0
      %4491 = vmatprep.subr.mxu0 0.0
      %4492 = vmatpush1.msra.mxu0 0.0
      %4493 = vmatprep.subr.mxu0 0.0
      %4494 = vmatpush1.msra.mxu0 0.0
      %4495 = vmatprep.subr.mxu0 0.0
      %4496 = vmatpush1.msra.mxu0 0.0
      %4497 = vmatprep.subr.mxu0 0.0
      %4498 = vmatpush1.msra.mxu0 0.0
      %4499 = vmatprep.subr.mxu0 0.0
      %4500 = vmatpush1.msra.mxu0 0.0
      %4501 = vmatprep.subr.mxu0 0.0
      %4502 = vmatpush1.msra.mxu0 0.0
      %4503 = vmatprep.subr.mxu0 0.0
      %4504 = vmatpush1.msra.mxu0 0.0
      %4505 = vmatprep.subr.mxu0 0.0
      %4506 = vmatpush1.msra.mxu0 0.0
      %4507 = vmatprep.subr.mxu0 0.0
      %4508 = vmatpush1.msra.mxu0 0.0
      %4509 = vmatprep.subr.mxu0 0.0
      %4510 = vmatpush1.msra.mxu0 0.0
      %4511 = vmatprep.subr.mxu0 0.0
      %4512 = vmatpush1.msra.mxu0 0.0
      %4513 = vmatprep.subr.mxu0 0.0
      %4514 = vmatpush1.msra.mxu0 0.0
      %4515 = vmatprep.subr.mxu0 0.0
      %4516 = vmatpush1.msra.mxu0 0.0
      %4517 = vmatprep.subr.mxu0 0.0
      %4518 = vmatpush1.msra.mxu0 0.0
      %4519 = vmatprep.subr.mxu0 0.0
      %4520 = vmatpush1.msra.mxu0 0.0
      %4521 = vmatprep.mubr.f32.mxu0 0.0
      %4522 = vmatmul.mubr.f32.gmra.mrb[0].mxu0 %v4385
      %v4523 = vpop.f32.mrb[0].mxu0
      %v4524 = vadd.f32 0.0, %v4523
      %v4525 = vpop.f32.mrb[0].mxu0
      %4526 = vdwg.mxu0
      %v4528 = vsel %vm1687, %v4524, 0
      %4530 = vmatprep.subr.mxu0 0.0
      %4531 = vmatpush1.msra.mxu0 %v4528
      %4532 = vmatprep.subr.mxu0 0.0
      %4533 = vmatpush1.msra.mxu0 0.0
      %4534 = vmatprep.subr.mxu0 0.0
      %4535 = vmatpush1.msra.mxu0 0.0
      %4536 = vmatprep.subr.mxu0 0.0
      %4537 = vmatpush1.msra.mxu0 0.0
      %4538 = vmatprep.subr.mxu0 0.0
      %4539 = vmatpush1.msra.mxu0 0.0
      %4540 = vmatprep.subr.mxu0 0.0
      %4541 = vmatpush1.msra.mxu0 0.0
      %4542 = vmatprep.subr.mxu0 0.0
      %4543 = vmatpush1.msra.mxu0 0.0
      %4544 = vmatprep.subr.mxu0 0.0
      %4545 = vmatpush1.msra.mxu0 0.0
      %4546 = vmatprep.subr.mxu0 0.0
      %4547 = vmatpush1.msra.mxu0 0.0
      %4548 = vmatprep.subr.mxu0 0.0
      %4549 = vmatpush1.msra.mxu0 0.0
      %4550 = vmatprep.subr.mxu0 0.0
      %4551 = vmatpush1.msra.mxu0 0.0
      %4552 = vmatprep.subr.mxu0 0.0
      %4553 = vmatpush1.msra.mxu0 0.0
      %4554 = vmatprep.subr.mxu0 0.0
      %4555 = vmatpush1.msra.mxu0 0.0
      %4556 = vmatprep.subr.mxu0 0.0
      %4557 = vmatpush1.msra.mxu0 0.0
      %4558 = vmatprep.subr.mxu0 0.0
      %4559 = vmatpush1.msra.mxu0 0.0
      %4560 = vmatprep.subr.mxu0 0.0
      %4561 = vmatpush1.msra.mxu0 0.0
      %4562 = vmatprep.subr.mxu0 0.0
      %4563 = vmatpush1.msra.mxu0 0.0
      %4564 = vmatprep.subr.mxu0 0.0
      %4565 = vmatpush1.msra.mxu0 0.0
      %4566 = vmatprep.subr.mxu0 0.0
      %4567 = vmatpush1.msra.mxu0 0.0
      %4568 = vmatprep.subr.mxu0 0.0
      %4569 = vmatpush1.msra.mxu0 0.0
      %4570 = vmatprep.subr.mxu0 0.0
      %4571 = vmatpush1.msra.mxu0 0.0
      %4572 = vmatprep.subr.mxu0 0.0
      %4573 = vmatpush1.msra.mxu0 0.0
      %4574 = vmatprep.subr.mxu0 0.0
      %4575 = vmatpush1.msra.mxu0 0.0
      %4576 = vmatprep.subr.mxu0 0.0
      %4577 = vmatpush1.msra.mxu0 0.0
      %4578 = vmatprep.subr.mxu0 0.0
      %4579 = vmatpush1.msra.mxu0 0.0
      %4580 = vmatprep.subr.mxu0 0.0
      %4581 = vmatpush1.msra.mxu0 0.0
      %4582 = vmatprep.subr.mxu0 0.0
      %4583 = vmatpush1.msra.mxu0 0.0
      %4584 = vmatprep.subr.mxu0 0.0
      %4585 = vmatpush1.msra.mxu0 0.0
      %4586 = vmatprep.subr.mxu0 0.0
      %4587 = vmatpush1.msra.mxu0 0.0
      %4588 = vmatprep.subr.mxu0 0.0
      %4589 = vmatpush1.msra.mxu0 0.0
      %4590 = vmatprep.subr.mxu0 0.0
      %4591 = vmatpush1.msra.mxu0 0.0
      %4592 = vmatprep.subr.mxu0 0.0
      %4593 = vmatpush1.msra.mxu0 0.0
      %4594 = vmatprep.mubr.f32.mxu0 0.0
      %4595 = vmatmul.mubr.f32.gmra.mrb[0].mxu0 %v2790
      %v4596 = vpop.f32.mrb[0].mxu0
      %v4597 = vadd.f32 0.0, %v4596
      %v4598 = vpop.f32.mrb[0].mxu0
      %4599 = vdwg.mxu0
      %v4601 = vsel %vm1687, %v4454, 0
      %4603 = vmatprep.subr.mxu0 0.0
      %4604 = vmatpush1.msra.mxu0 %v4601
      %4605 = vmatprep.subr.mxu0 0.0
      %4606 = vmatpush1.msra.mxu0 0.0
      %4607 = vmatprep.subr.mxu0 0.0
      %4608 = vmatpush1.msra.mxu0 0.0
      %4609 = vmatprep.subr.mxu0 0.0
      %4610 = vmatpush1.msra.mxu0 0.0
      %4611 = vmatprep.subr.mxu0 0.0
      %4612 = vmatpush1.msra.mxu0 0.0
      %4613 = vmatprep.subr.mxu0 0.0
      %4614 = vmatpush1.msra.mxu0 0.0
      %4615 = vmatprep.subr.mxu0 0.0
      %4616 = vmatpush1.msra.mxu0 0.0
      %4617 = vmatprep.subr.mxu0 0.0
      %4618 = vmatpush1.msra.mxu0 0.0
      %4619 = vmatprep.subr.mxu0 0.0
      %4620 = vmatpush1.msra.mxu0 0.0
      %4621 = vmatprep.subr.mxu0 0.0
      %4622 = vmatpush1.msra.mxu0 0.0
      %4623 = vmatprep.subr.mxu0 0.0
      %4624 = vmatpush1.msra.mxu0 0.0
      %4625 = vmatprep.subr.mxu0 0.0
      %4626 = vmatpush1.msra.mxu0 0.0
      %4627 = vmatprep.subr.mxu0 0.0
      %4628 = vmatpush1.msra.mxu0 0.0
      %4629 = vmatprep.subr.mxu0 0.0
      %4630 = vmatpush1.msra.mxu0 0.0
      %4631 = vmatprep.subr.mxu0 0.0
      %4632 = vmatpush1.msra.mxu0 0.0
      %4633 = vmatprep.subr.mxu0 0.0
      %4634 = vmatpush1.msra.mxu0 0.0
      %4635 = vmatprep.subr.mxu0 0.0
      %4636 = vmatpush1.msra.mxu0 0.0
      %4637 = vmatprep.subr.mxu0 0.0
      %4638 = vmatpush1.msra.mxu0 0.0
      %4639 = vmatprep.subr.mxu0 0.0
      %4640 = vmatpush1.msra.mxu0 0.0
      %4641 = vmatprep.subr.mxu0 0.0
      %4642 = vmatpush1.msra.mxu0 0.0
      %4643 = vmatprep.subr.mxu0 0.0
      %4644 = vmatpush1.msra.mxu0 0.0
      %4645 = vmatprep.subr.mxu0 0.0
      %4646 = vmatpush1.msra.mxu0 0.0
      %4647 = vmatprep.subr.mxu0 0.0
      %4648 = vmatpush1.msra.mxu0 0.0
      %4649 = vmatprep.subr.mxu0 0.0
      %4650 = vmatpush1.msra.mxu0 0.0
      %4651 = vmatprep.subr.mxu0 0.0
      %4652 = vmatpush1.msra.mxu0 0.0
      %4653 = vmatprep.subr.mxu0 0.0
      %4654 = vmatpush1.msra.mxu0 0.0
      %4655 = vmatprep.subr.mxu0 0.0
      %4656 = vmatpush1.msra.mxu0 0.0
      %4657 = vmatprep.subr.mxu0 0.0
      %4658 = vmatpush1.msra.mxu0 0.0
      %4659 = vmatprep.subr.mxu0 0.0
      %4660 = vmatpush1.msra.mxu0 0.0
      %4661 = vmatprep.subr.mxu0 0.0
      %4662 = vmatpush1.msra.mxu0 0.0
      %4663 = vmatprep.subr.mxu0 0.0
      %4664 = vmatpush1.msra.mxu0 0.0
      %4665 = vmatprep.subr.mxu0 0.0
      %4666 = vmatpush1.msra.mxu0 0.0
      %4667 = vmatprep.mubr.f32.mxu0 0.0
      %4668 = vmatmul.mubr.f32.gmra.mrb[0].mxu0 %v2866
      %v4669 = vpop.f32.mrb[0].mxu0
      %v4670 = vadd.f32 %v4597, %v4669
      %v4671 = vpop.f32.mrb[0].mxu0
      %4672 = vdwg.mxu0
      %4673 = vmatprep.subr.mxu0 0.0
      %4674 = vmatpush1.msra.mxu0 %v2942
      %4675 = vmatprep.subr.mxu0 0.0
      %4676 = vmatpush1.msra.mxu0 %v2945
      %4677 = vmatprep.subr.mxu0 0.0
      %4678 = vmatpush1.msra.mxu0 0.0
      %4679 = vmatprep.subr.mxu0 0.0
      %4680 = vmatpush1.msra.mxu0 0.0
      %4681 = vmatprep.subr.mxu0 0.0
      %4682 = vmatpush1.msra.mxu0 0.0
      %4683 = vmatprep.subr.mxu0 0.0
      %4684 = vmatpush1.msra.mxu0 0.0
      %4685 = vmatprep.subr.mxu0 0.0
      %4686 = vmatpush1.msra.mxu0 0.0
      %4687 = vmatprep.subr.mxu0 0.0
      %4688 = vmatpush1.msra.mxu0 0.0
      %4689 = vmatprep.subr.mxu0 0.0
      %4690 = vmatpush1.msra.mxu0 0.0
      %4691 = vmatprep.subr.mxu0 0.0
      %4692 = vmatpush1.msra.mxu0 0.0
      %4693 = vmatprep.subr.mxu0 0.0
      %4694 = vmatpush1.msra.mxu0 0.0
      %4695 = vmatprep.subr.mxu0 0.0
      %4696 = vmatpush1.msra.mxu0 0.0
      %4697 = vmatprep.subr.mxu0 0.0
      %4698 = vmatpush1.msra.mxu0 0.0
      %4699 = vmatprep.subr.mxu0 0.0
      %4700 = vmatpush1.msra.mxu0 0.0
      %4701 = vmatprep.subr.mxu0 0.0
      %4702 = vmatpush1.msra.mxu0 0.0
      %4703 = vmatprep.subr.mxu0 0.0
      %4704 = vmatpush1.msra.mxu0 0.0
      %4705 = vmatprep.subr.mxu0 0.0
      %4706 = vmatpush1.msra.mxu0 0.0
      %4707 = vmatprep.subr.mxu0 0.0
      %4708 = vmatpush1.msra.mxu0 0.0
      %4709 = vmatprep.subr.mxu0 0.0
      %4710 = vmatpush1.msra.mxu0 0.0
      %4711 = vmatprep.subr.mxu0 0.0
      %4712 = vmatpush1.msra.mxu0 0.0
      %4713 = vmatprep.subr.mxu0 0.0
      %4714 = vmatpush1.msra.mxu0 0.0
      %4715 = vmatprep.subr.mxu0 0.0
      %4716 = vmatpush1.msra.mxu0 0.0
      %4717 = vmatprep.subr.mxu0 0.0
      %4718 = vmatpush1.msra.mxu0 0.0
      %4719 = vmatprep.subr.mxu0 0.0
      %4720 = vmatpush1.msra.mxu0 0.0
      %4721 = vmatprep.subr.mxu0 0.0
      %4722 = vmatpush1.msra.mxu0 0.0
      %4723 = vmatprep.subr.mxu0 0.0
      %4724 = vmatpush1.msra.mxu0 0.0
      %4725 = vmatprep.subr.mxu0 0.0
      %4726 = vmatpush1.msra.mxu0 0.0
      %4727 = vmatprep.subr.mxu0 0.0
      %4728 = vmatpush1.msra.mxu0 0.0
      %4729 = vmatprep.subr.mxu0 0.0
      %4730 = vmatpush1.msra.mxu0 0.0
      %4731 = vmatprep.subr.mxu0 0.0
      %4732 = vmatpush1.msra.mxu0 0.0
      %4733 = vmatprep.subr.mxu0 0.0
      %4734 = vmatpush1.msra.mxu0 0.0
      %4735 = vmatprep.subr.mxu0 0.0
      %4736 = vmatpush1.msra.mxu0 0.0
      %4737 = vmatprep.mubr.f32.mxu0 0.0
      %4738 = vmatmul.mubr.f32.gmra.mrb[0].mxu0 %v4385
      %v4739 = vpop.f32.mrb[0].mxu0
      %v4740 = vadd.f32 0.0, %v4739
      %v4741 = vpop.f32.mrb[0].mxu0
      %4742 = vdwg.mxu0
      %v4744 = vsel %vm1687, %v4740, 0
      %4746 = vmatprep.subr.mxu0 0.0
      %4747 = vmatpush1.msra.mxu0 %v4744
      %4748 = vmatprep.subr.mxu0 0.0
      %4749 = vmatpush1.msra.mxu0 0.0
      %4750 = vmatprep.subr.mxu0 0.0
      %4751 = vmatpush1.msra.mxu0 0.0
      %4752 = vmatprep.subr.mxu0 0.0
      %4753 = vmatpush1.msra.mxu0 0.0
      %4754 = vmatprep.subr.mxu0 0.0
      %4755 = vmatpush1.msra.mxu0 0.0
      %4756 = vmatprep.subr.mxu0 0.0
      %4757 = vmatpush1.msra.mxu0 0.0
      %4758 = vmatprep.subr.mxu0 0.0
      %4759 = vmatpush1.msra.mxu0 0.0
      %4760 = vmatprep.subr.mxu0 0.0
      %4761 = vmatpush1.msra.mxu0 0.0
      %4762 = vmatprep.subr.mxu0 0.0
      %4763 = vmatpush1.msra.mxu0 0.0
      %4764 = vmatprep.subr.mxu0 0.0
      %4765 = vmatpush1.msra.mxu0 0.0
      %4766 = vmatprep.subr.mxu0 0.0
      %4767 = vmatpush1.msra.mxu0 0.0
      %4768 = vmatprep.subr.mxu0 0.0
      %4769 = vmatpush1.msra.mxu0 0.0
      %4770 = vmatprep.subr.mxu0 0.0
      %4771 = vmatpush1.msra.mxu0 0.0
      %4772 = vmatprep.subr.mxu0 0.0
      %4773 = vmatpush1.msra.mxu0 0.0
      %4774 = vmatprep.subr.mxu0 0.0
      %4775 = vmatpush1.msra.mxu0 0.0
      %4776 = vmatprep.subr.mxu0 0.0
      %4777 = vmatpush1.msra.mxu0 0.0
      %4778 = vmatprep.subr.mxu0 0.0
      %4779 = vmatpush1.msra.mxu0 0.0
      %4780 = vmatprep.subr.mxu0 0.0
      %4781 = vmatpush1.msra.mxu0 0.0
      %4782 = vmatprep.subr.mxu0 0.0
      %4783 = vmatpush1.msra.mxu0 0.0
      %4784 = vmatprep.subr.mxu0 0.0
      %4785 = vmatpush1.msra.mxu0 0.0
      %4786 = vmatprep.subr.mxu0 0.0
      %4787 = vmatpush1.msra.mxu0 0.0
      %4788 = vmatprep.subr.mxu0 0.0
      %4789 = vmatpush1.msra.mxu0 0.0
      %4790 = vmatprep.subr.mxu0 0.0
      %4791 = vmatpush1.msra.mxu0 0.0
      %4792 = vmatprep.subr.mxu0 0.0
      %4793 = vmatpush1.msra.mxu0 0.0
      %4794 = vmatprep.subr.mxu0 0.0
      %4795 = vmatpush1.msra.mxu0 0.0
      %4796 = vmatprep.subr.mxu0 0.0
      %4797 = vmatpush1.msra.mxu0 0.0
      %4798 = vmatprep.subr.mxu0 0.0
      %4799 = vmatpush1.msra.mxu0 0.0
      %4800 = vmatprep.subr.mxu0 0.0
      %4801 = vmatpush1.msra.mxu0 0.0
      %4802 = vmatprep.subr.mxu0 0.0
      %4803 = vmatpush1.msra.mxu0 0.0
      %4804 = vmatprep.subr.mxu0 0.0
      %4805 = vmatpush1.msra.mxu0 0.0
      %4806 = vmatprep.subr.mxu0 0.0
      %4807 = vmatpush1.msra.mxu0 0.0
      %4808 = vmatprep.subr.mxu0 0.0
      %4809 = vmatpush1.msra.mxu0 0.0
      %4810 = vmatprep.mubr.f32.mxu0 0.0
      %4811 = vmatmul.mubr.f32.gmra.mrb[0].mxu0 %v3020
      %v4812 = vpop.f32.mrb[0].mxu0
      %v4813 = vadd.f32 0.0, %v4812
      %v4814 = vpop.f32.mrb[0].mxu0
      %4815 = vdwg.mxu0
      %v4816 = vadd.f32 %v4670, %v4813
      %v4817 = vadd.f32 %v4816, %v3099
      %v4818 = vadd.f32 %v4817, %v4219
      %v4820 = vsel %vm1228, %v4818, 0
      %4822 = vmatprep.subr.mxu0 0.0
      %4823 = vmatpush1.msra.mxu0 %v2153
      %4824 = vmatprep.subr.mxu0 0.0
      %4825 = vmatpush1.msra.mxu0 %v2154
      %4826 = vmatprep.subr.mxu0 0.0
      %4827 = vmatpush1.msra.mxu0 %v2155
      %4828 = vmatprep.subr.mxu0 0.0
      %4829 = vmatpush1.msra.mxu0 0.0
      %4830 = vmatprep.subr.mxu0 0.0
      %4831 = vmatpush1.msra.mxu0 0.0
      %4832 = vmatprep.subr.mxu0 0.0
      %4833 = vmatpush1.msra.mxu0 0.0
      %4834 = vmatprep.subr.mxu0 0.0
      %4835 = vmatpush1.msra.mxu0 0.0
      %4836 = vmatprep.subr.mxu0 0.0
      %4837 = vmatpush1.msra.mxu0 0.0
      %4838 = vmatprep.subr.mxu0 0.0
      %4839 = vmatpush1.msra.mxu0 0.0
      %4840 = vmatprep.subr.mxu0 0.0
      %4841 = vmatpush1.msra.mxu0 0.0
      %4842 = vmatprep.subr.mxu0 0.0
      %4843 = vmatpush1.msra.mxu0 0.0
      %4844 = vmatprep.subr.mxu0 0.0
      %4845 = vmatpush1.msra.mxu0 0.0
      %4846 = vmatprep.subr.mxu0 0.0
      %4847 = vmatpush1.msra.mxu0 0.0
      %4848 = vmatprep.subr.mxu0 0.0
      %4849 = vmatpush1.msra.mxu0 0.0
      %4850 = vmatprep.subr.mxu0 0.0
      %4851 = vmatpush1.msra.mxu0 0.0
      %4852 = vmatprep.subr.mxu0 0.0
      %4853 = vmatpush1.msra.mxu0 0.0
      %4854 = vmatprep.subr.mxu0 0.0
      %4855 = vmatpush1.msra.mxu0 0.0
      %4856 = vmatprep.subr.mxu0 0.0
      %4857 = vmatpush1.msra.mxu0 0.0
      %4858 = vmatprep.subr.mxu0 0.0
      %4859 = vmatpush1.msra.mxu0 0.0
      %4860 = vmatprep.subr.mxu0 0.0
      %4861 = vmatpush1.msra.mxu0 0.0
      %4862 = vmatprep.subr.mxu0 0.0
      %4863 = vmatpush1.msra.mxu0 0.0
      %4864 = vmatprep.subr.mxu0 0.0
      %4865 = vmatpush1.msra.mxu0 0.0
      %4866 = vmatprep.subr.mxu0 0.0
      %4867 = vmatpush1.msra.mxu0 0.0
      %4868 = vmatprep.subr.mxu0 0.0
      %4869 = vmatpush1.msra.mxu0 0.0
      %4870 = vmatprep.subr.mxu0 0.0
      %4871 = vmatpush1.msra.mxu0 0.0
      %4872 = vmatprep.subr.mxu0 0.0
      %4873 = vmatpush1.msra.mxu0 0.0
      %4874 = vmatprep.subr.mxu0 0.0
      %4875 = vmatpush1.msra.mxu0 0.0
      %4876 = vmatprep.subr.mxu0 0.0
      %4877 = vmatpush1.msra.mxu0 0.0
      %4878 = vmatprep.subr.mxu0 0.0
      %4879 = vmatpush1.msra.mxu0 0.0
      %4880 = vmatprep.subr.mxu0 0.0
      %4881 = vmatpush1.msra.mxu0 0.0
      %4882 = vmatprep.subr.mxu0 0.0
      %4883 = vmatpush1.msra.mxu0 0.0
      %4884 = vmatprep.subr.mxu0 0.0
      %4885 = vmatpush1.msra.mxu0 0.0
      %4886 = vmatprep.mubr.f32.mxu0 0.0
      %4887 = vmatmul.mubr.f32.gmra.mrb[0].mxu0 %v4820
      %v4888 = vpop.f32.mrb[0].mxu0
      %v4889 = vadd.f32 0.0, %v4888
      %v4890 = vpop.f32.mrb[0].mxu0
      %4891 = vdwg.mxu0
      %4892 = vmatprep.subr.mxu0 0.0
      %4893 = vmatpush1.msra.mxu0 %v2229
      %4894 = vmatprep.subr.mxu0 0.0
      %4895 = vmatpush1.msra.mxu0 %v2230
      %4896 = vmatprep.subr.mxu0 0.0
      %4897 = vmatpush1.msra.mxu0 %v2231
      %4898 = vmatprep.subr.mxu0 0.0
      %4899 = vmatpush1.msra.mxu0 0.0
      %4900 = vmatprep.subr.mxu0 0.0
      %4901 = vmatpush1.msra.mxu0 0.0
      %4902 = vmatprep.subr.mxu0 0.0
      %4903 = vmatpush1.msra.mxu0 0.0
      %4904 = vmatprep.subr.mxu0 0.0
      %4905 = vmatpush1.msra.mxu0 0.0
      %4906 = vmatprep.subr.mxu0 0.0
      %4907 = vmatpush1.msra.mxu0 0.0
      %4908 = vmatprep.subr.mxu0 0.0
      %4909 = vmatpush1.msra.mxu0 0.0
      %4910 = vmatprep.subr.mxu0 0.0
      %4911 = vmatpush1.msra.mxu0 0.0
      %4912 = vmatprep.subr.mxu0 0.0
      %4913 = vmatpush1.msra.mxu0 0.0
      %4914 = vmatprep.subr.mxu0 0.0
      %4915 = vmatpush1.msra.mxu0 0.0
      %4916 = vmatprep.subr.mxu0 0.0
      %4917 = vmatpush1.msra.mxu0 0.0
      %4918 = vmatprep.subr.mxu0 0.0
      %4919 = vmatpush1.msra.mxu0 0.0
      %4920 = vmatprep.subr.mxu0 0.0
      %4921 = vmatpush1.msra.mxu0 0.0
      %4922 = vmatprep.subr.mxu0 0.0
      %4923 = vmatpush1.msra.mxu0 0.0
      %4924 = vmatprep.subr.mxu0 0.0
      %4925 = vmatpush1.msra.mxu0 0.0
      %4926 = vmatprep.subr.mxu0 0.0
      %4927 = vmatpush1.msra.mxu0 0.0
      %4928 = vmatprep.subr.mxu0 0.0
      %4929 = vmatpush1.msra.mxu0 0.0
      %4930 = vmatprep.subr.mxu0 0.0
      %4931 = vmatpush1.msra.mxu0 0.0
      %4932 = vmatprep.subr.mxu0 0.0
      %4933 = vmatpush1.msra.mxu0 0.0
      %4934 = vmatprep.subr.mxu0 0.0
      %4935 = vmatpush1.msra.mxu0 0.0
      %4936 = vmatprep.subr.mxu0 0.0
      %4937 = vmatpush1.msra.mxu0 0.0
      %4938 = vmatprep.subr.mxu0 0.0
      %4939 = vmatpush1.msra.mxu0 0.0
      %4940 = vmatprep.subr.mxu0 0.0
      %4941 = vmatpush1.msra.mxu0 0.0
      %4942 = vmatprep.subr.mxu0 0.0
      %4943 = vmatpush1.msra.mxu0 0.0
      %4944 = vmatprep.subr.mxu0 0.0
      %4945 = vmatpush1.msra.mxu0 0.0
      %4946 = vmatprep.subr.mxu0 0.0
      %4947 = vmatpush1.msra.mxu0 0.0
      %4948 = vmatprep.subr.mxu0 0.0
      %4949 = vmatpush1.msra.mxu0 0.0
      %4950 = vmatprep.subr.mxu0 0.0
      %4951 = vmatpush1.msra.mxu0 0.0
      %4952 = vmatprep.subr.mxu0 0.0
      %4953 = vmatpush1.msra.mxu0 0.0
      %4954 = vmatprep.subr.mxu0 0.0
      %4955 = vmatpush1.msra.mxu0 0.0
      %4956 = vmatprep.mubr.f32.mxu0 0.0
      %4957 = vmatmul.mubr.f32.gmra.mrb[0].mxu0 %v4820
      %v4958 = vpop.f32.mrb[0].mxu0
      %v4959 = vadd.f32 0.0, %v4958
      %v4960 = vpop.f32.mrb[0].mxu0
      %4961 = vdwg.mxu0
      %4962 = vmatprep.subr.mxu0 0.0
      %4963 = vmatpush1.msra.mxu0 %v4959
      %4964 = vmatprep.subr.mxu0 0.0
      %4965 = vmatpush1.msra.mxu0 0.0
      %4966 = vmatprep.subr.mxu0 0.0
      %4967 = vmatpush1.msra.mxu0 0.0
      %4968 = vmatprep.subr.mxu0 0.0
      %4969 = vmatpush1.msra.mxu0 0.0
      %4970 = vmatprep.subr.mxu0 0.0
      %4971 = vmatpush1.msra.mxu0 0.0
      %4972 = vmatprep.subr.mxu0 0.0
      %4973 = vmatpush1.msra.mxu0 0.0
      %4974 = vmatprep.subr.mxu0 0.0
      %4975 = vmatpush1.msra.mxu0 0.0
      %4976 = vmatprep.subr.mxu0 0.0
      %4977 = vmatpush1.msra.mxu0 0.0
      %4978 = vmatprep.subr.mxu0 0.0
      %4979 = vmatpush1.msra.mxu0 0.0
      %4980 = vmatprep.subr.mxu0 0.0
      %4981 = vmatpush1.msra.mxu0 0.0
      %4982 = vmatprep.subr.mxu0 0.0
      %4983 = vmatpush1.msra.mxu0 0.0
      %4984 = vmatprep.subr.mxu0 0.0
      %4985 = vmatpush1.msra.mxu0 0.0
      %4986 = vmatprep.subr.mxu0 0.0
      %4987 = vmatpush1.msra.mxu0 0.0
      %4988 = vmatprep.subr.mxu0 0.0
      %4989 = vmatpush1.msra.mxu0 0.0
      %4990 = vmatprep.subr.mxu0 0.0
      %4991 = vmatpush1.msra.mxu0 0.0
      %4992 = vmatprep.subr.mxu0 0.0
      %4993 = vmatpush1.msra.mxu0 0.0
      %4994 = vmatprep.subr.mxu0 0.0
      %4995 = vmatpush1.msra.mxu0 0.0
      %4996 = vmatprep.subr.mxu0 0.0
      %4997 = vmatpush1.msra.mxu0 0.0
      %4998 = vmatprep.subr.mxu0 0.0
      %4999 = vmatpush1.msra.mxu0 0.0
      %5000 = vmatprep.subr.mxu0 0.0
      %5001 = vmatpush1.msra.mxu0 0.0
      %5002 = vmatprep.subr.mxu0 0.0
      %5003 = vmatpush1.msra.mxu0 0.0
      %5004 = vmatprep.subr.mxu0 0.0
      %5005 = vmatpush1.msra.mxu0 0.0
      %5006 = vmatprep.subr.mxu0 0.0
      %5007 = vmatpush1.msra.mxu0 0.0
      %5008 = vmatprep.subr.mxu0 0.0
      %5009 = vmatpush1.msra.mxu0 0.0
      %5010 = vmatprep.subr.mxu0 0.0
      %5011 = vmatpush1.msra.mxu0 0.0
      %5012 = vmatprep.subr.mxu0 0.0
      %5013 = vmatpush1.msra.mxu0 0.0
      %5014 = vmatprep.subr.mxu0 0.0
      %5015 = vmatpush1.msra.mxu0 0.0
      %5016 = vmatprep.subr.mxu0 0.0
      %5017 = vmatpush1.msra.mxu0 0.0
      %5018 = vmatprep.subr.mxu0 0.0
      %5019 = vmatpush1.msra.mxu0 0.0
      %5020 = vmatprep.subr.mxu0 0.0
      %5021 = vmatpush1.msra.mxu0 0.0
      %5022 = vmatprep.subr.mxu0 0.0
      %5023 = vmatpush1.msra.mxu0 0.0
      %5024 = vmatprep.subr.mxu0 0.0
      %5025 = vmatpush1.msra.mxu0 0.0
      %5026 = vmatprep.mubr.f32.mxu0 0.0
      %5027 = vmatmul.mubr.f32.gmra.mrb[0].mxu0 %v2306
      %v5028 = vpop.f32.mrb[0].mxu0
      %v5029 = vadd.f32 0.0, %v5028
      %v5030 = vpop.f32.mrb[0].mxu0
      %5031 = vmatprep.mubr.f32.mxu0 0.0
      %5032 = vmatmul.mubr.f32.gmra.mrb[0].mxu0 %v2309
      %v5033 = vpop.f32.mrb[0].mxu0
      %v5034 = vadd.f32 0.0, %v5033
      %v5035 = vpop.f32.mrb[0].mxu0
      %5036 = vdwg.mxu0
      %5037 = vmatprep.subr.mxu0 0.0
      %5038 = vmatpush1.msra.mxu0 %v4889
      %5039 = vmatprep.subr.mxu0 0.0
      %5040 = vmatpush1.msra.mxu0 0.0
      %5041 = vmatprep.subr.mxu0 0.0
      %5042 = vmatpush1.msra.mxu0 0.0
      %5043 = vmatprep.subr.mxu0 0.0
      %5044 = vmatpush1.msra.mxu0 0.0
      %5045 = vmatprep.subr.mxu0 0.0
      %5046 = vmatpush1.msra.mxu0 0.0
      %5047 = vmatprep.subr.mxu0 0.0
      %5048 = vmatpush1.msra.mxu0 0.0
      %5049 = vmatprep.subr.mxu0 0.0
      %5050 = vmatpush1.msra.mxu0 0.0
      %5051 = vmatprep.subr.mxu0 0.0
      %5052 = vmatpush1.msra.mxu0 0.0
      %5053 = vmatprep.subr.mxu0 0.0
      %5054 = vmatpush1.msra.mxu0 0.0
      %5055 = vmatprep.subr.mxu0 0.0
      %5056 = vmatpush1.msra.mxu0 0.0
      %5057 = vmatprep.subr.mxu0 0.0
      %5058 = vmatpush1.msra.mxu0 0.0
      %5059 = vmatprep.subr.mxu0 0.0
      %5060 = vmatpush1.msra.mxu0 0.0
      %5061 = vmatprep.subr.mxu0 0.0
      %5062 = vmatpush1.msra.mxu0 0.0
      %5063 = vmatprep.subr.mxu0 0.0
      %5064 = vmatpush1.msra.mxu0 0.0
      %5065 = vmatprep.subr.mxu0 0.0
      %5066 = vmatpush1.msra.mxu0 0.0
      %5067 = vmatprep.subr.mxu0 0.0
      %5068 = vmatpush1.msra.mxu0 0.0
      %5069 = vmatprep.subr.mxu0 0.0
      %5070 = vmatpush1.msra.mxu0 0.0
      %5071 = vmatprep.subr.mxu0 0.0
      %5072 = vmatpush1.msra.mxu0 0.0
      %5073 = vmatprep.subr.mxu0 0.0
      %5074 = vmatpush1.msra.mxu0 0.0
      %5075 = vmatprep.subr.mxu0 0.0
      %5076 = vmatpush1.msra.mxu0 0.0
      %5077 = vmatprep.subr.mxu0 0.0
      %5078 = vmatpush1.msra.mxu0 0.0
      %5079 = vmatprep.subr.mxu0 0.0
      %5080 = vmatpush1.msra.mxu0 0.0
      %5081 = vmatprep.subr.mxu0 0.0
      %5082 = vmatpush1.msra.mxu0 0.0
      %5083 = vmatprep.subr.mxu0 0.0
      %5084 = vmatpush1.msra.mxu0 0.0
      %5085 = vmatprep.subr.mxu0 0.0
      %5086 = vmatpush1.msra.mxu0 0.0
      %5087 = vmatprep.subr.mxu0 0.0
      %5088 = vmatpush1.msra.mxu0 0.0
      %5089 = vmatprep.subr.mxu0 0.0
      %5090 = vmatpush1.msra.mxu0 0.0
      %5091 = vmatprep.subr.mxu0 0.0
      %5092 = vmatpush1.msra.mxu0 0.0
      %5093 = vmatprep.subr.mxu0 0.0
      %5094 = vmatpush1.msra.mxu0 0.0
      %5095 = vmatprep.subr.mxu0 0.0
      %5096 = vmatpush1.msra.mxu0 0.0
      %5097 = vmatprep.subr.mxu0 0.0
      %5098 = vmatpush1.msra.mxu0 0.0
      %5099 = vmatprep.subr.mxu0 0.0
      %5100 = vmatpush1.msra.mxu0 0.0
      %5101 = vmatprep.mubr.f32.mxu0 0.0
      %5102 = vmatmul.mubr.f32.gmra.mrb[0].mxu0 %v2387
      %v5103 = vpop.f32.mrb[0].mxu0
      %v5104 = vadd.f32 %v5029, %v5103
      %v5105 = vpop.f32.mrb[0].mxu0
      %5106 = vmatprep.mubr.f32.mxu0 0.0
      %5107 = vmatmul.mubr.f32.gmra.mrb[0].mxu0 %v2390
      %v5108 = vpop.f32.mrb[0].mxu0
      %v5109 = vadd.f32 %v5034, %v5108
      %v5110 = vpop.f32.mrb[0].mxu0
      %5111 = vdwg.mxu0
      %5112 = vmatprep.subr.mxu0 0.0
      %5113 = vmatpush1.msra.mxu0 %v2468
      %5114 = vmatprep.subr.mxu0 0.0
      %5115 = vmatpush1.msra.mxu0 %v2469
      %5116 = vmatprep.subr.mxu0 0.0
      %5117 = vmatpush1.msra.mxu0 %v2470
      %5118 = vmatprep.subr.mxu0 0.0
      %5119 = vmatpush1.msra.mxu0 0.0
      %5120 = vmatprep.subr.mxu0 0.0
      %5121 = vmatpush1.msra.mxu0 0.0
      %5122 = vmatprep.subr.mxu0 0.0
      %5123 = vmatpush1.msra.mxu0 0.0
      %5124 = vmatprep.subr.mxu0 0.0
      %5125 = vmatpush1.msra.mxu0 0.0
      %5126 = vmatprep.subr.mxu0 0.0
      %5127 = vmatpush1.msra.mxu0 0.0
      %5128 = vmatprep.subr.mxu0 0.0
      %5129 = vmatpush1.msra.mxu0 0.0
      %5130 = vmatprep.subr.mxu0 0.0
      %5131 = vmatpush1.msra.mxu0 0.0
      %5132 = vmatprep.subr.mxu0 0.0
      %5133 = vmatpush1.msra.mxu0 0.0
      %5134 = vmatprep.subr.mxu0 0.0
      %5135 = vmatpush1.msra.mxu0 0.0
      %5136 = vmatprep.subr.mxu0 0.0
      %5137 = vmatpush1.msra.mxu0 0.0
      %5138 = vmatprep.subr.mxu0 0.0
      %5139 = vmatpush1.msra.mxu0 0.0
      %5140 = vmatprep.subr.mxu0 0.0
      %5141 = vmatpush1.msra.mxu0 0.0
      %5142 = vmatprep.subr.mxu0 0.0
      %5143 = vmatpush1.msra.mxu0 0.0
      %5144 = vmatprep.subr.mxu0 0.0
      %5145 = vmatpush1.msra.mxu0 0.0
      %5146 = vmatprep.subr.mxu0 0.0
      %5147 = vmatpush1.msra.mxu0 0.0
      %5148 = vmatprep.subr.mxu0 0.0
      %5149 = vmatpush1.msra.mxu0 0.0
      %5150 = vmatprep.subr.mxu0 0.0
      %5151 = vmatpush1.msra.mxu0 0.0
      %5152 = vmatprep.subr.mxu0 0.0
      %5153 = vmatpush1.msra.mxu0 0.0
      %5154 = vmatprep.subr.mxu0 0.0
      %5155 = vmatpush1.msra.mxu0 0.0
      %5156 = vmatprep.subr.mxu0 0.0
      %5157 = vmatpush1.msra.mxu0 0.0
      %5158 = vmatprep.subr.mxu0 0.0
      %5159 = vmatpush1.msra.mxu0 0.0
      %5160 = vmatprep.subr.mxu0 0.0
      %5161 = vmatpush1.msra.mxu0 0.0
      %5162 = vmatprep.subr.mxu0 0.0
      %5163 = vmatpush1.msra.mxu0 0.0
      %5164 = vmatprep.subr.mxu0 0.0
      %5165 = vmatpush1.msra.mxu0 0.0
      %5166 = vmatprep.subr.mxu0 0.0
      %5167 = vmatpush1.msra.mxu0 0.0
      %5168 = vmatprep.subr.mxu0 0.0
      %5169 = vmatpush1.msra.mxu0 0.0
      %5170 = vmatprep.subr.mxu0 0.0
      %5171 = vmatpush1.msra.mxu0 0.0
      %5172 = vmatprep.subr.mxu0 0.0
      %5173 = vmatpush1.msra.mxu0 0.0
      %5174 = vmatprep.subr.mxu0 0.0
      %5175 = vmatpush1.msra.mxu0 0.0
      %5176 = vmatprep.mubr.f32.mxu0 0.0
      %5177 = vmatmul.mubr.f32.gmra.mrb[0].mxu0 %v4820
      %v5178 = vpop.f32.mrb[0].mxu0
      %v5179 = vadd.f32 0.0, %v5178
      %v5180 = vpop.f32.mrb[0].mxu0
      %5181 = vdwg.mxu0
      %5182 = vmatprep.subr.mxu0 0.0
      %5183 = vmatpush1.msra.mxu0 %v5179
      %5184 = vmatprep.subr.mxu0 0.0
      %5185 = vmatpush1.msra.mxu0 0.0
      %5186 = vmatprep.subr.mxu0 0.0
      %5187 = vmatpush1.msra.mxu0 0.0
      %5188 = vmatprep.subr.mxu0 0.0
      %5189 = vmatpush1.msra.mxu0 0.0
      %5190 = vmatprep.subr.mxu0 0.0
      %5191 = vmatpush1.msra.mxu0 0.0
      %5192 = vmatprep.subr.mxu0 0.0
      %5193 = vmatpush1.msra.mxu0 0.0
      %5194 = vmatprep.subr.mxu0 0.0
      %5195 = vmatpush1.msra.mxu0 0.0
      %5196 = vmatprep.subr.mxu0 0.0
      %5197 = vmatpush1.msra.mxu0 0.0
      %5198 = vmatprep.subr.mxu0 0.0
      %5199 = vmatpush1.msra.mxu0 0.0
      %5200 = vmatprep.subr.mxu0 0.0
      %5201 = vmatpush1.msra.mxu0 0.0
      %5202 = vmatprep.subr.mxu0 0.0
      %5203 = vmatpush1.msra.mxu0 0.0
      %5204 = vmatprep.subr.mxu0 0.0
      %5205 = vmatpush1.msra.mxu0 0.0
      %5206 = vmatprep.subr.mxu0 0.0
      %5207 = vmatpush1.msra.mxu0 0.0
      %5208 = vmatprep.subr.mxu0 0.0
      %5209 = vmatpush1.msra.mxu0 0.0
      %5210 = vmatprep.subr.mxu0 0.0
      %5211 = vmatpush1.msra.mxu0 0.0
      %5212 = vmatprep.subr.mxu0 0.0
      %5213 = vmatpush1.msra.mxu0 0.0
      %5214 = vmatprep.subr.mxu0 0.0
      %5215 = vmatpush1.msra.mxu0 0.0
      %5216 = vmatprep.subr.mxu0 0.0
      %5217 = vmatpush1.msra.mxu0 0.0
      %5218 = vmatprep.subr.mxu0 0.0
      %5219 = vmatpush1.msra.mxu0 0.0
      %5220 = vmatprep.subr.mxu0 0.0
      %5221 = vmatpush1.msra.mxu0 0.0
      %5222 = vmatprep.subr.mxu0 0.0
      %5223 = vmatpush1.msra.mxu0 0.0
      %5224 = vmatprep.subr.mxu0 0.0
      %5225 = vmatpush1.msra.mxu0 0.0
      %5226 = vmatprep.subr.mxu0 0.0
      %5227 = vmatpush1.msra.mxu0 0.0
      %5228 = vmatprep.subr.mxu0 0.0
      %5229 = vmatpush1.msra.mxu0 0.0
      %5230 = vmatprep.subr.mxu0 0.0
      %5231 = vmatpush1.msra.mxu0 0.0
      %5232 = vmatprep.subr.mxu0 0.0
      %5233 = vmatpush1.msra.mxu0 0.0
      %5234 = vmatprep.subr.mxu0 0.0
      %5235 = vmatpush1.msra.mxu0 0.0
      %5236 = vmatprep.subr.mxu0 0.0
      %5237 = vmatpush1.msra.mxu0 0.0
      %5238 = vmatprep.subr.mxu0 0.0
      %5239 = vmatpush1.msra.mxu0 0.0
      %5240 = vmatprep.subr.mxu0 0.0
      %5241 = vmatpush1.msra.mxu0 0.0
      %5242 = vmatprep.subr.mxu0 0.0
      %5243 = vmatpush1.msra.mxu0 0.0
      %5244 = vmatprep.subr.mxu0 0.0
      %5245 = vmatpush1.msra.mxu0 0.0
      %5246 = vmatprep.mubr.f32.mxu0 0.0
      %5247 = vmatmul.mubr.f32.gmra.mrb[0].mxu0 %v2545
      %v5248 = vpop.f32.mrb[0].mxu0
      %v5249 = vadd.f32 0.0, %v5248
      %v5250 = vpop.f32.mrb[0].mxu0
      %5251 = vmatprep.mubr.f32.mxu0 0.0
      %5252 = vmatmul.mubr.f32.gmra.mrb[0].mxu0 %v2548
      %v5253 = vpop.f32.mrb[0].mxu0
      %v5254 = vadd.f32 0.0, %v5253
      %v5255 = vpop.f32.mrb[0].mxu0
      %5256 = vdwg.mxu0
      %v5257 = vadd.f32 %v5104, %v5249
      %v5258 = vadd.f32 %v5109, %v5254
      %v5259 = vadd.f32 %v5257, %v2630
      %v5260 = vadd.f32 %v5258, %v2630
      %v5261 = vadd.f32 %v5259, %v4381
      %v5262 = vadd.f32 %v5260, %v4382
      %5263 = vst.msk [vmem:[%s737] sm:$0xff] %vm748, %v5261
      %5264 = vst.msk [vmem:[%s737 + $0x8] sm:$0xff] %vm748, %v5262
      %p5265 = scmp.lt.s32.totalorder %s35, 1
      %s5266 = scalar_select %p5265, %s35, 1
      %s5267 = smul.addr %s5266, 2
      %s5268 = smul.addr %s5267, 8
      %s5269 = scalar_lea.vmem %s24, %s5268
      // Predicated region
      $region117: #{mslt_forward.1} parent=115 // pred_check
        %p5270 = pneg %p562
      $region118: #{mslt_forward.1} parent=115 // pred_check_branch
        %5272 = sbr.rel (%p5270) target = $region120
      $region119: #{mslt_forward.1} parent=115 // pred_region
        _
      $region120: #{mslt_forward.1} parent=115 // pred_fallthru
        _
    $region116: #{mslt_forward.1} parent=5 // pred_fallthru
      _
    %p5273 = scmp.le.s32.totalorder 2, %s30
    // Predicated region
    $region121: #{mslt_forward.1} parent=5 // pred_check
      %p5274 = pneg %p5273
    $region122: #{mslt_forward.1} parent=5 // pred_check_branch
      %5276 = sbr.rel (%p5274) target = $region124
    $region123: #{mslt_forward.1} parent=5 // pred_region
      %s5277 = ssub.s32 %s30, 2
      // Predicated region
      $region125: #{mslt_forward.1} parent=123 // pred_check
        %p5278 = pneg %p568
      $region126: #{mslt_forward.1} parent=123 // pred_check_branch
        %5280 = sbr.rel (%p5278) target = $region128
      $region127: #{mslt_forward.1} parent=123 // pred_region
        %p5281 = scmp.lt.s32.totalorder %s36, 1
        %s5282 = scalar_select %p5281, %s36, 1
        %s5283 = smul.addr %s5282, 2
        %s5284 = smul.addr %s5283, 8
        %s5285 = scalar_lea.vmem %s24, %s5284
      $region128: #{mslt_forward.1} parent=123 // pred_fallthru
        _
    $region124: #{mslt_forward.1} parent=5 // pred_fallthru
      _
  $region6: #{mslt_forward.1} parent=0 // loop_footer
    %s34 = sadd.s32 1, %s30
  $region7: #{mslt_forward.1} parent=0 // loop_footer_branch
    %29 = sbr.rel target = $region3
  $region8: #{mslt_forward.1} parent=0 // loop_exit
    _

</llo_original>
